<compile_context>
chip_gen: v7x
topology: tpu7x:2x2x1
jax: 0.10.0
libtpu: 0.0.40
codegen_flags: <defaults>
</compile_context>

<pallas_src>
import math

import jax
import jax.numpy as jnp
from jax.experimental import pallas as pl
from jax.experimental.pallas import tpu as pltpu  # noqa: F401  (imported per template)

# ---- scaled-down DistilBERT-like config ------------------------------------
VOCAB    = 100
MAX_POS  = 32
D        = 64          # bert hidden dim (self.bert.config.dim)
H        = 2           # attention heads
HD       = D // H      # head dim
FFN      = 128         # feed-forward dim
N_LAYERS = 2
HIDDEN   = 32          # pre_classifier hidden_dimension
LN_EPS   = 1e-12


# ---------------------------------------------------------------------------
# In-kernel helpers
# ---------------------------------------------------------------------------
def _layer_norm(x, g, b):
    mu = jnp.mean(x, axis=-1, keepdims=True)
    var = jnp.mean(jnp.square(x - mu), axis=-1, keepdims=True)
    return (x - mu) * jax.lax.rsqrt(var + LN_EPS) * g + b


def _gelu(x):
    # TODO(synk): DistilBERT uses exact (erf-based) GELU; tanh approximation used here
    # (exp/tanh go to the EUP slot; erf has no guaranteed Mosaic lowering).
    c = math.sqrt(2.0 / math.pi)
    return 0.5 * x * (1.0 + jnp.tanh(c * (x + 0.044715 * x * x * x)))


# ---------------------------------------------------------------------------
# Single fused kernel: embed-LN -> N_LAYERS transformer layers -> head -> sigmoid
# All per-layer weights are stacked along a leading layer axis; the layer loop is a
# static Python unroll so activations never leave VMEM.
# ---------------------------------------------------------------------------
def fused_forward_kernel(x_ref, mask_ref, ge_ref, be_ref,
                         wqkv_ref, bqkv_ref, wo_ref, bo_ref, g1_ref, b1_ref,
                         wi_ref, bi_ref, wo2_ref, bo2_ref, g2_ref, b2_ref,
                         wpre_ref, bpre_ref, wcls_ref, bcls_ref,
                         out_ref):
    B, S, _ = x_ref.shape
    L = wqkv_ref.shape[0]

    # Embedding LayerNorm on the flattened (B*S, D) activation (M = B*S for all matmuls).
    x = _layer_norm(x_ref[...].reshape(B * S, D), ge_ref[...], be_ref[...])

    # Additive key-axis padding mask: 0 where attend, -1e9 where padded.
    # Computed once, reused by every layer (no float-equality test per layer).
    neg = (mask_ref[...] - 1.0) * 1e9                         # (B, 1, S)

    for li in range(L):                                       # static unroll over layers
        # Fused QKV projection: (B*S, D) @ (D, 3D).  Q columns/bias pre-scaled by 1/sqrt(HD).
        qkv = jnp.dot(x, wqkv_ref[li],
                      preferred_element_type=jnp.float32) + bqkv_ref[li]   # (B*S, 3D)

        # Attention output projection, accumulated per head:
        #   attn = sum_h ctx_h @ Wo[h*HD:(h+1)*HD, :]  + bo
        # (avoids a lane-axis concatenate of the per-head contexts).
        attn = jnp.broadcast_to(bo_ref[li], (B * S, D))
        for h in range(H):                                    # static head loop (H small)
            q_h = qkv[:,          h * HD:          (h + 1) * HD].reshape(B, S, HD)
            k_h = qkv[:,     D +  h * HD:     D +  (h + 1) * HD].reshape(B, S, HD)
            v_h = qkv[:, 2 * D +  h * HD: 2 * D +  (h + 1) * HD].reshape(B, S, HD)

            s = jnp.einsum('bqd,bkd->bqk', q_h, k_h,
                           preferred_element_type=jnp.float32) + neg       # (B, S, S)
            s = s - jnp.max(s, axis=-1, keepdims=True)
            p = jnp.exp(s)
            p = p * pl.reciprocal(jnp.sum(p, axis=-1, keepdims=True), approx=True)
            c = jnp.einsum('bqk,bkd->bqd', p, v_h,
                           preferred_element_type=jnp.float32)             # (B, S, HD)
            attn = attn + jnp.dot(c.reshape(B * S, HD),
                                  wo_ref[li][h * HD:(h + 1) * HD, :],
                                  preferred_element_type=jnp.float32)

        x1 = _layer_norm(attn + x, g1_ref[li], b1_ref[li])

        h1 = _gelu(jnp.dot(x1, wi_ref[li],
                           preferred_element_type=jnp.float32) + bi_ref[li])
        h2 = jnp.dot(h1, wo2_ref[li],
                     preferred_element_type=jnp.float32) + bo2_ref[li]
        x = _layer_norm(h2 + x1, g2_ref[li], b2_ref[li])

    # h[:, 0] -> pre_classifier -> classifier -> sigmoid
    cls = x.reshape(B, S, D)[:, 0, :]                                      # (B, D)
    hid = jnp.dot(cls, wpre_ref[...],
                  preferred_element_type=jnp.float32) + bpre_ref[...]      # (B, HIDDEN)
    logit = jnp.dot(hid, wcls_ref[...],
                    preferred_element_type=jnp.float32) + bcls_ref[...]    # (B, 1)
    out_ref[...] = 1.0 / (1.0 + jnp.exp(-logit))


# ---------------------------------------------------------------------------
# Parameter init (deterministic, synthetic).  Per-layer weights are stacked along a
# leading layer axis; the attention scale 1/sqrt(HD) is folded into the Q weights/bias.
# ---------------------------------------------------------------------------
def init_params(key):
    std = 0.02
    scale = 1.0 / math.sqrt(HD)
    keys = jax.random.split(key, 4 + N_LAYERS)

    wqkv, wo, wi, wo2 = [], [], [], []
    for li in range(N_LAYERS):
        lk = jax.random.split(keys[4 + li], 6)
        wq = std * jax.random.normal(lk[0], (D, D), jnp.float32) * scale  # scale folded in
        wk = std * jax.random.normal(lk[1], (D, D), jnp.float32)
        wv = std * jax.random.normal(lk[2], (D, D), jnp.float32)
        wqkv.append(jnp.concatenate([wq, wk, wv], axis=-1))               # (D, 3D)
        wo.append(std * jax.random.normal(lk[3], (D, D), jnp.float32))
        wi.append(std * jax.random.normal(lk[4], (D, FFN), jnp.float32))
        wo2.append(std * jax.random.normal(lk[5], (FFN, D), jnp.float32))

    L = N_LAYERS
    # Q bias portion also carries the folded 1/sqrt(HD) scale (zeros here, but kept general).
    bqkv = jnp.zeros((L, 1, 3 * D), jnp.float32)
    bqkv = bqkv.at[:, :, :D].multiply(scale)

    return {
        "word_emb": std * jax.random.normal(keys[0], (VOCAB, D), jnp.float32),
        "pos_emb":  std * jax.random.normal(keys[1], (MAX_POS, D), jnp.float32),
        "emb_ln_g": jnp.ones((1, D), jnp.float32),
        "emb_ln_b": jnp.zeros((1, D), jnp.float32),
        "wqkv": jnp.stack(wqkv),                          # (L, D, 3D), Q pre-scaled
        "bqkv": bqkv,                                     # (L, 1, 3D), Q bias pre-scaled
        "wo":   jnp.stack(wo),                            # (L, D, D)
        "bo":   jnp.zeros((L, 1, D), jnp.float32),
        "ln1_g": jnp.ones((L, 1, D), jnp.float32),
        "ln1_b": jnp.zeros((L, 1, D), jnp.float32),
        "wi":   jnp.stack(wi),                            # (L, D, FFN)
        "bi":   jnp.zeros((L, 1, FFN), jnp.float32),
        "wo2":  jnp.stack(wo2),                           # (L, FFN, D)
        "bo2":  jnp.zeros((L, 1, D), jnp.float32),
        "ln2_g": jnp.ones((L, 1, D), jnp.float32),
        "ln2_b": jnp.zeros((L, 1, D), jnp.float32),
        "w_pre": std * jax.random.normal(keys[2], (D, HIDDEN), jnp.float32),
        "b_pre": jnp.zeros((1, HIDDEN), jnp.float32),
        "w_cls": std * jax.random.normal(keys[3], (HIDDEN, 1), jnp.float32),
        "b_cls": jnp.zeros((1, 1), jnp.float32),
    }


# ---------------------------------------------------------------------------
# Forward pass (mirrors TextClassifier.forward) — one pallas_call for the whole model.
# ---------------------------------------------------------------------------
def text_classifier_forward(params, input_ids, attention_mask=None):
    B, S = input_ids.shape
    if attention_mask is None:
        attention_mask = jnp.ones((B, S), jnp.float32)

    # Embedding gather is JAX glue (table lookup); everything else is in the fused kernel.
    x = (params["word_emb"][input_ids] + params["pos_emb"][:S][None, :, :]).astype(jnp.float32)
    mask3 = attention_mask.astype(jnp.float32).reshape(B, 1, S)

    args = (x, mask3,
            params["emb_ln_g"], params["emb_ln_b"],
            params["wqkv"], params["bqkv"], params["wo"], params["bo"],
            params["ln1_g"], params["ln1_b"],
            params["wi"], params["bi"], params["wo2"], params["bo2"],
            params["ln2_g"], params["ln2_b"],
            params["w_pre"], params["b_pre"], params["w_cls"], params["b_cls"])

    def _full_spec(a):
        n = a.ndim
        return pl.BlockSpec(a.shape, lambda *_: (0,) * n)

    out = pl.pallas_call(
        fused_forward_kernel,
        out_shape=jax.ShapeDtypeStruct((B, 1), jnp.float32),
        in_specs=[_full_spec(a) for a in args],
        out_specs=pl.BlockSpec((B, 1), lambda *_: (0, 0)),
    )(*args)

    # torch.sigmoid(h).squeeze(): drops all size-1 dims (scalar when B == 1).
    return jnp.squeeze(out)


# ---------------------------------------------------------------------------
if __name__ == "__main__":
    key = jax.random.PRNGKey(0)
    k_params, k_ids = jax.random.split(key)

    B, S = 2, 8
    params = init_params(k_params)
    input_ids = jax.random.randint(k_ids, (B, S), 0, VOCAB)
    attention_mask = jnp.ones((B, S), jnp.float32)

    fwd = jax.jit(text_classifier_forward)
    out = fwd(params, input_ids, attention_mask)
    out = jax.block_until_ready(out)

    assert out.shape == (B,), out.shape
    assert bool(jnp.all(jnp.isfinite(out))) and bool(jnp.all((out >= 0) & (out <= 1)))
    print("KERNEL_OK")
</pallas_src>

<mosaic_0001>
module attributes {stable_mosaic.version = 11 : i64} {
  func.func @fused_forward_kernel(%arg0: memref<2x8x64xf32, #tpu.memory_space<vmem>>, %arg1: memref<2x1x8xf32, #tpu.memory_space<vmem>>, %arg2: memref<1x64xf32, #tpu.memory_space<vmem>>, %arg3: memref<1x64xf32, #tpu.memory_space<vmem>>, %arg4: memref<2x64x192xf32, #tpu.memory_space<vmem>>, %arg5: memref<2x1x192xf32, #tpu.memory_space<vmem>>, %arg6: memref<2x64x64xf32, #tpu.memory_space<vmem>>, %arg7: memref<2x1x64xf32, #tpu.memory_space<vmem>>, %arg8: memref<2x1x64xf32, #tpu.memory_space<vmem>>, %arg9: memref<2x1x64xf32, #tpu.memory_space<vmem>>, %arg10: memref<2x64x128xf32, #tpu.memory_space<vmem>>, %arg11: memref<2x1x128xf32, #tpu.memory_space<vmem>>, %arg12: memref<2x128x64xf32, #tpu.memory_space<vmem>>, %arg13: memref<2x1x64xf32, #tpu.memory_space<vmem>>, %arg14: memref<2x1x64xf32, #tpu.memory_space<vmem>>, %arg15: memref<2x1x64xf32, #tpu.memory_space<vmem>>, %arg16: memref<64x32xf32, #tpu.memory_space<vmem>>, %arg17: memref<1x32xf32, #tpu.memory_space<vmem>>, %arg18: memref<32x1xf32, #tpu.memory_space<vmem>>, %arg19: memref<1x1xf32, #tpu.memory_space<vmem>>, %arg20: memref<2x1xf32, #tpu.memory_space<vmem>>) attributes {dimension_semantics = [], scalar_prefetch = 0 : i64, scratch_operands = 0 : i64, tpu.core_type = #tpu.core_type<tc>} {
    %c0 = arith.constant 0 : index
    %c0_0 = arith.constant 0 : index
    %c0_1 = arith.constant 0 : index
    %0 = vector.load %arg0[%c0, %c0_0, %c0_1] : memref<2x8x64xf32, #tpu.memory_space<vmem>>, vector<2x8x64xf32>
    %1 = vector.shape_cast %0 : vector<2x8x64xf32> to vector<16x64xf32>
    %c0_2 = arith.constant 0 : index
    %c0_3 = arith.constant 0 : index
    %2 = vector.load %arg2[%c0_2, %c0_3] : memref<1x64xf32, #tpu.memory_space<vmem>>, vector<1x64xf32>
    %c0_4 = arith.constant 0 : index
    %c0_5 = arith.constant 0 : index
    %3 = vector.load %arg3[%c0_4, %c0_5] : memref<1x64xf32, #tpu.memory_space<vmem>>, vector<1x64xf32>
    %cst = arith.constant dense<0.000000e+00> : vector<16xf32>
    %4 = vector.multi_reduction <add>, %1, %cst [1] : vector<16x64xf32> to vector<16xf32>
    %5 = vector.shape_cast %4 : vector<16xf32> to vector<16x1xf32>
    %cst_6 = arith.constant 6.400000e+01 : f32
    %6 = vector.broadcast %cst_6 : f32 to vector<16x1xf32>
    %7 = arith.divf %5, %6 : vector<16x1xf32>
    %8 = vector.broadcast %7 : vector<16x1xf32> to vector<16x64xf32>
    %9 = arith.subf %1, %8 : vector<16x64xf32>
    %10 = arith.mulf %9, %9 : vector<16x64xf32>
    %cst_7 = arith.constant dense<0.000000e+00> : vector<16xf32>
    %11 = vector.multi_reduction <add>, %10, %cst_7 [1] : vector<16x64xf32> to vector<16xf32>
    %12 = vector.shape_cast %11 : vector<16xf32> to vector<16x1xf32>
    %cst_8 = arith.constant 6.400000e+01 : f32
    %13 = vector.broadcast %cst_8 : f32 to vector<16x1xf32>
    %14 = arith.divf %12, %13 : vector<16x1xf32>
    %15 = vector.broadcast %7 : vector<16x1xf32> to vector<16x64xf32>
    %16 = arith.subf %1, %15 : vector<16x64xf32>
    %cst_9 = arith.constant 9.99999996E-13 : f32
    %17 = vector.broadcast %cst_9 : f32 to vector<16x1xf32>
    %18 = arith.addf %14, %17 : vector<16x1xf32>
    %19 = math.rsqrt %18 : vector<16x1xf32>
    %20 = vector.broadcast %19 : vector<16x1xf32> to vector<16x64xf32>
    %21 = arith.mulf %16, %20 : vector<16x64xf32>
    %22 = vector.broadcast %2 : vector<1x64xf32> to vector<16x64xf32>
    %23 = arith.mulf %21, %22 : vector<16x64xf32>
    %24 = vector.broadcast %3 : vector<1x64xf32> to vector<16x64xf32>
    %25 = arith.addf %23, %24 : vector<16x64xf32>
    %c0_10 = arith.constant 0 : index
    %c0_11 = arith.constant 0 : index
    %c0_12 = arith.constant 0 : index
    %26 = vector.load %arg1[%c0_10, %c0_11, %c0_12] : memref<2x1x8xf32, #tpu.memory_space<vmem>>, vector<2x1x8xf32>
    %cst_13 = arith.constant 1.000000e+00 : f32
    %27 = vector.broadcast %cst_13 : f32 to vector<2x1x8xf32>
    %28 = arith.subf %26, %27 : vector<2x1x8xf32>
    %cst_14 = arith.constant 1.000000e+09 : f32
    %29 = vector.broadcast %cst_14 : f32 to vector<2x1x8xf32>
    %30 = arith.mulf %28, %29 : vector<2x1x8xf32>
    %c0_15 = arith.constant 0 : index
    %c0_16 = arith.constant 0 : index
    %c0_17 = arith.constant 0 : index
    %31 = vector.load %arg4[%c0_15, %c0_16, %c0_17] : memref<2x64x192xf32, #tpu.memory_space<vmem>>, vector<1x64x192xf32>
    %32 = vector.shape_cast %31 : vector<1x64x192xf32> to vector<64x192xf32>
    %cst_18 = arith.constant dense<0.000000e+00> : vector<16x192xf32>
    %33 = tpu.matmul %25, %32, %cst_18 {dimension_numbers = #tpu.dot_dimension_numbers<[1], [0], [0], [1], [0, 0, 1, 1], [], []>} : vector<16x64xf32>, vector<64x192xf32>, vector<16x192xf32> -> vector<16x192xf32>
    %c0_19 = arith.constant 0 : index
    %c0_20 = arith.constant 0 : index
    %c0_21 = arith.constant 0 : index
    %34 = vector.load %arg5[%c0_19, %c0_20, %c0_21] : memref<2x1x192xf32, #tpu.memory_space<vmem>>, vector<1x1x192xf32>
    %35 = vector.shape_cast %34 : vector<1x1x192xf32> to vector<1x192xf32>
    %36 = vector.broadcast %35 : vector<1x192xf32> to vector<16x192xf32>
    %37 = arith.addf %33, %36 : vector<16x192xf32>
    %c0_22 = arith.constant 0 : index
    %c0_23 = arith.constant 0 : index
    %c0_24 = arith.constant 0 : index
    %38 = vector.load %arg7[%c0_22, %c0_23, %c0_24] : memref<2x1x64xf32, #tpu.memory_space<vmem>>, vector<1x1x64xf32>
    %39 = vector.shape_cast %38 : vector<1x1x64xf32> to vector<1x64xf32>
    %40 = vector.shape_cast %39 : vector<1x64xf32> to vector<1x64xf32>
    %41 = vector.broadcast %40 : vector<1x64xf32> to vector<16x64xf32>
    %42 = vector.extract_strided_slice %37 {offsets = [0, 0], sizes = [16, 32], strides = [1, 1]} : vector<16x192xf32> to vector<16x32xf32>
    %43 = vector.shape_cast %42 : vector<16x32xf32> to vector<2x8x32xf32>
    %44 = vector.extract_strided_slice %37 {offsets = [0, 64], sizes = [16, 32], strides = [1, 1]} : vector<16x192xf32> to vector<16x32xf32>
    %45 = vector.shape_cast %44 : vector<16x32xf32> to vector<2x8x32xf32>
    %46 = vector.extract_strided_slice %37 {offsets = [0, 128], sizes = [16, 32], strides = [1, 1]} : vector<16x192xf32> to vector<16x32xf32>
    %47 = vector.shape_cast %46 : vector<16x32xf32> to vector<2x8x32xf32>
    "tpu.trace_start"() <{level = 10 : i32, message = "bqd,bkd->bqk"}> : () -> ()
    %cst_25 = arith.constant dense<0.000000e+00> : vector<2x8x8xf32>
    %48 = tpu.matmul %43, %45, %cst_25 {dimension_numbers = #tpu.dot_dimension_numbers<[2], [2], [1], [1], [0, 0, 0, 1, 1, 1], [0], [0]>} : vector<2x8x32xf32>, vector<2x8x32xf32>, vector<2x8x8xf32> -> vector<2x8x8xf32>
    "tpu.trace_stop"() : () -> ()
    %49 = vector.broadcast %30 : vector<2x1x8xf32> to vector<2x8x8xf32>
    %50 = arith.addf %48, %49 : vector<2x8x8xf32>
    %cst_26 = arith.constant dense<0xFF800000> : vector<2x8xf32>
    %51 = vector.multi_reduction <maximumf>, %50, %cst_26 [2] : vector<2x8x8xf32> to vector<2x8xf32>
    %52 = vector.shape_cast %51 : vector<2x8xf32> to vector<2x8x1xf32>
    %53 = vector.broadcast %52 : vector<2x8x1xf32> to vector<2x8x8xf32>
    %54 = arith.subf %50, %53 : vector<2x8x8xf32>
    %55 = math.exp %54 : vector<2x8x8xf32>
    %cst_27 = arith.constant dense<0.000000e+00> : vector<2x8xf32>
    %56 = vector.multi_reduction <add>, %55, %cst_27 [2] : vector<2x8x8xf32> to vector<2x8xf32>
    %57 = vector.shape_cast %56 : vector<2x8xf32> to vector<2x8x1xf32>
    %58 = tpu.reciprocal %57 {approx = true} : vector<2x8x1xf32> -> vector<2x8x1xf32>
    %59 = vector.broadcast %58 : vector<2x8x1xf32> to vector<2x8x8xf32>
    %60 = arith.mulf %55, %59 : vector<2x8x8xf32>
    "tpu.trace_start"() <{level = 10 : i32, message = "bqk,bkd->bqd"}> : () -> ()
    %cst_28 = arith.constant dense<0.000000e+00> : vector<2x8x32xf32>
    %61 = tpu.matmul %60, %47, %cst_28 {dimension_numbers = #tpu.dot_dimension_numbers<[2], [1], [1], [2], [0, 0, 0, 1, 1, 2], [0], [0]>} : vector<2x8x8xf32>, vector<2x8x32xf32>, vector<2x8x32xf32> -> vector<2x8x32xf32>
    "tpu.trace_stop"() : () -> ()
    %62 = vector.shape_cast %61 : vector<2x8x32xf32> to vector<16x32xf32>
    %c0_29 = arith.constant 0 : index
    %c0_30 = arith.constant 0 : index
    %c0_31 = arith.constant 0 : index
    %63 = vector.load %arg6[%c0_29, %c0_30, %c0_31] : memref<2x64x64xf32, #tpu.memory_space<vmem>>, vector<1x64x64xf32>
    %64 = vector.shape_cast %63 : vector<1x64x64xf32> to vector<64x64xf32>
    %65 = vector.extract_strided_slice %64 {offsets = [0, 0], sizes = [32, 64], strides = [1, 1]} : vector<64x64xf32> to vector<32x64xf32>
    %cst_32 = arith.constant dense<0.000000e+00> : vector<16x64xf32>
    %66 = tpu.matmul %62, %65, %cst_32 {dimension_numbers = #tpu.dot_dimension_numbers<[1], [0], [0], [1], [0, 0, 1, 1], [], []>} : vector<16x32xf32>, vector<32x64xf32>, vector<16x64xf32> -> vector<16x64xf32>
    %67 = arith.addf %41, %66 : vector<16x64xf32>
    %68 = vector.extract_strided_slice %37 {offsets = [0, 32], sizes = [16, 32], strides = [1, 1]} : vector<16x192xf32> to vector<16x32xf32>
    %69 = vector.shape_cast %68 : vector<16x32xf32> to vector<2x8x32xf32>
    %70 = vector.extract_strided_slice %37 {offsets = [0, 96], sizes = [16, 32], strides = [1, 1]} : vector<16x192xf32> to vector<16x32xf32>
    %71 = vector.shape_cast %70 : vector<16x32xf32> to vector<2x8x32xf32>
    %72 = vector.extract_strided_slice %37 {offsets = [0, 160], sizes = [16, 32], strides = [1, 1]} : vector<16x192xf32> to vector<16x32xf32>
    %73 = vector.shape_cast %72 : vector<16x32xf32> to vector<2x8x32xf32>
    "tpu.trace_start"() <{level = 10 : i32, message = "bqd,bkd->bqk"}> : () -> ()
    %cst_33 = arith.constant dense<0.000000e+00> : vector<2x8x8xf32>
    %74 = tpu.matmul %69, %71, %cst_33 {dimension_numbers = #tpu.dot_dimension_numbers<[2], [2], [1], [1], [0, 0, 0, 1, 1, 1], [0], [0]>} : vector<2x8x32xf32>, vector<2x8x32xf32>, vector<2x8x8xf32> -> vector<2x8x8xf32>
    "tpu.trace_stop"() : () -> ()
    %75 = vector.broadcast %30 : vector<2x1x8xf32> to vector<2x8x8xf32>
    %76 = arith.addf %74, %75 : vector<2x8x8xf32>
    %cst_34 = arith.constant dense<0xFF800000> : vector<2x8xf32>
    %77 = vector.multi_reduction <maximumf>, %76, %cst_34 [2] : vector<2x8x8xf32> to vector<2x8xf32>
    %78 = vector.shape_cast %77 : vector<2x8xf32> to vector<2x8x1xf32>
    %79 = vector.broadcast %78 : vector<2x8x1xf32> to vector<2x8x8xf32>
    %80 = arith.subf %76, %79 : vector<2x8x8xf32>
    %81 = math.exp %80 : vector<2x8x8xf32>
    %cst_35 = arith.constant dense<0.000000e+00> : vector<2x8xf32>
    %82 = vector.multi_reduction <add>, %81, %cst_35 [2] : vector<2x8x8xf32> to vector<2x8xf32>
    %83 = vector.shape_cast %82 : vector<2x8xf32> to vector<2x8x1xf32>
    %84 = tpu.reciprocal %83 {approx = true} : vector<2x8x1xf32> -> vector<2x8x1xf32>
    %85 = vector.broadcast %84 : vector<2x8x1xf32> to vector<2x8x8xf32>
    %86 = arith.mulf %81, %85 : vector<2x8x8xf32>
    "tpu.trace_start"() <{level = 10 : i32, message = "bqk,bkd->bqd"}> : () -> ()
    %cst_36 = arith.constant dense<0.000000e+00> : vector<2x8x32xf32>
    %87 = tpu.matmul %86, %73, %cst_36 {dimension_numbers = #tpu.dot_dimension_numbers<[2], [1], [1], [2], [0, 0, 0, 1, 1, 2], [0], [0]>} : vector<2x8x8xf32>, vector<2x8x32xf32>, vector<2x8x32xf32> -> vector<2x8x32xf32>
    "tpu.trace_stop"() : () -> ()
    %88 = vector.shape_cast %87 : vector<2x8x32xf32> to vector<16x32xf32>
    %c0_37 = arith.constant 0 : index
    %c0_38 = arith.constant 0 : index
    %c0_39 = arith.constant 0 : index
    %89 = vector.load %arg6[%c0_37, %c0_38, %c0_39] : memref<2x64x64xf32, #tpu.memory_space<vmem>>, vector<1x64x64xf32>
    %90 = vector.shape_cast %89 : vector<1x64x64xf32> to vector<64x64xf32>
    %91 = vector.extract_strided_slice %90 {offsets = [32, 0], sizes = [32, 64], strides = [1, 1]} : vector<64x64xf32> to vector<32x64xf32>
    %cst_40 = arith.constant dense<0.000000e+00> : vector<16x64xf32>
    %92 = tpu.matmul %88, %91, %cst_40 {dimension_numbers = #tpu.dot_dimension_numbers<[1], [0], [0], [1], [0, 0, 1, 1], [], []>} : vector<16x32xf32>, vector<32x64xf32>, vector<16x64xf32> -> vector<16x64xf32>
    %93 = arith.addf %67, %92 : vector<16x64xf32>
    %94 = arith.addf %93, %25 : vector<16x64xf32>
    %c0_41 = arith.constant 0 : index
    %c0_42 = arith.constant 0 : index
    %c0_43 = arith.constant 0 : index
    %95 = vector.load %arg8[%c0_41, %c0_42, %c0_43] : memref<2x1x64xf32, #tpu.memory_space<vmem>>, vector<1x1x64xf32>
    %96 = vector.shape_cast %95 : vector<1x1x64xf32> to vector<1x64xf32>
    %c0_44 = arith.constant 0 : index
    %c0_45 = arith.constant 0 : index
    %c0_46 = arith.constant 0 : index
    %97 = vector.load %arg9[%c0_44, %c0_45, %c0_46] : memref<2x1x64xf32, #tpu.memory_space<vmem>>, vector<1x1x64xf32>
    %98 = vector.shape_cast %97 : vector<1x1x64xf32> to vector<1x64xf32>
    %cst_47 = arith.constant dense<0.000000e+00> : vector<16xf32>
    %99 = vector.multi_reduction <add>, %94, %cst_47 [1] : vector<16x64xf32> to vector<16xf32>
    %100 = vector.shape_cast %99 : vector<16xf32> to vector<16x1xf32>
    %cst_48 = arith.constant 6.400000e+01 : f32
    %101 = vector.broadcast %cst_48 : f32 to vector<16x1xf32>
    %102 = arith.divf %100, %101 : vector<16x1xf32>
    %103 = vector.broadcast %102 : vector<16x1xf32> to vector<16x64xf32>
    %104 = arith.subf %94, %103 : vector<16x64xf32>
    %105 = arith.mulf %104, %104 : vector<16x64xf32>
    %cst_49 = arith.constant dense<0.000000e+00> : vector<16xf32>
    %106 = vector.multi_reduction <add>, %105, %cst_49 [1] : vector<16x64xf32> to vector<16xf32>
    %107 = vector.shape_cast %106 : vector<16xf32> to vector<16x1xf32>
    %cst_50 = arith.constant 6.400000e+01 : f32
    %108 = vector.broadcast %cst_50 : f32 to vector<16x1xf32>
    %109 = arith.divf %107, %108 : vector<16x1xf32>
    %110 = vector.broadcast %102 : vector<16x1xf32> to vector<16x64xf32>
    %111 = arith.subf %94, %110 : vector<16x64xf32>
    %cst_51 = arith.constant 9.99999996E-13 : f32
    %112 = vector.broadcast %cst_51 : f32 to vector<16x1xf32>
    %113 = arith.addf %109, %112 : vector<16x1xf32>
    %114 = math.rsqrt %113 : vector<16x1xf32>
    %115 = vector.broadcast %114 : vector<16x1xf32> to vector<16x64xf32>
    %116 = arith.mulf %111, %115 : vector<16x64xf32>
    %117 = vector.broadcast %96 : vector<1x64xf32> to vector<16x64xf32>
    %118 = arith.mulf %116, %117 : vector<16x64xf32>
    %119 = vector.broadcast %98 : vector<1x64xf32> to vector<16x64xf32>
    %120 = arith.addf %118, %119 : vector<16x64xf32>
    %c0_52 = arith.constant 0 : index
    %c0_53 = arith.constant 0 : index
    %c0_54 = arith.constant 0 : index
    %121 = vector.load %arg10[%c0_52, %c0_53, %c0_54] : memref<2x64x128xf32, #tpu.memory_space<vmem>>, vector<1x64x128xf32>
    %122 = vector.shape_cast %121 : vector<1x64x128xf32> to vector<64x128xf32>
    %cst_55 = arith.constant dense<0.000000e+00> : vector<16x128xf32>
    %123 = tpu.matmul %120, %122, %cst_55 {dimension_numbers = #tpu.dot_dimension_numbers<[1], [0], [0], [1], [0, 0, 1, 1], [], []>} : vector<16x64xf32>, vector<64x128xf32>, vector<16x128xf32> -> vector<16x128xf32>
    %c0_56 = arith.constant 0 : index
    %c0_57 = arith.constant 0 : index
    %c0_58 = arith.constant 0 : index
    %124 = vector.load %arg11[%c0_56, %c0_57, %c0_58] : memref<2x1x128xf32, #tpu.memory_space<vmem>>, vector<1x1x128xf32>
    %125 = vector.shape_cast %124 : vector<1x1x128xf32> to vector<1x128xf32>
    %126 = vector.broadcast %125 : vector<1x128xf32> to vector<16x128xf32>
    %127 = arith.addf %123, %126 : vector<16x128xf32>
    %cst_59 = arith.constant 5.000000e-01 : f32
    %128 = vector.broadcast %cst_59 : f32 to vector<16x128xf32>
    %129 = arith.mulf %128, %127 : vector<16x128xf32>
    %cst_60 = arith.constant 4.471500e-02 : f32
    %130 = vector.broadcast %cst_60 : f32 to vector<16x128xf32>
    %131 = arith.mulf %130, %127 : vector<16x128xf32>
    %132 = arith.mulf %131, %127 : vector<16x128xf32>
    %133 = arith.mulf %132, %127 : vector<16x128xf32>
    %134 = arith.addf %127, %133 : vector<16x128xf32>
    %cst_61 = arith.constant 0.797884583 : f32
    %135 = vector.broadcast %cst_61 : f32 to vector<16x128xf32>
    %136 = arith.mulf %135, %134 : vector<16x128xf32>
    %137 = math.tanh %136 : vector<16x128xf32>
    %cst_62 = arith.constant 1.000000e+00 : f32
    %138 = vector.broadcast %cst_62 : f32 to vector<16x128xf32>
    %139 = arith.addf %138, %137 : vector<16x128xf32>
    %140 = arith.mulf %129, %139 : vector<16x128xf32>
    %c0_63 = arith.constant 0 : index
    %c0_64 = arith.constant 0 : index
    %c0_65 = arith.constant 0 : index
    %141 = vector.load %arg12[%c0_63, %c0_64, %c0_65] : memref<2x128x64xf32, #tpu.memory_space<vmem>>, vector<1x128x64xf32>
    %142 = vector.shape_cast %141 : vector<1x128x64xf32> to vector<128x64xf32>
    %cst_66 = arith.constant dense<0.000000e+00> : vector<16x64xf32>
    %143 = tpu.matmul %140, %142, %cst_66 {dimension_numbers = #tpu.dot_dimension_numbers<[1], [0], [0], [1], [0, 0, 1, 1], [], []>} : vector<16x128xf32>, vector<128x64xf32>, vector<16x64xf32> -> vector<16x64xf32>
    %c0_67 = arith.constant 0 : index
    %c0_68 = arith.constant 0 : index
    %c0_69 = arith.constant 0 : index
    %144 = vector.load %arg13[%c0_67, %c0_68, %c0_69] : memref<2x1x64xf32, #tpu.memory_space<vmem>>, vector<1x1x64xf32>
    %145 = vector.shape_cast %144 : vector<1x1x64xf32> to vector<1x64xf32>
    %146 = vector.broadcast %145 : vector<1x64xf32> to vector<16x64xf32>
    %147 = arith.addf %143, %146 : vector<16x64xf32>
    %148 = arith.addf %147, %120 : vector<16x64xf32>
    %c0_70 = arith.constant 0 : index
    %c0_71 = arith.constant 0 : index
    %c0_72 = arith.constant 0 : index
    %149 = vector.load %arg14[%c0_70, %c0_71, %c0_72] : memref<2x1x64xf32, #tpu.memory_space<vmem>>, vector<1x1x64xf32>
    %150 = vector.shape_cast %149 : vector<1x1x64xf32> to vector<1x64xf32>
    %c0_73 = arith.constant 0 : index
    %c0_74 = arith.constant 0 : index
    %c0_75 = arith.constant 0 : index
    %151 = vector.load %arg15[%c0_73, %c0_74, %c0_75] : memref<2x1x64xf32, #tpu.memory_space<vmem>>, vector<1x1x64xf32>
    %152 = vector.shape_cast %151 : vector<1x1x64xf32> to vector<1x64xf32>
    %cst_76 = arith.constant dense<0.000000e+00> : vector<16xf32>
    %153 = vector.multi_reduction <add>, %148, %cst_76 [1] : vector<16x64xf32> to vector<16xf32>
    %154 = vector.shape_cast %153 : vector<16xf32> to vector<16x1xf32>
    %cst_77 = arith.constant 6.400000e+01 : f32
    %155 = vector.broadcast %cst_77 : f32 to vector<16x1xf32>
    %156 = arith.divf %154, %155 : vector<16x1xf32>
    %157 = vector.broadcast %156 : vector<16x1xf32> to vector<16x64xf32>
    %158 = arith.subf %148, %157 : vector<16x64xf32>
    %159 = arith.mulf %158, %158 : vector<16x64xf32>
    %cst_78 = arith.constant dense<0.000000e+00> : vector<16xf32>
    %160 = vector.multi_reduction <add>, %159, %cst_78 [1] : vector<16x64xf32> to vector<16xf32>
    %161 = vector.shape_cast %160 : vector<16xf32> to vector<16x1xf32>
    %cst_79 = arith.constant 6.400000e+01 : f32
    %162 = vector.broadcast %cst_79 : f32 to vector<16x1xf32>
    %163 = arith.divf %161, %162 : vector<16x1xf32>
    %164 = vector.broadcast %156 : vector<16x1xf32> to vector<16x64xf32>
    %165 = arith.subf %148, %164 : vector<16x64xf32>
    %cst_80 = arith.constant 9.99999996E-13 : f32
    %166 = vector.broadcast %cst_80 : f32 to vector<16x1xf32>
    %167 = arith.addf %163, %166 : vector<16x1xf32>
    %168 = math.rsqrt %167 : vector<16x1xf32>
    %169 = vector.broadcast %168 : vector<16x1xf32> to vector<16x64xf32>
    %170 = arith.mulf %165, %169 : vector<16x64xf32>
    %171 = vector.broadcast %150 : vector<1x64xf32> to vector<16x64xf32>
    %172 = arith.mulf %170, %171 : vector<16x64xf32>
    %173 = vector.broadcast %152 : vector<1x64xf32> to vector<16x64xf32>
    %174 = arith.addf %172, %173 : vector<16x64xf32>
    %c1 = arith.constant 1 : index
    %c0_81 = arith.constant 0 : index
    %c0_82 = arith.constant 0 : index
    %175 = vector.load %arg4[%c1, %c0_81, %c0_82] : memref<2x64x192xf32, #tpu.memory_space<vmem>>, vector<1x64x192xf32>
    %176 = vector.shape_cast %175 : vector<1x64x192xf32> to vector<64x192xf32>
    %cst_83 = arith.constant dense<0.000000e+00> : vector<16x192xf32>
    %177 = tpu.matmul %174, %176, %cst_83 {dimension_numbers = #tpu.dot_dimension_numbers<[1], [0], [0], [1], [0, 0, 1, 1], [], []>} : vector<16x64xf32>, vector<64x192xf32>, vector<16x192xf32> -> vector<16x192xf32>
    %c1_84 = arith.constant 1 : index
    %c0_85 = arith.constant 0 : index
    %c0_86 = arith.constant 0 : index
    %178 = vector.load %arg5[%c1_84, %c0_85, %c0_86] : memref<2x1x192xf32, #tpu.memory_space<vmem>>, vector<1x1x192xf32>
    %179 = vector.shape_cast %178 : vector<1x1x192xf32> to vector<1x192xf32>
    %180 = vector.broadcast %179 : vector<1x192xf32> to vector<16x192xf32>
    %181 = arith.addf %177, %180 : vector<16x192xf32>
    %c1_87 = arith.constant 1 : index
    %c0_88 = arith.constant 0 : index
    %c0_89 = arith.constant 0 : index
    %182 = vector.load %arg7[%c1_87, %c0_88, %c0_89] : memref<2x1x64xf32, #tpu.memory_space<vmem>>, vector<1x1x64xf32>
    %183 = vector.shape_cast %182 : vector<1x1x64xf32> to vector<1x64xf32>
    %184 = vector.shape_cast %183 : vector<1x64xf32> to vector<1x64xf32>
    %185 = vector.broadcast %184 : vector<1x64xf32> to vector<16x64xf32>
    %186 = vector.extract_strided_slice %181 {offsets = [0, 0], sizes = [16, 32], strides = [1, 1]} : vector<16x192xf32> to vector<16x32xf32>
    %187 = vector.shape_cast %186 : vector<16x32xf32> to vector<2x8x32xf32>
    %188 = vector.extract_strided_slice %181 {offsets = [0, 64], sizes = [16, 32], strides = [1, 1]} : vector<16x192xf32> to vector<16x32xf32>
    %189 = vector.shape_cast %188 : vector<16x32xf32> to vector<2x8x32xf32>
    %190 = vector.extract_strided_slice %181 {offsets = [0, 128], sizes = [16, 32], strides = [1, 1]} : vector<16x192xf32> to vector<16x32xf32>
    %191 = vector.shape_cast %190 : vector<16x32xf32> to vector<2x8x32xf32>
    "tpu.trace_start"() <{level = 10 : i32, message = "bqd,bkd->bqk"}> : () -> ()
    %cst_90 = arith.constant dense<0.000000e+00> : vector<2x8x8xf32>
    %192 = tpu.matmul %187, %189, %cst_90 {dimension_numbers = #tpu.dot_dimension_numbers<[2], [2], [1], [1], [0, 0, 0, 1, 1, 1], [0], [0]>} : vector<2x8x32xf32>, vector<2x8x32xf32>, vector<2x8x8xf32> -> vector<2x8x8xf32>
    "tpu.trace_stop"() : () -> ()
    %193 = vector.broadcast %30 : vector<2x1x8xf32> to vector<2x8x8xf32>
    %194 = arith.addf %192, %193 : vector<2x8x8xf32>
    %cst_91 = arith.constant dense<0xFF800000> : vector<2x8xf32>
    %195 = vector.multi_reduction <maximumf>, %194, %cst_91 [2] : vector<2x8x8xf32> to vector<2x8xf32>
    %196 = vector.shape_cast %195 : vector<2x8xf32> to vector<2x8x1xf32>
    %197 = vector.broadcast %196 : vector<2x8x1xf32> to vector<2x8x8xf32>
    %198 = arith.subf %194, %197 : vector<2x8x8xf32>
    %199 = math.exp %198 : vector<2x8x8xf32>
    %cst_92 = arith.constant dense<0.000000e+00> : vector<2x8xf32>
    %200 = vector.multi_reduction <add>, %199, %cst_92 [2] : vector<2x8x8xf32> to vector<2x8xf32>
    %201 = vector.shape_cast %200 : vector<2x8xf32> to vector<2x8x1xf32>
    %202 = tpu.reciprocal %201 {approx = true} : vector<2x8x1xf32> -> vector<2x8x1xf32>
    %203 = vector.broadcast %202 : vector<2x8x1xf32> to vector<2x8x8xf32>
    %204 = arith.mulf %199, %203 : vector<2x8x8xf32>
    "tpu.trace_start"() <{level = 10 : i32, message = "bqk,bkd->bqd"}> : () -> ()
    %cst_93 = arith.constant dense<0.000000e+00> : vector<2x8x32xf32>
    %205 = tpu.matmul %204, %191, %cst_93 {dimension_numbers = #tpu.dot_dimension_numbers<[2], [1], [1], [2], [0, 0, 0, 1, 1, 2], [0], [0]>} : vector<2x8x8xf32>, vector<2x8x32xf32>, vector<2x8x32xf32> -> vector<2x8x32xf32>
    "tpu.trace_stop"() : () -> ()
    %206 = vector.shape_cast %205 : vector<2x8x32xf32> to vector<16x32xf32>
    %c1_94 = arith.constant 1 : index
    %c0_95 = arith.constant 0 : index
    %c0_96 = arith.constant 0 : index
    %207 = vector.load %arg6[%c1_94, %c0_95, %c0_96] : memref<2x64x64xf32, #tpu.memory_space<vmem>>, vector<1x64x64xf32>
    %208 = vector.shape_cast %207 : vector<1x64x64xf32> to vector<64x64xf32>
    %209 = vector.extract_strided_slice %208 {offsets = [0, 0], sizes = [32, 64], strides = [1, 1]} : vector<64x64xf32> to vector<32x64xf32>
    %cst_97 = arith.constant dense<0.000000e+00> : vector<16x64xf32>
    %210 = tpu.matmul %206, %209, %cst_97 {dimension_numbers = #tpu.dot_dimension_numbers<[1], [0], [0], [1], [0, 0, 1, 1], [], []>} : vector<16x32xf32>, vector<32x64xf32>, vector<16x64xf32> -> vector<16x64xf32>
    %211 = arith.addf %185, %210 : vector<16x64xf32>
    %212 = vector.extract_strided_slice %181 {offsets = [0, 32], sizes = [16, 32], strides = [1, 1]} : vector<16x192xf32> to vector<16x32xf32>
    %213 = vector.shape_cast %212 : vector<16x32xf32> to vector<2x8x32xf32>
    %214 = vector.extract_strided_slice %181 {offsets = [0, 96], sizes = [16, 32], strides = [1, 1]} : vector<16x192xf32> to vector<16x32xf32>
    %215 = vector.shape_cast %214 : vector<16x32xf32> to vector<2x8x32xf32>
    %216 = vector.extract_strided_slice %181 {offsets = [0, 160], sizes = [16, 32], strides = [1, 1]} : vector<16x192xf32> to vector<16x32xf32>
    %217 = vector.shape_cast %216 : vector<16x32xf32> to vector<2x8x32xf32>
    "tpu.trace_start"() <{level = 10 : i32, message = "bqd,bkd->bqk"}> : () -> ()
    %cst_98 = arith.constant dense<0.000000e+00> : vector<2x8x8xf32>
    %218 = tpu.matmul %213, %215, %cst_98 {dimension_numbers = #tpu.dot_dimension_numbers<[2], [2], [1], [1], [0, 0, 0, 1, 1, 1], [0], [0]>} : vector<2x8x32xf32>, vector<2x8x32xf32>, vector<2x8x8xf32> -> vector<2x8x8xf32>
    "tpu.trace_stop"() : () -> ()
    %219 = vector.broadcast %30 : vector<2x1x8xf32> to vector<2x8x8xf32>
    %220 = arith.addf %218, %219 : vector<2x8x8xf32>
    %cst_99 = arith.constant dense<0xFF800000> : vector<2x8xf32>
    %221 = vector.multi_reduction <maximumf>, %220, %cst_99 [2] : vector<2x8x8xf32> to vector<2x8xf32>
    %222 = vector.shape_cast %221 : vector<2x8xf32> to vector<2x8x1xf32>
    %223 = vector.broadcast %222 : vector<2x8x1xf32> to vector<2x8x8xf32>
    %224 = arith.subf %220, %223 : vector<2x8x8xf32>
    %225 = math.exp %224 : vector<2x8x8xf32>
    %cst_100 = arith.constant dense<0.000000e+00> : vector<2x8xf32>
    %226 = vector.multi_reduction <add>, %225, %cst_100 [2] : vector<2x8x8xf32> to vector<2x8xf32>
    %227 = vector.shape_cast %226 : vector<2x8xf32> to vector<2x8x1xf32>
    %228 = tpu.reciprocal %227 {approx = true} : vector<2x8x1xf32> -> vector<2x8x1xf32>
    %229 = vector.broadcast %228 : vector<2x8x1xf32> to vector<2x8x8xf32>
    %230 = arith.mulf %225, %229 : vector<2x8x8xf32>
    "tpu.trace_start"() <{level = 10 : i32, message = "bqk,bkd->bqd"}> : () -> ()
    %cst_101 = arith.constant dense<0.000000e+00> : vector<2x8x32xf32>
    %231 = tpu.matmul %230, %217, %cst_101 {dimension_numbers = #tpu.dot_dimension_numbers<[2], [1], [1], [2], [0, 0, 0, 1, 1, 2], [0], [0]>} : vector<2x8x8xf32>, vector<2x8x32xf32>, vector<2x8x32xf32> -> vector<2x8x32xf32>
    "tpu.trace_stop"() : () -> ()
    %232 = vector.shape_cast %231 : vector<2x8x32xf32> to vector<16x32xf32>
    %c1_102 = arith.constant 1 : index
    %c0_103 = arith.constant 0 : index
    %c0_104 = arith.constant 0 : index
    %233 = vector.load %arg6[%c1_102, %c0_103, %c0_104] : memref<2x64x64xf32, #tpu.memory_space<vmem>>, vector<1x64x64xf32>
    %234 = vector.shape_cast %233 : vector<1x64x64xf32> to vector<64x64xf32>
    %235 = vector.extract_strided_slice %234 {offsets = [32, 0], sizes = [32, 64], strides = [1, 1]} : vector<64x64xf32> to vector<32x64xf32>
    %cst_105 = arith.constant dense<0.000000e+00> : vector<16x64xf32>
    %236 = tpu.matmul %232, %235, %cst_105 {dimension_numbers = #tpu.dot_dimension_numbers<[1], [0], [0], [1], [0, 0, 1, 1], [], []>} : vector<16x32xf32>, vector<32x64xf32>, vector<16x64xf32> -> vector<16x64xf32>
    %237 = arith.addf %211, %236 : vector<16x64xf32>
    %238 = arith.addf %237, %174 : vector<16x64xf32>
    %c1_106 = arith.constant 1 : index
    %c0_107 = arith.constant 0 : index
    %c0_108 = arith.constant 0 : index
    %239 = vector.load %arg8[%c1_106, %c0_107, %c0_108] : memref<2x1x64xf32, #tpu.memory_space<vmem>>, vector<1x1x64xf32>
    %240 = vector.shape_cast %239 : vector<1x1x64xf32> to vector<1x64xf32>
    %c1_109 = arith.constant 1 : index
    %c0_110 = arith.constant 0 : index
    %c0_111 = arith.constant 0 : index
    %241 = vector.load %arg9[%c1_109, %c0_110, %c0_111] : memref<2x1x64xf32, #tpu.memory_space<vmem>>, vector<1x1x64xf32>
    %242 = vector.shape_cast %241 : vector<1x1x64xf32> to vector<1x64xf32>
    %cst_112 = arith.constant dense<0.000000e+00> : vector<16xf32>
    %243 = vector.multi_reduction <add>, %238, %cst_112 [1] : vector<16x64xf32> to vector<16xf32>
    %244 = vector.shape_cast %243 : vector<16xf32> to vector<16x1xf32>
    %cst_113 = arith.constant 6.400000e+01 : f32
    %245 = vector.broadcast %cst_113 : f32 to vector<16x1xf32>
    %246 = arith.divf %244, %245 : vector<16x1xf32>
    %247 = vector.broadcast %246 : vector<16x1xf32> to vector<16x64xf32>
    %248 = arith.subf %238, %247 : vector<16x64xf32>
    %249 = arith.mulf %248, %248 : vector<16x64xf32>
    %cst_114 = arith.constant dense<0.000000e+00> : vector<16xf32>
    %250 = vector.multi_reduction <add>, %249, %cst_114 [1] : vector<16x64xf32> to vector<16xf32>
    %251 = vector.shape_cast %250 : vector<16xf32> to vector<16x1xf32>
    %cst_115 = arith.constant 6.400000e+01 : f32
    %252 = vector.broadcast %cst_115 : f32 to vector<16x1xf32>
    %253 = arith.divf %251, %252 : vector<16x1xf32>
    %254 = vector.broadcast %246 : vector<16x1xf32> to vector<16x64xf32>
    %255 = arith.subf %238, %254 : vector<16x64xf32>
    %cst_116 = arith.constant 9.99999996E-13 : f32
    %256 = vector.broadcast %cst_116 : f32 to vector<16x1xf32>
    %257 = arith.addf %253, %256 : vector<16x1xf32>
    %258 = math.rsqrt %257 : vector<16x1xf32>
    %259 = vector.broadcast %258 : vector<16x1xf32> to vector<16x64xf32>
    %260 = arith.mulf %255, %259 : vector<16x64xf32>
    %261 = vector.broadcast %240 : vector<1x64xf32> to vector<16x64xf32>
    %262 = arith.mulf %260, %261 : vector<16x64xf32>
    %263 = vector.broadcast %242 : vector<1x64xf32> to vector<16x64xf32>
    %264 = arith.addf %262, %263 : vector<16x64xf32>
    %c1_117 = arith.constant 1 : index
    %c0_118 = arith.constant 0 : index
    %c0_119 = arith.constant 0 : index
    %265 = vector.load %arg10[%c1_117, %c0_118, %c0_119] : memref<2x64x128xf32, #tpu.memory_space<vmem>>, vector<1x64x128xf32>
    %266 = vector.shape_cast %265 : vector<1x64x128xf32> to vector<64x128xf32>
    %cst_120 = arith.constant dense<0.000000e+00> : vector<16x128xf32>
    %267 = tpu.matmul %264, %266, %cst_120 {dimension_numbers = #tpu.dot_dimension_numbers<[1], [0], [0], [1], [0, 0, 1, 1], [], []>} : vector<16x64xf32>, vector<64x128xf32>, vector<16x128xf32> -> vector<16x128xf32>
    %c1_121 = arith.constant 1 : index
    %c0_122 = arith.constant 0 : index
    %c0_123 = arith.constant 0 : index
    %268 = vector.load %arg11[%c1_121, %c0_122, %c0_123] : memref<2x1x128xf32, #tpu.memory_space<vmem>>, vector<1x1x128xf32>
    %269 = vector.shape_cast %268 : vector<1x1x128xf32> to vector<1x128xf32>
    %270 = vector.broadcast %269 : vector<1x128xf32> to vector<16x128xf32>
    %271 = arith.addf %267, %270 : vector<16x128xf32>
    %cst_124 = arith.constant 5.000000e-01 : f32
    %272 = vector.broadcast %cst_124 : f32 to vector<16x128xf32>
    %273 = arith.mulf %272, %271 : vector<16x128xf32>
    %cst_125 = arith.constant 4.471500e-02 : f32
    %274 = vector.broadcast %cst_125 : f32 to vector<16x128xf32>
    %275 = arith.mulf %274, %271 : vector<16x128xf32>
    %276 = arith.mulf %275, %271 : vector<16x128xf32>
    %277 = arith.mulf %276, %271 : vector<16x128xf32>
    %278 = arith.addf %271, %277 : vector<16x128xf32>
    %cst_126 = arith.constant 0.797884583 : f32
    %279 = vector.broadcast %cst_126 : f32 to vector<16x128xf32>
    %280 = arith.mulf %279, %278 : vector<16x128xf32>
    %281 = math.tanh %280 : vector<16x128xf32>
    %cst_127 = arith.constant 1.000000e+00 : f32
    %282 = vector.broadcast %cst_127 : f32 to vector<16x128xf32>
    %283 = arith.addf %282, %281 : vector<16x128xf32>
    %284 = arith.mulf %273, %283 : vector<16x128xf32>
    %c1_128 = arith.constant 1 : index
    %c0_129 = arith.constant 0 : index
    %c0_130 = arith.constant 0 : index
    %285 = vector.load %arg12[%c1_128, %c0_129, %c0_130] : memref<2x128x64xf32, #tpu.memory_space<vmem>>, vector<1x128x64xf32>
    %286 = vector.shape_cast %285 : vector<1x128x64xf32> to vector<128x64xf32>
    %cst_131 = arith.constant dense<0.000000e+00> : vector<16x64xf32>
    %287 = tpu.matmul %284, %286, %cst_131 {dimension_numbers = #tpu.dot_dimension_numbers<[1], [0], [0], [1], [0, 0, 1, 1], [], []>} : vector<16x128xf32>, vector<128x64xf32>, vector<16x64xf32> -> vector<16x64xf32>
    %c1_132 = arith.constant 1 : index
    %c0_133 = arith.constant 0 : index
    %c0_134 = arith.constant 0 : index
    %288 = vector.load %arg13[%c1_132, %c0_133, %c0_134] : memref<2x1x64xf32, #tpu.memory_space<vmem>>, vector<1x1x64xf32>
    %289 = vector.shape_cast %288 : vector<1x1x64xf32> to vector<1x64xf32>
    %290 = vector.broadcast %289 : vector<1x64xf32> to vector<16x64xf32>
    %291 = arith.addf %287, %290 : vector<16x64xf32>
    %292 = arith.addf %291, %264 : vector<16x64xf32>
    %c1_135 = arith.constant 1 : index
    %c0_136 = arith.constant 0 : index
    %c0_137 = arith.constant 0 : index
    %293 = vector.load %arg14[%c1_135, %c0_136, %c0_137] : memref<2x1x64xf32, #tpu.memory_space<vmem>>, vector<1x1x64xf32>
    %294 = vector.shape_cast %293 : vector<1x1x64xf32> to vector<1x64xf32>
    %c1_138 = arith.constant 1 : index
    %c0_139 = arith.constant 0 : index
    %c0_140 = arith.constant 0 : index
    %295 = vector.load %arg15[%c1_138, %c0_139, %c0_140] : memref<2x1x64xf32, #tpu.memory_space<vmem>>, vector<1x1x64xf32>
    %296 = vector.shape_cast %295 : vector<1x1x64xf32> to vector<1x64xf32>
    %cst_141 = arith.constant dense<0.000000e+00> : vector<16xf32>
    %297 = vector.multi_reduction <add>, %292, %cst_141 [1] : vector<16x64xf32> to vector<16xf32>
    %298 = vector.shape_cast %297 : vector<16xf32> to vector<16x1xf32>
    %cst_142 = arith.constant 6.400000e+01 : f32
    %299 = vector.broadcast %cst_142 : f32 to vector<16x1xf32>
    %300 = arith.divf %298, %299 : vector<16x1xf32>
    %301 = vector.broadcast %300 : vector<16x1xf32> to vector<16x64xf32>
    %302 = arith.subf %292, %301 : vector<16x64xf32>
    %303 = arith.mulf %302, %302 : vector<16x64xf32>
    %cst_143 = arith.constant dense<0.000000e+00> : vector<16xf32>
    %304 = vector.multi_reduction <add>, %303, %cst_143 [1] : vector<16x64xf32> to vector<16xf32>
    %305 = vector.shape_cast %304 : vector<16xf32> to vector<16x1xf32>
    %cst_144 = arith.constant 6.400000e+01 : f32
    %306 = vector.broadcast %cst_144 : f32 to vector<16x1xf32>
    %307 = arith.divf %305, %306 : vector<16x1xf32>
    %308 = vector.broadcast %300 : vector<16x1xf32> to vector<16x64xf32>
    %309 = arith.subf %292, %308 : vector<16x64xf32>
    %cst_145 = arith.constant 9.99999996E-13 : f32
    %310 = vector.broadcast %cst_145 : f32 to vector<16x1xf32>
    %311 = arith.addf %307, %310 : vector<16x1xf32>
    %312 = math.rsqrt %311 : vector<16x1xf32>
    %313 = vector.broadcast %312 : vector<16x1xf32> to vector<16x64xf32>
    %314 = arith.mulf %309, %313 : vector<16x64xf32>
    %315 = vector.broadcast %294 : vector<1x64xf32> to vector<16x64xf32>
    %316 = arith.mulf %314, %315 : vector<16x64xf32>
    %317 = vector.broadcast %296 : vector<1x64xf32> to vector<16x64xf32>
    %318 = arith.addf %316, %317 : vector<16x64xf32>
    %319 = vector.shape_cast %318 : vector<16x64xf32> to vector<2x8x64xf32>
    %320 = vector.extract_strided_slice %319 {offsets = [0, 0, 0], sizes = [2, 1, 64], strides = [1, 1, 1]} : vector<2x8x64xf32> to vector<2x1x64xf32>
    %321 = vector.shape_cast %320 : vector<2x1x64xf32> to vector<2x64xf32>
    %c0_146 = arith.constant 0 : index
    %c0_147 = arith.constant 0 : index
    %322 = vector.load %arg16[%c0_146, %c0_147] : memref<64x32xf32, #tpu.memory_space<vmem>>, vector<64x32xf32>
    %cst_148 = arith.constant dense<0.000000e+00> : vector<2x32xf32>
    %323 = tpu.matmul %321, %322, %cst_148 {dimension_numbers = #tpu.dot_dimension_numbers<[1], [0], [0], [1], [0, 0, 1, 1], [], []>} : vector<2x64xf32>, vector<64x32xf32>, vector<2x32xf32> -> vector<2x32xf32>
    %c0_149 = arith.constant 0 : index
    %c0_150 = arith.constant 0 : index
    %324 = vector.load %arg17[%c0_149, %c0_150] : memref<1x32xf32, #tpu.memory_space<vmem>>, vector<1x32xf32>
    %325 = vector.broadcast %324 : vector<1x32xf32> to vector<2x32xf32>
    %326 = arith.addf %323, %325 : vector<2x32xf32>
    %c0_151 = arith.constant 0 : index
    %c0_152 = arith.constant 0 : index
    %327 = vector.load %arg18[%c0_151, %c0_152] : memref<32x1xf32, #tpu.memory_space<vmem>>, vector<32x1xf32>
    %cst_153 = arith.constant dense<0.000000e+00> : vector<2x1xf32>
    %328 = tpu.matmul %326, %327, %cst_153 {dimension_numbers = #tpu.dot_dimension_numbers<[1], [0], [0], [1], [0, 0, 1, 1], [], []>} : vector<2x32xf32>, vector<32x1xf32>, vector<2x1xf32> -> vector<2x1xf32>
    %c0_154 = arith.constant 0 : index
    %c0_155 = arith.constant 0 : index
    %329 = vector.load %arg19[%c0_154, %c0_155] : memref<1x1xf32, #tpu.memory_space<vmem>>, vector<1x1xf32>
    %330 = vector.broadcast %329 : vector<1x1xf32> to vector<2x1xf32>
    %331 = arith.addf %328, %330 : vector<2x1xf32>
    %cst_156 = arith.constant 0.000000e+00 : f32
    %332 = vector.broadcast %cst_156 : f32 to vector<2x1xf32>
    %333 = arith.subf %332, %331 : vector<2x1xf32>
    %334 = math.exp %333 : vector<2x1xf32>
    %cst_157 = arith.constant 1.000000e+00 : f32
    %335 = vector.broadcast %cst_157 : f32 to vector<2x1xf32>
    %336 = arith.addf %335, %334 : vector<2x1xf32>
    %cst_158 = arith.constant 1.000000e+00 : f32
    %337 = vector.broadcast %cst_158 : f32 to vector<2x1xf32>
    %338 = arith.divf %337, %336 : vector<2x1xf32>
    %c0_159 = arith.constant 0 : index
    %c0_160 = arith.constant 0 : index
    %339 = vector.load %arg20[%c0_159, %c0_160] : memref<2x1xf32, #tpu.memory_space<vmem>>, vector<2x1xf32>
    tpu.vector_store %arg20[%c0_159, %c0_160], %338 {strides = array<i32>} : memref<2x1xf32, #tpu.memory_space<vmem>>, vector<2x1xf32>,
    return
  }
}

</mosaic_0001>

<llo_original>
// kernel: text_classifier_forward.1
$region0: #{text_classifier_forward.1}
  #allocation0 [shape = 'u32[]', space=smem, size = 0x4, offset = 0x4, fixed_abs, tag = 'smem constant byte address 0x4 - core index']
  #allocation1 [shape = 'u32[144,128]{1,0:T(1,128)}', space=vmem, size = 0x12000, scoped, tag = 'internal scratch']
  #allocation2 [shape = 'f32[1,1]{1,0:T(1,128)S(1)}', space=vmem, size = 0x200, scoped, tag = 'scoped memory for text_classifier_forward.1']
  %s0 = inlined_call_operand.vmem [shape: f32[2,8,64], index: 0, kind: input, shape index: {}]
  %s1 = inlined_call_operand.vmem [shape: f32[2,1,8], index: 1, kind: input, shape index: {}]
  %s2 = inlined_call_operand.vmem [shape: f32[1,64], index: 2, kind: input, shape index: {}]
  %s3 = inlined_call_operand.vmem [shape: f32[1,64], index: 3, kind: input, shape index: {}]
  %s4 = inlined_call_operand.vmem [shape: f32[2,64,192], index: 4, kind: input, shape index: {}]
  %s5 = inlined_call_operand.vmem [shape: f32[2,1,192], index: 5, kind: input, shape index: {}]
  %s6 = inlined_call_operand.vmem [shape: f32[2,64,64], index: 6, kind: input, shape index: {}]
  %s7 = inlined_call_operand.vmem [shape: f32[2,1,64], index: 7, kind: input, shape index: {}]
  %s8 = inlined_call_operand.vmem [shape: f32[2,1,64], index: 8, kind: input, shape index: {}]
  %s9 = inlined_call_operand.vmem [shape: f32[2,1,64], index: 9, kind: input, shape index: {}]
  %s10 = inlined_call_operand.vmem [shape: f32[2,64,128], index: 10, kind: input, shape index: {}]
  %s11 = inlined_call_operand.vmem [shape: f32[2,1,128], index: 11, kind: input, shape index: {}]
  %s12 = inlined_call_operand.vmem [shape: f32[2,128,64], index: 12, kind: input, shape index: {}]
  %s13 = inlined_call_operand.vmem [shape: f32[2,1,64], index: 13, kind: input, shape index: {}]
  %s14 = inlined_call_operand.vmem [shape: f32[2,1,64], index: 14, kind: input, shape index: {}]
  %s15 = inlined_call_operand.vmem [shape: f32[2,1,64], index: 15, kind: input, shape index: {}]
  %s16 = inlined_call_operand.vmem [shape: f32[64,32], index: 16, kind: input, shape index: {}]
  %s17 = inlined_call_operand.vmem [shape: f32[1,32], index: 17, kind: input, shape index: {}]
  %s18 = inlined_call_operand.vmem [shape: f32[32,1], index: 18, kind: input, shape index: {}]
  %s19 = inlined_call_operand.<no memory space> [shape: f32[1,1], index: 19, kind: input, shape index: {}]
  %s20 = inlined_call_operand.vmem [shape: f32[2,1], index: 20, kind: output, shape index: {}]
  %s21 = sld [smem:[#allocation0]]
  $region90: #{text_classifier_forward.1} parent=0
    _
  %s23 = ssub.s32 1, %s21
  %s24 = scalar_select 0, %s23, %s21
  %v25 = vstv %s19
  %26 = vst [vmem:[#allocation2] sm:$0x1] %v25
  // Predicated region
  $region2: #{text_classifier_forward.1} parent=0 // pred_check
    _
  $region3: #{text_classifier_forward.1} parent=0 // pred_check_branch
    %28 = sbr.rel (0) target = $region5
  $region4: #{text_classifier_forward.1} parent=0 // pred_region
    _
  $region5: #{text_classifier_forward.1} parent=0 // pred_fallthru
    _
  // Predicated region
  $region6: #{text_classifier_forward.1} parent=0 // pred_check
    _
  $region7: #{text_classifier_forward.1} parent=0 // pred_check_branch
    %30 = sbr.rel (0) target = $region9
  $region8: #{text_classifier_forward.1} parent=0 // pred_region
    _
  $region9: #{text_classifier_forward.1} parent=0 // pred_fallthru
    _
  // Predicated region
  $region10: #{text_classifier_forward.1} parent=0 // pred_check
    _
  $region11: #{text_classifier_forward.1} parent=0 // pred_check_branch
    %32 = sbr.rel (0) target = $region13
  $region12: #{text_classifier_forward.1} parent=0 // pred_region
    _
  $region13: #{text_classifier_forward.1} parent=0 // pred_fallthru
    _
  // Predicated region
  $region14: #{text_classifier_forward.1} parent=0 // pred_check
    _
  $region15: #{text_classifier_forward.1} parent=0 // pred_check_branch
    %34 = sbr.rel (0) target = $region17
  $region16: #{text_classifier_forward.1} parent=0 // pred_region
    _
  $region17: #{text_classifier_forward.1} parent=0 // pred_fallthru
    _
  // Predicated region
  $region18: #{text_classifier_forward.1} parent=0 // pred_check
    _
  $region19: #{text_classifier_forward.1} parent=0 // pred_check_branch
    %36 = sbr.rel (0) target = $region21
  $region20: #{text_classifier_forward.1} parent=0 // pred_region
    _
  $region21: #{text_classifier_forward.1} parent=0 // pred_fallthru
    _
  // Predicated region
  $region22: #{text_classifier_forward.1} parent=0 // pred_check
    _
  $region23: #{text_classifier_forward.1} parent=0 // pred_check_branch
    %38 = sbr.rel (0) target = $region25
  $region24: #{text_classifier_forward.1} parent=0 // pred_region
    _
  $region25: #{text_classifier_forward.1} parent=0 // pred_fallthru
    _
  // Predicated region
  $region26: #{text_classifier_forward.1} parent=0 // pred_check
    _
  $region27: #{text_classifier_forward.1} parent=0 // pred_check_branch
    %40 = sbr.rel (0) target = $region29
  $region28: #{text_classifier_forward.1} parent=0 // pred_region
    _
  $region29: #{text_classifier_forward.1} parent=0 // pred_fallthru
    _
  // Predicated region
  $region30: #{text_classifier_forward.1} parent=0 // pred_check
    _
  $region31: #{text_classifier_forward.1} parent=0 // pred_check_branch
    %42 = sbr.rel (0) target = $region33
  $region32: #{text_classifier_forward.1} parent=0 // pred_region
    _
  $region33: #{text_classifier_forward.1} parent=0 // pred_fallthru
    _
  // Predicated region
  $region34: #{text_classifier_forward.1} parent=0 // pred_check
    _
  $region35: #{text_classifier_forward.1} parent=0 // pred_check_branch
    %44 = sbr.rel (0) target = $region37
  $region36: #{text_classifier_forward.1} parent=0 // pred_region
    _
  $region37: #{text_classifier_forward.1} parent=0 // pred_fallthru
    _
  // Predicated region
  $region38: #{text_classifier_forward.1} parent=0 // pred_check
    _
  $region39: #{text_classifier_forward.1} parent=0 // pred_check_branch
    %46 = sbr.rel (0) target = $region41
  $region40: #{text_classifier_forward.1} parent=0 // pred_region
    _
  $region41: #{text_classifier_forward.1} parent=0 // pred_fallthru
    _
  // Predicated region
  $region42: #{text_classifier_forward.1} parent=0 // pred_check
    _
  $region43: #{text_classifier_forward.1} parent=0 // pred_check_branch
    %48 = sbr.rel (0) target = $region45
  $region44: #{text_classifier_forward.1} parent=0 // pred_region
    _
  $region45: #{text_classifier_forward.1} parent=0 // pred_fallthru
    _
  // Predicated region
  $region46: #{text_classifier_forward.1} parent=0 // pred_check
    _
  $region47: #{text_classifier_forward.1} parent=0 // pred_check_branch
    %50 = sbr.rel (0) target = $region49
  $region48: #{text_classifier_forward.1} parent=0 // pred_region
    _
  $region49: #{text_classifier_forward.1} parent=0 // pred_fallthru
    _
  // Predicated region
  $region50: #{text_classifier_forward.1} parent=0 // pred_check
    _
  $region51: #{text_classifier_forward.1} parent=0 // pred_check_branch
    %52 = sbr.rel (0) target = $region53
  $region52: #{text_classifier_forward.1} parent=0 // pred_region
    _
  $region53: #{text_classifier_forward.1} parent=0 // pred_fallthru
    _
  // Predicated region
  $region54: #{text_classifier_forward.1} parent=0 // pred_check
    _
  $region55: #{text_classifier_forward.1} parent=0 // pred_check_branch
    %54 = sbr.rel (0) target = $region57
  $region56: #{text_classifier_forward.1} parent=0 // pred_region
    _
  $region57: #{text_classifier_forward.1} parent=0 // pred_fallthru
    _
  // Predicated region
  $region58: #{text_classifier_forward.1} parent=0 // pred_check
    _
  $region59: #{text_classifier_forward.1} parent=0 // pred_check_branch
    %56 = sbr.rel (0) target = $region61
  $region60: #{text_classifier_forward.1} parent=0 // pred_region
    _
  $region61: #{text_classifier_forward.1} parent=0 // pred_fallthru
    _
  // Predicated region
  $region62: #{text_classifier_forward.1} parent=0 // pred_check
    _
  $region63: #{text_classifier_forward.1} parent=0 // pred_check_branch
    %58 = sbr.rel (0) target = $region65
  $region64: #{text_classifier_forward.1} parent=0 // pred_region
    _
  $region65: #{text_classifier_forward.1} parent=0 // pred_fallthru
    _
  // Predicated region
  $region66: #{text_classifier_forward.1} parent=0 // pred_check
    _
  $region67: #{text_classifier_forward.1} parent=0 // pred_check_branch
    %60 = sbr.rel (0) target = $region69
  $region68: #{text_classifier_forward.1} parent=0 // pred_region
    _
  $region69: #{text_classifier_forward.1} parent=0 // pred_fallthru
    _
  // Predicated region
  $region70: #{text_classifier_forward.1} parent=0 // pred_check
    _
  $region71: #{text_classifier_forward.1} parent=0 // pred_check_branch
    %62 = sbr.rel (0) target = $region73
  $region72: #{text_classifier_forward.1} parent=0 // pred_region
    _
  $region73: #{text_classifier_forward.1} parent=0 // pred_fallthru
    _
  // Predicated region
  $region74: #{text_classifier_forward.1} parent=0 // pred_check
    _
  $region75: #{text_classifier_forward.1} parent=0 // pred_check_branch
    %64 = sbr.rel (0) target = $region77
  $region76: #{text_classifier_forward.1} parent=0 // pred_region
    _
  $region77: #{text_classifier_forward.1} parent=0 // pred_fallthru
    _
  // Predicated region
  $region78: #{text_classifier_forward.1} parent=0 // pred_check
    _
  $region79: #{text_classifier_forward.1} parent=0 // pred_check_branch
    %66 = sbr.rel (0) target = $region81
  $region80: #{text_classifier_forward.1} parent=0 // pred_region
    _
  $region81: #{text_classifier_forward.1} parent=0 // pred_fallthru
    _
  %v67 = vld [vmem:[%s0] sm:$0xff]
  %v68 = vld [vmem:[%s0 + $0x8] sm:$0xff]
  %v69 = vld [vmem:[%s2] sm:$0x1]
  %v70 = vld [vmem:[%s3] sm:$0x1]
  %vm71 = vcmask 523264
  %v72 = vsel %vm71, %v67, 0.0
  %73 = vadd.xlane.f32.xlu0 %v72
  %v74 = vpop.xlane.xlu0 %73
  %v75 = vsel %vm71, %v68, 0.0
  %76 = vadd.xlane.f32.xlu0 %v75
  %v77 = vpop.xlane.xlu0 %76
  %v78 = vrcp.pop 64.0
  %v79 = vmul.f32 %v74, %v78
  %v80 = vmul.f32 %v77, %v78
  %v81 = vsub.f32 %v67, %v79
  %v82 = vsub.f32 %v68, %v80
  %v83 = vmul.f32 %v81, %v81
  %v84 = vmul.f32 %v82, %v82
  %v85 = vsel %vm71, %v83, 0.0
  %86 = vadd.xlane.f32.xlu0 %v85
  %v87 = vpop.xlane.xlu0 %86
  %v88 = vsel %vm71, %v84, 0.0
  %89 = vadd.xlane.f32.xlu0 %v88
  %v90 = vpop.xlane.xlu0 %89
  %v91 = vmul.f32 %v87, %v78
  %v92 = vmul.f32 %v90, %v78
  %v93 = vadd.f32 %v91, 1e-12
  %v94 = vadd.f32 %v92, 1e-12
  %v95 = vrsqrt.pop %v93
  %v96 = vrsqrt.pop %v94
  %v97 = vmul.f32 %v81, %v95
  %v98 = vmul.f32 %v82, %v96
  %v100 = vlaneseq
  %v101 = vshrl.u32 %v100, 7
  %v102 = vsub.s32 0, %v101
  %v103 = vrot.slane %v69, %v102
  %v105 = vmul.f32 %v97, %v103
  %v106 = vmul.f32 %v98, %v103
  %v108 = vlaneseq
  %v109 = vshrl.u32 %v108, 7
  %v110 = vsub.s32 0, %v109
  %v111 = vrot.slane %v70, %v110
  %v113 = vadd.f32 %v105, %v111
  %v114 = vadd.f32 %v106, %v111
  %v115 = vld [vmem:[%s1] sm:$0x1]
  %v116 = vld [vmem:[%s1 + $0x1] sm:$0x1]
  %v117 = vsub.f32 %v115, 1.0
  %v118 = vsub.f32 %v116, 1.0
  %v119 = vmul.f32 %v117, 1e+09
  %v120 = vmul.f32 %v118, 1e+09
  %v121 = vld [vmem:[%s4] sm:$0xff]
  %v122 = vld [vmem:[%s4 + $0x8] sm:$0xff]
  %v123 = vld [vmem:[%s4 + $0x10] sm:$0xff]
  %v124 = vld [vmem:[%s4 + $0x18] sm:$0xff]
  %v125 = vld [vmem:[%s4 + $0x20] sm:$0xff]
  %v126 = vld [vmem:[%s4 + $0x28] sm:$0xff]
  %v127 = vld [vmem:[%s4 + $0x30] sm:$0xff]
  %v128 = vld [vmem:[%s4 + $0x38] sm:$0xff]
  %v129 = vld [vmem:[%s4 + $0x40] sm:$0xff]
  %v130 = vld [vmem:[%s4 + $0x48] sm:$0xff]
  %v131 = vld [vmem:[%s4 + $0x50] sm:$0xff]
  %v132 = vld [vmem:[%s4 + $0x58] sm:$0xff]
  %v133 = vld [vmem:[%s4 + $0x60] sm:$0xff]
  %v134 = vld [vmem:[%s4 + $0x68] sm:$0xff]
  %v135 = vld [vmem:[%s4 + $0x70] sm:$0xff]
  %v136 = vld [vmem:[%s4 + $0x78] sm:$0xff]
  %v137 = vld [vmem:[%s5] sm:$0x3]
  %v139 = vlaneseq
  %v140 = vshrl.u32 %v139, 7
  %v141 = vsub.s32 0, %v140
  %v142 = vrot.slane %v137, %v141
  %v143 = vlaneseq
  %v144 = vshrl.u32 %v143, 7
  %v145 = vsub.s32 1, %v144
  %v146 = vrot.slane %v137, %v145
  %v150 = vsel %vm71, %v113, 0
  %v153 = vsel %vm71, %v114, 0
  %155 = vmatprep.subr.mxu0 %v122
  %156 = vmatpush1.msra.mxu0 %v121
  %157 = vmatprep.subr.mxu0 %v124
  %158 = vmatpush1.msra.mxu0 %v123
  %159 = vmatprep.subr.mxu0 %v126
  %160 = vmatpush1.msra.mxu0 %v125
  %161 = vmatprep.subr.mxu0 %v128
  %162 = vmatpush1.msra.mxu0 %v127
  %163 = vmatprep.subr.mxu0 %v130
  %164 = vmatpush1.msra.mxu0 %v129
  %165 = vmatprep.subr.mxu0 %v132
  %166 = vmatpush1.msra.mxu0 %v131
  %167 = vmatprep.subr.mxu0 %v134
  %168 = vmatpush1.msra.mxu0 %v133
  %169 = vmatprep.subr.mxu0 %v136
  %170 = vmatpush1.msra.mxu0 %v135
  %171 = vmatprep.subr.mxu0 0.0
  %172 = vmatpush1.msra.mxu0 0.0
  %173 = vmatprep.subr.mxu0 0.0
  %174 = vmatpush1.msra.mxu0 0.0
  %175 = vmatprep.subr.mxu0 0.0
  %176 = vmatpush1.msra.mxu0 0.0
  %177 = vmatprep.subr.mxu0 0.0
  %178 = vmatpush1.msra.mxu0 0.0
  %179 = vmatprep.subr.mxu0 0.0
  %180 = vmatpush1.msra.mxu0 0.0
  %181 = vmatprep.subr.mxu0 0.0
  %182 = vmatpush1.msra.mxu0 0.0
  %183 = vmatprep.subr.mxu0 0.0
  %184 = vmatpush1.msra.mxu0 0.0
  %185 = vmatprep.subr.mxu0 0.0
  %186 = vmatpush1.msra.mxu0 0.0
  %187 = vmatprep.subr.mxu0 0.0
  %188 = vmatpush1.msra.mxu0 0.0
  %189 = vmatprep.subr.mxu0 0.0
  %190 = vmatpush1.msra.mxu0 0.0
  %191 = vmatprep.subr.mxu0 0.0
  %192 = vmatpush1.msra.mxu0 0.0
  %193 = vmatprep.subr.mxu0 0.0
  %194 = vmatpush1.msra.mxu0 0.0
  %195 = vmatprep.subr.mxu0 0.0
  %196 = vmatpush1.msra.mxu0 0.0
  %197 = vmatprep.subr.mxu0 0.0
  %198 = vmatpush1.msra.mxu0 0.0
  %199 = vmatprep.subr.mxu0 0.0
  %200 = vmatpush1.msra.mxu0 0.0
  %201 = vmatprep.subr.mxu0 0.0
  %202 = vmatpush1.msra.mxu0 0.0
  %203 = vmatprep.subr.mxu0 0.0
  %204 = vmatpush1.msra.mxu0 0.0
  %205 = vmatprep.subr.mxu0 0.0
  %206 = vmatpush1.msra.mxu0 0.0
  %207 = vmatprep.subr.mxu0 0.0
  %208 = vmatpush1.msra.mxu0 0.0
  %209 = vmatprep.subr.mxu0 0.0
  %210 = vmatpush1.msra.mxu0 0.0
  %211 = vmatprep.subr.mxu0 0.0
  %212 = vmatpush1.msra.mxu0 0.0
  %213 = vmatprep.subr.mxu0 0.0
  %214 = vmatpush1.msra.mxu0 0.0
  %215 = vmatprep.subr.mxu0 0.0
  %216 = vmatpush1.msra.mxu0 0.0
  %217 = vmatprep.subr.mxu0 0.0
  %218 = vmatpush1.msra.mxu0 0.0
  %219 = vmatprep.mubr.f32.mxu0 0.0
  %220 = vmatmul.mubr.f32.gmra.mrb[0].mxu0 %v150
  %v221 = vpop.f32.mrb[0].mxu0
  %v222 = vadd.f32 %v142, %v221
  %v223 = vpop.f32.mrb[0].mxu0
  %v224 = vadd.f32 %v146, %v223
  %225 = vmatprep.mubr.f32.mxu0 0.0
  %226 = vmatmul.mubr.f32.gmra.mrb[0].mxu0 %v153
  %v227 = vpop.f32.mrb[0].mxu0
  %v228 = vadd.f32 %v142, %v227
  %v229 = vpop.f32.mrb[0].mxu0
  %v230 = vadd.f32 %v146, %v229
  %231 = vdwg.mxu0
  %v232 = vld [vmem:[%s7] sm:$0x1]
  %v234 = vlaneseq
  %v235 = vshrl.u32 %v234, 7
  %v236 = vsub.s32 0, %v235
  %v237 = vrot.slane %v232, %v236
  %v241 = vlaneseq
  %v242 = vshrl.u32 %v241, 7
  %v243 = vsub.s32 0, %v242
  %v244 = vrot.slane %v119, %v243
  %v245 = vlaneseq
  %v246 = vshrl.u32 %v245, 7
  %v247 = vsub.s32 0, %v246
  %v248 = vrot.slane %v120, %v247
  %252 = vrot.lane.b32.xlu0 %v222, 64
  %v253 = vpop.permute.xlu0 %252
  %vm254 = vcmask 261120
  %v255 = vsel %vm254, %v222, 0
  %v257 = vsel %vm254, %v253, 0
  %259 = vmatprep.subr.mxu0 0.0
  %260 = vmatpush1.xpose.msra.mxu0 %v257
  %261 = vmatprep.subr.mxu0 0.0
  %262 = vmatpush1.xpose.msra.mxu0 0.0
  %263 = vmatprep.subr.mxu0 0.0
  %264 = vmatpush1.xpose.msra.mxu0 0.0
  %265 = vmatprep.subr.mxu0 0.0
  %266 = vmatpush1.xpose.msra.mxu0 0.0
  %267 = vmatprep.subr.mxu0 0.0
  %268 = vmatpush1.xpose.msra.mxu0 0.0
  %269 = vmatprep.subr.mxu0 0.0
  %270 = vmatpush1.xpose.msra.mxu0 0.0
  %271 = vmatprep.subr.mxu0 0.0
  %272 = vmatpush1.xpose.msra.mxu0 0.0
  %273 = vmatprep.subr.mxu0 0.0
  %274 = vmatpush1.xpose.msra.mxu0 0.0
  %275 = vmatprep.subr.mxu0 0.0
  %276 = vmatpush1.xpose.msra.mxu0 0.0
  %277 = vmatprep.subr.mxu0 0.0
  %278 = vmatpush1.xpose.msra.mxu0 0.0
  %279 = vmatprep.subr.mxu0 0.0
  %280 = vmatpush1.xpose.msra.mxu0 0.0
  %281 = vmatprep.subr.mxu0 0.0
  %282 = vmatpush1.xpose.msra.mxu0 0.0
  %283 = vmatprep.subr.mxu0 0.0
  %284 = vmatpush1.xpose.msra.mxu0 0.0
  %285 = vmatprep.subr.mxu0 0.0
  %286 = vmatpush1.xpose.msra.mxu0 0.0
  %287 = vmatprep.subr.mxu0 0.0
  %288 = vmatpush1.xpose.msra.mxu0 0.0
  %289 = vmatprep.subr.mxu0 0.0
  %290 = vmatpush1.xpose.msra.mxu0 0.0
  %291 = vmatprep.subr.mxu0 0.0
  %292 = vmatpush1.xpose.msra.mxu0 0.0
  %293 = vmatprep.subr.mxu0 0.0
  %294 = vmatpush1.xpose.msra.mxu0 0.0
  %295 = vmatprep.subr.mxu0 0.0
  %296 = vmatpush1.xpose.msra.mxu0 0.0
  %297 = vmatprep.subr.mxu0 0.0
  %298 = vmatpush1.xpose.msra.mxu0 0.0
  %299 = vmatprep.subr.mxu0 0.0
  %300 = vmatpush1.xpose.msra.mxu0 0.0
  %301 = vmatprep.subr.mxu0 0.0
  %302 = vmatpush1.xpose.msra.mxu0 0.0
  %303 = vmatprep.subr.mxu0 0.0
  %304 = vmatpush1.xpose.msra.mxu0 0.0
  %305 = vmatprep.subr.mxu0 0.0
  %306 = vmatpush1.xpose.msra.mxu0 0.0
  %307 = vmatprep.subr.mxu0 0.0
  %308 = vmatpush1.xpose.msra.mxu0 0.0
  %309 = vmatprep.subr.mxu0 0.0
  %310 = vmatpush1.xpose.msra.mxu0 0.0
  %311 = vmatprep.subr.mxu0 0.0
  %312 = vmatpush1.xpose.msra.mxu0 0.0
  %313 = vmatprep.subr.mxu0 0.0
  %314 = vmatpush1.xpose.msra.mxu0 0.0
  %315 = vmatprep.subr.mxu0 0.0
  %316 = vmatpush1.xpose.msra.mxu0 0.0
  %317 = vmatprep.subr.mxu0 0.0
  %318 = vmatpush1.xpose.msra.mxu0 0.0
  %319 = vmatprep.subr.mxu0 0.0
  %320 = vmatpush1.xpose.msra.mxu0 0.0
  %321 = vmatprep.subr.mxu0 0.0
  %322 = vmatpush1.xpose.msra.mxu0 0.0
  %323 = vmatprep.mubr.f32.mxu0 0.0
  %324 = vmatmul.mubr.f32.gmra.mrb[0].mxu0 %v255
  %v325 = vpop.f32.mrb[0].mxu0
  %v326 = vadd.f32 %v244, %v325
  %v327 = vpop.f32.mrb[0].mxu0
  %328 = vdwg.mxu0
  %330 = vrot.lane.b32.xlu0 %v228, 64
  %v331 = vpop.permute.xlu0 %330
  %v332 = vsel %vm254, %v228, 0
  %v334 = vsel %vm254, %v331, 0
  %336 = vmatprep.subr.mxu0 0.0
  %337 = vmatpush1.xpose.msra.mxu0 %v334
  %338 = vmatprep.subr.mxu0 0.0
  %339 = vmatpush1.xpose.msra.mxu0 0.0
  %340 = vmatprep.subr.mxu0 0.0
  %341 = vmatpush1.xpose.msra.mxu0 0.0
  %342 = vmatprep.subr.mxu0 0.0
  %343 = vmatpush1.xpose.msra.mxu0 0.0
  %344 = vmatprep.subr.mxu0 0.0
  %345 = vmatpush1.xpose.msra.mxu0 0.0
  %346 = vmatprep.subr.mxu0 0.0
  %347 = vmatpush1.xpose.msra.mxu0 0.0
  %348 = vmatprep.subr.mxu0 0.0
  %349 = vmatpush1.xpose.msra.mxu0 0.0
  %350 = vmatprep.subr.mxu0 0.0
  %351 = vmatpush1.xpose.msra.mxu0 0.0
  %352 = vmatprep.subr.mxu0 0.0
  %353 = vmatpush1.xpose.msra.mxu0 0.0
  %354 = vmatprep.subr.mxu0 0.0
  %355 = vmatpush1.xpose.msra.mxu0 0.0
  %356 = vmatprep.subr.mxu0 0.0
  %357 = vmatpush1.xpose.msra.mxu0 0.0
  %358 = vmatprep.subr.mxu0 0.0
  %359 = vmatpush1.xpose.msra.mxu0 0.0
  %360 = vmatprep.subr.mxu0 0.0
  %361 = vmatpush1.xpose.msra.mxu0 0.0
  %362 = vmatprep.subr.mxu0 0.0
  %363 = vmatpush1.xpose.msra.mxu0 0.0
  %364 = vmatprep.subr.mxu0 0.0
  %365 = vmatpush1.xpose.msra.mxu0 0.0
  %366 = vmatprep.subr.mxu0 0.0
  %367 = vmatpush1.xpose.msra.mxu0 0.0
  %368 = vmatprep.subr.mxu0 0.0
  %369 = vmatpush1.xpose.msra.mxu0 0.0
  %370 = vmatprep.subr.mxu0 0.0
  %371 = vmatpush1.xpose.msra.mxu0 0.0
  %372 = vmatprep.subr.mxu0 0.0
  %373 = vmatpush1.xpose.msra.mxu0 0.0
  %374 = vmatprep.subr.mxu0 0.0
  %375 = vmatpush1.xpose.msra.mxu0 0.0
  %376 = vmatprep.subr.mxu0 0.0
  %377 = vmatpush1.xpose.msra.mxu0 0.0
  %378 = vmatprep.subr.mxu0 0.0
  %379 = vmatpush1.xpose.msra.mxu0 0.0
  %380 = vmatprep.subr.mxu0 0.0
  %381 = vmatpush1.xpose.msra.mxu0 0.0
  %382 = vmatprep.subr.mxu0 0.0
  %383 = vmatpush1.xpose.msra.mxu0 0.0
  %384 = vmatprep.subr.mxu0 0.0
  %385 = vmatpush1.xpose.msra.mxu0 0.0
  %386 = vmatprep.subr.mxu0 0.0
  %387 = vmatpush1.xpose.msra.mxu0 0.0
  %388 = vmatprep.subr.mxu0 0.0
  %389 = vmatpush1.xpose.msra.mxu0 0.0
  %390 = vmatprep.subr.mxu0 0.0
  %391 = vmatpush1.xpose.msra.mxu0 0.0
  %392 = vmatprep.subr.mxu0 0.0
  %393 = vmatpush1.xpose.msra.mxu0 0.0
  %394 = vmatprep.subr.mxu0 0.0
  %395 = vmatpush1.xpose.msra.mxu0 0.0
  %396 = vmatprep.subr.mxu0 0.0
  %397 = vmatpush1.xpose.msra.mxu0 0.0
  %398 = vmatprep.subr.mxu0 0.0
  %399 = vmatpush1.xpose.msra.mxu0 0.0
  %400 = vmatprep.mubr.f32.mxu0 0.0
  %401 = vmatmul.mubr.f32.gmra.mrb[0].mxu0 %v332
  %v402 = vpop.f32.mrb[0].mxu0
  %v403 = vadd.f32 %v248, %v402
  %v404 = vpop.f32.mrb[0].mxu0
  %405 = vdwg.mxu0
  %vm406 = vcmask 64512
  %v407 = vsel %vm406, %v326, -inf
  %408 = vmax.xlane.f32.xlu0 %v407
  %v409 = vpop.xlane.xlu0 %408
  %v410 = vsel %vm406, %v403, -inf
  %411 = vmax.xlane.f32.xlu0 %v410
  %v412 = vpop.xlane.xlu0 %411
  %v413 = vsub.f32 %v326, %v409
  %v414 = vsub.f32 %v403, %v412
  %v415 = vmul.f32 %v413, 1.442695
  %v416 = vpow.pop %v415
  %v417 = vmul.f32 %v414, 1.442695
  %v418 = vpow.pop %v417
  %v419 = vsel %vm406, %v416, 0.0
  %420 = vadd.xlane.f32.xlu0 %v419
  %v421 = vpop.xlane.xlu0 %420
  %v422 = vsel %vm406, %v418, 0.0
  %423 = vadd.xlane.f32.xlu0 %v422
  %v424 = vpop.xlane.xlu0 %423
  %v425 = vrcp.pop %v421
  %v426 = vrcp.pop %v424
  %v427 = vmul.f32 %v416, %v425
  %v428 = vmul.f32 %v418, %v426
  %v430 = vsel %vm406, %v427, 0
  %432 = vmatprep.subr.mxu0 0.0
  %433 = vmatpush1.msra.mxu0 %v224
  %434 = vmatprep.subr.mxu0 0.0
  %435 = vmatpush1.msra.mxu0 0.0
  %436 = vmatprep.subr.mxu0 0.0
  %437 = vmatpush1.msra.mxu0 0.0
  %438 = vmatprep.subr.mxu0 0.0
  %439 = vmatpush1.msra.mxu0 0.0
  %440 = vmatprep.subr.mxu0 0.0
  %441 = vmatpush1.msra.mxu0 0.0
  %442 = vmatprep.subr.mxu0 0.0
  %443 = vmatpush1.msra.mxu0 0.0
  %444 = vmatprep.subr.mxu0 0.0
  %445 = vmatpush1.msra.mxu0 0.0
  %446 = vmatprep.subr.mxu0 0.0
  %447 = vmatpush1.msra.mxu0 0.0
  %448 = vmatprep.subr.mxu0 0.0
  %449 = vmatpush1.msra.mxu0 0.0
  %450 = vmatprep.subr.mxu0 0.0
  %451 = vmatpush1.msra.mxu0 0.0
  %452 = vmatprep.subr.mxu0 0.0
  %453 = vmatpush1.msra.mxu0 0.0
  %454 = vmatprep.subr.mxu0 0.0
  %455 = vmatpush1.msra.mxu0 0.0
  %456 = vmatprep.subr.mxu0 0.0
  %457 = vmatpush1.msra.mxu0 0.0
  %458 = vmatprep.subr.mxu0 0.0
  %459 = vmatpush1.msra.mxu0 0.0
  %460 = vmatprep.subr.mxu0 0.0
  %461 = vmatpush1.msra.mxu0 0.0
  %462 = vmatprep.subr.mxu0 0.0
  %463 = vmatpush1.msra.mxu0 0.0
  %464 = vmatprep.subr.mxu0 0.0
  %465 = vmatpush1.msra.mxu0 0.0
  %466 = vmatprep.subr.mxu0 0.0
  %467 = vmatpush1.msra.mxu0 0.0
  %468 = vmatprep.subr.mxu0 0.0
  %469 = vmatpush1.msra.mxu0 0.0
  %470 = vmatprep.subr.mxu0 0.0
  %471 = vmatpush1.msra.mxu0 0.0
  %472 = vmatprep.subr.mxu0 0.0
  %473 = vmatpush1.msra.mxu0 0.0
  %474 = vmatprep.subr.mxu0 0.0
  %475 = vmatpush1.msra.mxu0 0.0
  %476 = vmatprep.subr.mxu0 0.0
  %477 = vmatpush1.msra.mxu0 0.0
  %478 = vmatprep.subr.mxu0 0.0
  %479 = vmatpush1.msra.mxu0 0.0
  %480 = vmatprep.subr.mxu0 0.0
  %481 = vmatpush1.msra.mxu0 0.0
  %482 = vmatprep.subr.mxu0 0.0
  %483 = vmatpush1.msra.mxu0 0.0
  %484 = vmatprep.subr.mxu0 0.0
  %485 = vmatpush1.msra.mxu0 0.0
  %486 = vmatprep.subr.mxu0 0.0
  %487 = vmatpush1.msra.mxu0 0.0
  %488 = vmatprep.subr.mxu0 0.0
  %489 = vmatpush1.msra.mxu0 0.0
  %490 = vmatprep.subr.mxu0 0.0
  %491 = vmatpush1.msra.mxu0 0.0
  %492 = vmatprep.subr.mxu0 0.0
  %493 = vmatpush1.msra.mxu0 0.0
  %494 = vmatprep.subr.mxu0 0.0
  %495 = vmatpush1.msra.mxu0 0.0
  %496 = vmatprep.mubr.f32.mxu0 0.0
  %497 = vmatmul.mubr.f32.gmra.mrb[0].mxu0 %v430
  %v498 = vpop.f32.mrb[0].mxu0
  %v499 = vadd.f32 0.0, %v498
  %v500 = vpop.f32.mrb[0].mxu0
  %501 = vdwg.mxu0
  %v503 = vsel %vm406, %v428, 0
  %505 = vmatprep.subr.mxu0 0.0
  %506 = vmatpush1.msra.mxu0 %v230
  %507 = vmatprep.subr.mxu0 0.0
  %508 = vmatpush1.msra.mxu0 0.0
  %509 = vmatprep.subr.mxu0 0.0
  %510 = vmatpush1.msra.mxu0 0.0
  %511 = vmatprep.subr.mxu0 0.0
  %512 = vmatpush1.msra.mxu0 0.0
  %513 = vmatprep.subr.mxu0 0.0
  %514 = vmatpush1.msra.mxu0 0.0
  %515 = vmatprep.subr.mxu0 0.0
  %516 = vmatpush1.msra.mxu0 0.0
  %517 = vmatprep.subr.mxu0 0.0
  %518 = vmatpush1.msra.mxu0 0.0
  %519 = vmatprep.subr.mxu0 0.0
  %520 = vmatpush1.msra.mxu0 0.0
  %521 = vmatprep.subr.mxu0 0.0
  %522 = vmatpush1.msra.mxu0 0.0
  %523 = vmatprep.subr.mxu0 0.0
  %524 = vmatpush1.msra.mxu0 0.0
  %525 = vmatprep.subr.mxu0 0.0
  %526 = vmatpush1.msra.mxu0 0.0
  %527 = vmatprep.subr.mxu0 0.0
  %528 = vmatpush1.msra.mxu0 0.0
  %529 = vmatprep.subr.mxu0 0.0
  %530 = vmatpush1.msra.mxu0 0.0
  %531 = vmatprep.subr.mxu0 0.0
  %532 = vmatpush1.msra.mxu0 0.0
  %533 = vmatprep.subr.mxu0 0.0
  %534 = vmatpush1.msra.mxu0 0.0
  %535 = vmatprep.subr.mxu0 0.0
  %536 = vmatpush1.msra.mxu0 0.0
  %537 = vmatprep.subr.mxu0 0.0
  %538 = vmatpush1.msra.mxu0 0.0
  %539 = vmatprep.subr.mxu0 0.0
  %540 = vmatpush1.msra.mxu0 0.0
  %541 = vmatprep.subr.mxu0 0.0
  %542 = vmatpush1.msra.mxu0 0.0
  %543 = vmatprep.subr.mxu0 0.0
  %544 = vmatpush1.msra.mxu0 0.0
  %545 = vmatprep.subr.mxu0 0.0
  %546 = vmatpush1.msra.mxu0 0.0
  %547 = vmatprep.subr.mxu0 0.0
  %548 = vmatpush1.msra.mxu0 0.0
  %549 = vmatprep.subr.mxu0 0.0
  %550 = vmatpush1.msra.mxu0 0.0
  %551 = vmatprep.subr.mxu0 0.0
  %552 = vmatpush1.msra.mxu0 0.0
  %553 = vmatprep.subr.mxu0 0.0
  %554 = vmatpush1.msra.mxu0 0.0
  %555 = vmatprep.subr.mxu0 0.0
  %556 = vmatpush1.msra.mxu0 0.0
  %557 = vmatprep.subr.mxu0 0.0
  %558 = vmatpush1.msra.mxu0 0.0
  %559 = vmatprep.subr.mxu0 0.0
  %560 = vmatpush1.msra.mxu0 0.0
  %561 = vmatprep.subr.mxu0 0.0
  %562 = vmatpush1.msra.mxu0 0.0
  %563 = vmatprep.subr.mxu0 0.0
  %564 = vmatpush1.msra.mxu0 0.0
  %565 = vmatprep.subr.mxu0 0.0
  %566 = vmatpush1.msra.mxu0 0.0
  %567 = vmatprep.subr.mxu0 0.0
  %568 = vmatpush1.msra.mxu0 0.0
  %569 = vmatprep.mubr.f32.mxu0 0.0
  %570 = vmatmul.mubr.f32.gmra.mrb[0].mxu0 %v503
  %v571 = vpop.f32.mrb[0].mxu0
  %v572 = vadd.f32 0.0, %v571
  %v573 = vpop.f32.mrb[0].mxu0
  %574 = vdwg.mxu0
  %v575 = vld [vmem:[%s6] sm:$0xff]
  %v576 = vld [vmem:[%s6 + $0x8] sm:$0xff]
  %v577 = vld [vmem:[%s6 + $0x10] sm:$0xff]
  %v578 = vld [vmem:[%s6 + $0x18] sm:$0xff]
  %v580 = vsel %vm254, %v499, 0
  %v583 = vsel %vm254, %v572, 0
  %585 = vmatprep.subr.mxu0 0.0
  %586 = vmatpush1.msra.mxu0 %v575
  %587 = vmatprep.subr.mxu0 0.0
  %588 = vmatpush1.msra.mxu0 %v576
  %589 = vmatprep.subr.mxu0 0.0
  %590 = vmatpush1.msra.mxu0 %v577
  %591 = vmatprep.subr.mxu0 0.0
  %592 = vmatpush1.msra.mxu0 %v578
  %593 = vmatprep.subr.mxu0 0.0
  %594 = vmatpush1.msra.mxu0 0.0
  %595 = vmatprep.subr.mxu0 0.0
  %596 = vmatpush1.msra.mxu0 0.0
  %597 = vmatprep.subr.mxu0 0.0
  %598 = vmatpush1.msra.mxu0 0.0
  %599 = vmatprep.subr.mxu0 0.0
  %600 = vmatpush1.msra.mxu0 0.0
  %601 = vmatprep.subr.mxu0 0.0
  %602 = vmatpush1.msra.mxu0 0.0
  %603 = vmatprep.subr.mxu0 0.0
  %604 = vmatpush1.msra.mxu0 0.0
  %605 = vmatprep.subr.mxu0 0.0
  %606 = vmatpush1.msra.mxu0 0.0
  %607 = vmatprep.subr.mxu0 0.0
  %608 = vmatpush1.msra.mxu0 0.0
  %609 = vmatprep.subr.mxu0 0.0
  %610 = vmatpush1.msra.mxu0 0.0
  %611 = vmatprep.subr.mxu0 0.0
  %612 = vmatpush1.msra.mxu0 0.0
  %613 = vmatprep.subr.mxu0 0.0
  %614 = vmatpush1.msra.mxu0 0.0
  %615 = vmatprep.subr.mxu0 0.0
  %616 = vmatpush1.msra.mxu0 0.0
  %617 = vmatprep.subr.mxu0 0.0
  %618 = vmatpush1.msra.mxu0 0.0
  %619 = vmatprep.subr.mxu0 0.0
  %620 = vmatpush1.msra.mxu0 0.0
  %621 = vmatprep.subr.mxu0 0.0
  %622 = vmatpush1.msra.mxu0 0.0
  %623 = vmatprep.subr.mxu0 0.0
  %624 = vmatpush1.msra.mxu0 0.0
  %625 = vmatprep.subr.mxu0 0.0
  %626 = vmatpush1.msra.mxu0 0.0
  %627 = vmatprep.subr.mxu0 0.0
  %628 = vmatpush1.msra.mxu0 0.0
  %629 = vmatprep.subr.mxu0 0.0
  %630 = vmatpush1.msra.mxu0 0.0
  %631 = vmatprep.subr.mxu0 0.0
  %632 = vmatpush1.msra.mxu0 0.0
  %633 = vmatprep.subr.mxu0 0.0
  %634 = vmatpush1.msra.mxu0 0.0
  %635 = vmatprep.subr.mxu0 0.0
  %636 = vmatpush1.msra.mxu0 0.0
  %637 = vmatprep.subr.mxu0 0.0
  %638 = vmatpush1.msra.mxu0 0.0
  %639 = vmatprep.subr.mxu0 0.0
  %640 = vmatpush1.msra.mxu0 0.0
  %641 = vmatprep.subr.mxu0 0.0
  %642 = vmatpush1.msra.mxu0 0.0
  %643 = vmatprep.subr.mxu0 0.0
  %644 = vmatpush1.msra.mxu0 0.0
  %645 = vmatprep.subr.mxu0 0.0
  %646 = vmatpush1.msra.mxu0 0.0
  %647 = vmatprep.subr.mxu0 0.0
  %648 = vmatpush1.msra.mxu0 0.0
  %649 = vmatprep.mubr.f32.mxu0 0.0
  %650 = vmatmul.mubr.f32.gmra.mrb[0].mxu0 %v580
  %v651 = vpop.f32.mrb[0].mxu0
  %v652 = vadd.f32 0.0, %v651
  %v653 = vpop.f32.mrb[0].mxu0
  %654 = vmatprep.mubr.f32.mxu0 0.0
  %655 = vmatmul.mubr.f32.gmra.mrb[0].mxu0 %v583
  %v656 = vpop.f32.mrb[0].mxu0
  %v657 = vadd.f32 0.0, %v656
  %v658 = vpop.f32.mrb[0].mxu0
  %659 = vdwg.mxu0
  %v660 = vadd.f32 %v237, %v652
  %v661 = vadd.f32 %v237, %v657
  %662 = vrot.lane.b32.xlu0 %v222, 96
  %v663 = vpop.permute.xlu0 %662
  %664 = vrot.lane.b32.xlu0 %v222, 32
  %v665 = vpop.permute.xlu0 %664
  %v666 = vsel %vm254, %v663, 0
  %v668 = vsel %vm254, %v665, 0
  %670 = vmatprep.subr.mxu0 0.0
  %671 = vmatpush1.xpose.msra.mxu0 %v668
  %672 = vmatprep.subr.mxu0 0.0
  %673 = vmatpush1.xpose.msra.mxu0 0.0
  %674 = vmatprep.subr.mxu0 0.0
  %675 = vmatpush1.xpose.msra.mxu0 0.0
  %676 = vmatprep.subr.mxu0 0.0
  %677 = vmatpush1.xpose.msra.mxu0 0.0
  %678 = vmatprep.subr.mxu0 0.0
  %679 = vmatpush1.xpose.msra.mxu0 0.0
  %680 = vmatprep.subr.mxu0 0.0
  %681 = vmatpush1.xpose.msra.mxu0 0.0
  %682 = vmatprep.subr.mxu0 0.0
  %683 = vmatpush1.xpose.msra.mxu0 0.0
  %684 = vmatprep.subr.mxu0 0.0
  %685 = vmatpush1.xpose.msra.mxu0 0.0
  %686 = vmatprep.subr.mxu0 0.0
  %687 = vmatpush1.xpose.msra.mxu0 0.0
  %688 = vmatprep.subr.mxu0 0.0
  %689 = vmatpush1.xpose.msra.mxu0 0.0
  %690 = vmatprep.subr.mxu0 0.0
  %691 = vmatpush1.xpose.msra.mxu0 0.0
  %692 = vmatprep.subr.mxu0 0.0
  %693 = vmatpush1.xpose.msra.mxu0 0.0
  %694 = vmatprep.subr.mxu0 0.0
  %695 = vmatpush1.xpose.msra.mxu0 0.0
  %696 = vmatprep.subr.mxu0 0.0
  %697 = vmatpush1.xpose.msra.mxu0 0.0
  %698 = vmatprep.subr.mxu0 0.0
  %699 = vmatpush1.xpose.msra.mxu0 0.0
  %700 = vmatprep.subr.mxu0 0.0
  %701 = vmatpush1.xpose.msra.mxu0 0.0
  %702 = vmatprep.subr.mxu0 0.0
  %703 = vmatpush1.xpose.msra.mxu0 0.0
  %704 = vmatprep.subr.mxu0 0.0
  %705 = vmatpush1.xpose.msra.mxu0 0.0
  %706 = vmatprep.subr.mxu0 0.0
  %707 = vmatpush1.xpose.msra.mxu0 0.0
  %708 = vmatprep.subr.mxu0 0.0
  %709 = vmatpush1.xpose.msra.mxu0 0.0
  %710 = vmatprep.subr.mxu0 0.0
  %711 = vmatpush1.xpose.msra.mxu0 0.0
  %712 = vmatprep.subr.mxu0 0.0
  %713 = vmatpush1.xpose.msra.mxu0 0.0
  %714 = vmatprep.subr.mxu0 0.0
  %715 = vmatpush1.xpose.msra.mxu0 0.0
  %716 = vmatprep.subr.mxu0 0.0
  %717 = vmatpush1.xpose.msra.mxu0 0.0
  %718 = vmatprep.subr.mxu0 0.0
  %719 = vmatpush1.xpose.msra.mxu0 0.0
  %720 = vmatprep.subr.mxu0 0.0
  %721 = vmatpush1.xpose.msra.mxu0 0.0
  %722 = vmatprep.subr.mxu0 0.0
  %723 = vmatpush1.xpose.msra.mxu0 0.0
  %724 = vmatprep.subr.mxu0 0.0
  %725 = vmatpush1.xpose.msra.mxu0 0.0
  %726 = vmatprep.subr.mxu0 0.0
  %727 = vmatpush1.xpose.msra.mxu0 0.0
  %728 = vmatprep.subr.mxu0 0.0
  %729 = vmatpush1.xpose.msra.mxu0 0.0
  %730 = vmatprep.subr.mxu0 0.0
  %731 = vmatpush1.xpose.msra.mxu0 0.0
  %732 = vmatprep.subr.mxu0 0.0
  %733 = vmatpush1.xpose.msra.mxu0 0.0
  %734 = vmatprep.mubr.f32.mxu0 0.0
  %735 = vmatmul.mubr.f32.gmra.mrb[0].mxu0 %v666
  %v736 = vpop.f32.mrb[0].mxu0
  %v737 = vadd.f32 %v244, %v736
  %v738 = vpop.f32.mrb[0].mxu0
  %739 = vdwg.mxu0
  %740 = vrot.lane.b32.xlu0 %v228, 96
  %v741 = vpop.permute.xlu0 %740
  %742 = vrot.lane.b32.xlu0 %v228, 32
  %v743 = vpop.permute.xlu0 %742
  %v744 = vsel %vm254, %v741, 0
  %v746 = vsel %vm254, %v743, 0
  %748 = vmatprep.subr.mxu0 0.0
  %749 = vmatpush1.xpose.msra.mxu0 %v746
  %750 = vmatprep.subr.mxu0 0.0
  %751 = vmatpush1.xpose.msra.mxu0 0.0
  %752 = vmatprep.subr.mxu0 0.0
  %753 = vmatpush1.xpose.msra.mxu0 0.0
  %754 = vmatprep.subr.mxu0 0.0
  %755 = vmatpush1.xpose.msra.mxu0 0.0
  %756 = vmatprep.subr.mxu0 0.0
  %757 = vmatpush1.xpose.msra.mxu0 0.0
  %758 = vmatprep.subr.mxu0 0.0
  %759 = vmatpush1.xpose.msra.mxu0 0.0
  %760 = vmatprep.subr.mxu0 0.0
  %761 = vmatpush1.xpose.msra.mxu0 0.0
  %762 = vmatprep.subr.mxu0 0.0
  %763 = vmatpush1.xpose.msra.mxu0 0.0
  %764 = vmatprep.subr.mxu0 0.0
  %765 = vmatpush1.xpose.msra.mxu0 0.0
  %766 = vmatprep.subr.mxu0 0.0
  %767 = vmatpush1.xpose.msra.mxu0 0.0
  %768 = vmatprep.subr.mxu0 0.0
  %769 = vmatpush1.xpose.msra.mxu0 0.0
  %770 = vmatprep.subr.mxu0 0.0
  %771 = vmatpush1.xpose.msra.mxu0 0.0
  %772 = vmatprep.subr.mxu0 0.0
  %773 = vmatpush1.xpose.msra.mxu0 0.0
  %774 = vmatprep.subr.mxu0 0.0
  %775 = vmatpush1.xpose.msra.mxu0 0.0
  %776 = vmatprep.subr.mxu0 0.0
  %777 = vmatpush1.xpose.msra.mxu0 0.0
  %778 = vmatprep.subr.mxu0 0.0
  %779 = vmatpush1.xpose.msra.mxu0 0.0
  %780 = vmatprep.subr.mxu0 0.0
  %781 = vmatpush1.xpose.msra.mxu0 0.0
  %782 = vmatprep.subr.mxu0 0.0
  %783 = vmatpush1.xpose.msra.mxu0 0.0
  %784 = vmatprep.subr.mxu0 0.0
  %785 = vmatpush1.xpose.msra.mxu0 0.0
  %786 = vmatprep.subr.mxu0 0.0
  %787 = vmatpush1.xpose.msra.mxu0 0.0
  %788 = vmatprep.subr.mxu0 0.0
  %789 = vmatpush1.xpose.msra.mxu0 0.0
  %790 = vmatprep.subr.mxu0 0.0
  %791 = vmatpush1.xpose.msra.mxu0 0.0
  %792 = vmatprep.subr.mxu0 0.0
  %793 = vmatpush1.xpose.msra.mxu0 0.0
  %794 = vmatprep.subr.mxu0 0.0
  %795 = vmatpush1.xpose.msra.mxu0 0.0
  %796 = vmatprep.subr.mxu0 0.0
  %797 = vmatpush1.xpose.msra.mxu0 0.0
  %798 = vmatprep.subr.mxu0 0.0
  %799 = vmatpush1.xpose.msra.mxu0 0.0
  %800 = vmatprep.subr.mxu0 0.0
  %801 = vmatpush1.xpose.msra.mxu0 0.0
  %802 = vmatprep.subr.mxu0 0.0
  %803 = vmatpush1.xpose.msra.mxu0 0.0
  %804 = vmatprep.subr.mxu0 0.0
  %805 = vmatpush1.xpose.msra.mxu0 0.0
  %806 = vmatprep.subr.mxu0 0.0
  %807 = vmatpush1.xpose.msra.mxu0 0.0
  %808 = vmatprep.subr.mxu0 0.0
  %809 = vmatpush1.xpose.msra.mxu0 0.0
  %810 = vmatprep.subr.mxu0 0.0
  %811 = vmatpush1.xpose.msra.mxu0 0.0
  %812 = vmatprep.mubr.f32.mxu0 0.0
  %813 = vmatmul.mubr.f32.gmra.mrb[0].mxu0 %v744
  %v814 = vpop.f32.mrb[0].mxu0
  %v815 = vadd.f32 %v248, %v814
  %v816 = vpop.f32.mrb[0].mxu0
  %817 = vdwg.mxu0
  %v818 = vsel %vm406, %v737, -inf
  %819 = vmax.xlane.f32.xlu0 %v818
  %v820 = vpop.xlane.xlu0 %819
  %v821 = vsel %vm406, %v815, -inf
  %822 = vmax.xlane.f32.xlu0 %v821
  %v823 = vpop.xlane.xlu0 %822
  %v824 = vsub.f32 %v737, %v820
  %v825 = vsub.f32 %v815, %v823
  %v826 = vmul.f32 %v824, 1.442695
  %v827 = vpow.pop %v826
  %v828 = vmul.f32 %v825, 1.442695
  %v829 = vpow.pop %v828
  %v830 = vsel %vm406, %v827, 0.0
  %831 = vadd.xlane.f32.xlu0 %v830
  %v832 = vpop.xlane.xlu0 %831
  %v833 = vsel %vm406, %v829, 0.0
  %834 = vadd.xlane.f32.xlu0 %v833
  %v835 = vpop.xlane.xlu0 %834
  %v836 = vrcp.pop %v832
  %v837 = vrcp.pop %v835
  %v838 = vmul.f32 %v827, %v836
  %v839 = vmul.f32 %v829, %v837
  %841 = vrot.lane.b32.xlu0 %v224, 96
  %v842 = vpop.permute.xlu0 %841
  %v845 = vsel %vm406, %v838, 0
  %847 = vmatprep.subr.mxu0 0.0
  %848 = vmatpush1.msra.mxu0 %v842
  %849 = vmatprep.subr.mxu0 0.0
  %850 = vmatpush1.msra.mxu0 0.0
  %851 = vmatprep.subr.mxu0 0.0
  %852 = vmatpush1.msra.mxu0 0.0
  %853 = vmatprep.subr.mxu0 0.0
  %854 = vmatpush1.msra.mxu0 0.0
  %855 = vmatprep.subr.mxu0 0.0
  %856 = vmatpush1.msra.mxu0 0.0
  %857 = vmatprep.subr.mxu0 0.0
  %858 = vmatpush1.msra.mxu0 0.0
  %859 = vmatprep.subr.mxu0 0.0
  %860 = vmatpush1.msra.mxu0 0.0
  %861 = vmatprep.subr.mxu0 0.0
  %862 = vmatpush1.msra.mxu0 0.0
  %863 = vmatprep.subr.mxu0 0.0
  %864 = vmatpush1.msra.mxu0 0.0
  %865 = vmatprep.subr.mxu0 0.0
  %866 = vmatpush1.msra.mxu0 0.0
  %867 = vmatprep.subr.mxu0 0.0
  %868 = vmatpush1.msra.mxu0 0.0
  %869 = vmatprep.subr.mxu0 0.0
  %870 = vmatpush1.msra.mxu0 0.0
  %871 = vmatprep.subr.mxu0 0.0
  %872 = vmatpush1.msra.mxu0 0.0
  %873 = vmatprep.subr.mxu0 0.0
  %874 = vmatpush1.msra.mxu0 0.0
  %875 = vmatprep.subr.mxu0 0.0
  %876 = vmatpush1.msra.mxu0 0.0
  %877 = vmatprep.subr.mxu0 0.0
  %878 = vmatpush1.msra.mxu0 0.0
  %879 = vmatprep.subr.mxu0 0.0
  %880 = vmatpush1.msra.mxu0 0.0
  %881 = vmatprep.subr.mxu0 0.0
  %882 = vmatpush1.msra.mxu0 0.0
  %883 = vmatprep.subr.mxu0 0.0
  %884 = vmatpush1.msra.mxu0 0.0
  %885 = vmatprep.subr.mxu0 0.0
  %886 = vmatpush1.msra.mxu0 0.0
  %887 = vmatprep.subr.mxu0 0.0
  %888 = vmatpush1.msra.mxu0 0.0
  %889 = vmatprep.subr.mxu0 0.0
  %890 = vmatpush1.msra.mxu0 0.0
  %891 = vmatprep.subr.mxu0 0.0
  %892 = vmatpush1.msra.mxu0 0.0
  %893 = vmatprep.subr.mxu0 0.0
  %894 = vmatpush1.msra.mxu0 0.0
  %895 = vmatprep.subr.mxu0 0.0
  %896 = vmatpush1.msra.mxu0 0.0
  %897 = vmatprep.subr.mxu0 0.0
  %898 = vmatpush1.msra.mxu0 0.0
  %899 = vmatprep.subr.mxu0 0.0
  %900 = vmatpush1.msra.mxu0 0.0
  %901 = vmatprep.subr.mxu0 0.0
  %902 = vmatpush1.msra.mxu0 0.0
  %903 = vmatprep.subr.mxu0 0.0
  %904 = vmatpush1.msra.mxu0 0.0
  %905 = vmatprep.subr.mxu0 0.0
  %906 = vmatpush1.msra.mxu0 0.0
  %907 = vmatprep.subr.mxu0 0.0
  %908 = vmatpush1.msra.mxu0 0.0
  %909 = vmatprep.subr.mxu0 0.0
  %910 = vmatpush1.msra.mxu0 0.0
  %911 = vmatprep.mubr.f32.mxu0 0.0
  %912 = vmatmul.mubr.f32.gmra.mrb[0].mxu0 %v845
  %v913 = vpop.f32.mrb[0].mxu0
  %v914 = vadd.f32 0.0, %v913
  %v915 = vpop.f32.mrb[0].mxu0
  %916 = vdwg.mxu0
  %918 = vrot.lane.b32.xlu0 %v230, 96
  %v919 = vpop.permute.xlu0 %918
  %v922 = vsel %vm406, %v839, 0
  %924 = vmatprep.subr.mxu0 0.0
  %925 = vmatpush1.msra.mxu0 %v919
  %926 = vmatprep.subr.mxu0 0.0
  %927 = vmatpush1.msra.mxu0 0.0
  %928 = vmatprep.subr.mxu0 0.0
  %929 = vmatpush1.msra.mxu0 0.0
  %930 = vmatprep.subr.mxu0 0.0
  %931 = vmatpush1.msra.mxu0 0.0
  %932 = vmatprep.subr.mxu0 0.0
  %933 = vmatpush1.msra.mxu0 0.0
  %934 = vmatprep.subr.mxu0 0.0
  %935 = vmatpush1.msra.mxu0 0.0
  %936 = vmatprep.subr.mxu0 0.0
  %937 = vmatpush1.msra.mxu0 0.0
  %938 = vmatprep.subr.mxu0 0.0
  %939 = vmatpush1.msra.mxu0 0.0
  %940 = vmatprep.subr.mxu0 0.0
  %941 = vmatpush1.msra.mxu0 0.0
  %942 = vmatprep.subr.mxu0 0.0
  %943 = vmatpush1.msra.mxu0 0.0
  %944 = vmatprep.subr.mxu0 0.0
  %945 = vmatpush1.msra.mxu0 0.0
  %946 = vmatprep.subr.mxu0 0.0
  %947 = vmatpush1.msra.mxu0 0.0
  %948 = vmatprep.subr.mxu0 0.0
  %949 = vmatpush1.msra.mxu0 0.0
  %950 = vmatprep.subr.mxu0 0.0
  %951 = vmatpush1.msra.mxu0 0.0
  %952 = vmatprep.subr.mxu0 0.0
  %953 = vmatpush1.msra.mxu0 0.0
  %954 = vmatprep.subr.mxu0 0.0
  %955 = vmatpush1.msra.mxu0 0.0
  %956 = vmatprep.subr.mxu0 0.0
  %957 = vmatpush1.msra.mxu0 0.0
  %958 = vmatprep.subr.mxu0 0.0
  %959 = vmatpush1.msra.mxu0 0.0
  %960 = vmatprep.subr.mxu0 0.0
  %961 = vmatpush1.msra.mxu0 0.0
  %962 = vmatprep.subr.mxu0 0.0
  %963 = vmatpush1.msra.mxu0 0.0
  %964 = vmatprep.subr.mxu0 0.0
  %965 = vmatpush1.msra.mxu0 0.0
  %966 = vmatprep.subr.mxu0 0.0
  %967 = vmatpush1.msra.mxu0 0.0
  %968 = vmatprep.subr.mxu0 0.0
  %969 = vmatpush1.msra.mxu0 0.0
  %970 = vmatprep.subr.mxu0 0.0
  %971 = vmatpush1.msra.mxu0 0.0
  %972 = vmatprep.subr.mxu0 0.0
  %973 = vmatpush1.msra.mxu0 0.0
  %974 = vmatprep.subr.mxu0 0.0
  %975 = vmatpush1.msra.mxu0 0.0
  %976 = vmatprep.subr.mxu0 0.0
  %977 = vmatpush1.msra.mxu0 0.0
  %978 = vmatprep.subr.mxu0 0.0
  %979 = vmatpush1.msra.mxu0 0.0
  %980 = vmatprep.subr.mxu0 0.0
  %981 = vmatpush1.msra.mxu0 0.0
  %982 = vmatprep.subr.mxu0 0.0
  %983 = vmatpush1.msra.mxu0 0.0
  %984 = vmatprep.subr.mxu0 0.0
  %985 = vmatpush1.msra.mxu0 0.0
  %986 = vmatprep.subr.mxu0 0.0
  %987 = vmatpush1.msra.mxu0 0.0
  %988 = vmatprep.mubr.f32.mxu0 0.0
  %989 = vmatmul.mubr.f32.gmra.mrb[0].mxu0 %v922
  %v990 = vpop.f32.mrb[0].mxu0
  %v991 = vadd.f32 0.0, %v990
  %v992 = vpop.f32.mrb[0].mxu0
  %993 = vdwg.mxu0
  %v994 = vld [vmem:[%s6 + $0x20] sm:$0xff]
  %v995 = vld [vmem:[%s6 + $0x28] sm:$0xff]
  %v996 = vld [vmem:[%s6 + $0x30] sm:$0xff]
  %v997 = vld [vmem:[%s6 + $0x38] sm:$0xff]
  %v999 = vsel %vm254, %v914, 0
  %v1002 = vsel %vm254, %v991, 0
  %1004 = vmatprep.subr.mxu0 0.0
  %1005 = vmatpush1.msra.mxu0 %v994
  %1006 = vmatprep.subr.mxu0 0.0
  %1007 = vmatpush1.msra.mxu0 %v995
  %1008 = vmatprep.subr.mxu0 0.0
  %1009 = vmatpush1.msra.mxu0 %v996
  %1010 = vmatprep.subr.mxu0 0.0
  %1011 = vmatpush1.msra.mxu0 %v997
  %1012 = vmatprep.subr.mxu0 0.0
  %1013 = vmatpush1.msra.mxu0 0.0
  %1014 = vmatprep.subr.mxu0 0.0
  %1015 = vmatpush1.msra.mxu0 0.0
  %1016 = vmatprep.subr.mxu0 0.0
  %1017 = vmatpush1.msra.mxu0 0.0
  %1018 = vmatprep.subr.mxu0 0.0
  %1019 = vmatpush1.msra.mxu0 0.0
  %1020 = vmatprep.subr.mxu0 0.0
  %1021 = vmatpush1.msra.mxu0 0.0
  %1022 = vmatprep.subr.mxu0 0.0
  %1023 = vmatpush1.msra.mxu0 0.0
  %1024 = vmatprep.subr.mxu0 0.0
  %1025 = vmatpush1.msra.mxu0 0.0
  %1026 = vmatprep.subr.mxu0 0.0
  %1027 = vmatpush1.msra.mxu0 0.0
  %1028 = vmatprep.subr.mxu0 0.0
  %1029 = vmatpush1.msra.mxu0 0.0
  %1030 = vmatprep.subr.mxu0 0.0
  %1031 = vmatpush1.msra.mxu0 0.0
  %1032 = vmatprep.subr.mxu0 0.0
  %1033 = vmatpush1.msra.mxu0 0.0
  %1034 = vmatprep.subr.mxu0 0.0
  %1035 = vmatpush1.msra.mxu0 0.0
  %1036 = vmatprep.subr.mxu0 0.0
  %1037 = vmatpush1.msra.mxu0 0.0
  %1038 = vmatprep.subr.mxu0 0.0
  %1039 = vmatpush1.msra.mxu0 0.0
  %1040 = vmatprep.subr.mxu0 0.0
  %1041 = vmatpush1.msra.mxu0 0.0
  %1042 = vmatprep.subr.mxu0 0.0
  %1043 = vmatpush1.msra.mxu0 0.0
  %1044 = vmatprep.subr.mxu0 0.0
  %1045 = vmatpush1.msra.mxu0 0.0
  %1046 = vmatprep.subr.mxu0 0.0
  %1047 = vmatpush1.msra.mxu0 0.0
  %1048 = vmatprep.subr.mxu0 0.0
  %1049 = vmatpush1.msra.mxu0 0.0
  %1050 = vmatprep.subr.mxu0 0.0
  %1051 = vmatpush1.msra.mxu0 0.0
  %1052 = vmatprep.subr.mxu0 0.0
  %1053 = vmatpush1.msra.mxu0 0.0
  %1054 = vmatprep.subr.mxu0 0.0
  %1055 = vmatpush1.msra.mxu0 0.0
  %1056 = vmatprep.subr.mxu0 0.0
  %1057 = vmatpush1.msra.mxu0 0.0
  %1058 = vmatprep.subr.mxu0 0.0
  %1059 = vmatpush1.msra.mxu0 0.0
  %1060 = vmatprep.subr.mxu0 0.0
  %1061 = vmatpush1.msra.mxu0 0.0
  %1062 = vmatprep.subr.mxu0 0.0
  %1063 = vmatpush1.msra.mxu0 0.0
  %1064 = vmatprep.subr.mxu0 0.0
  %1065 = vmatpush1.msra.mxu0 0.0
  %1066 = vmatprep.subr.mxu0 0.0
  %1067 = vmatpush1.msra.mxu0 0.0
  %1068 = vmatprep.mubr.f32.mxu0 0.0
  %1069 = vmatmul.mubr.f32.gmra.mrb[0].mxu0 %v999
  %v1070 = vpop.f32.mrb[0].mxu0
  %v1071 = vadd.f32 0.0, %v1070
  %v1072 = vpop.f32.mrb[0].mxu0
  %1073 = vmatprep.mubr.f32.mxu0 0.0
  %1074 = vmatmul.mubr.f32.gmra.mrb[0].mxu0 %v1002
  %v1075 = vpop.f32.mrb[0].mxu0
  %v1076 = vadd.f32 0.0, %v1075
  %v1077 = vpop.f32.mrb[0].mxu0
  %1078 = vdwg.mxu0
  %v1079 = vadd.f32 %v660, %v1071
  %v1080 = vadd.f32 %v661, %v1076
  %v1081 = vadd.f32 %v1079, %v113
  %v1082 = vadd.f32 %v1080, %v114
  %v1083 = vld [vmem:[%s8] sm:$0x1]
  %v1084 = vld [vmem:[%s9] sm:$0x1]
  %v1085 = vsel %vm71, %v1081, 0.0
  %1086 = vadd.xlane.f32.xlu0 %v1085
  %v1087 = vpop.xlane.xlu0 %1086
  %v1088 = vsel %vm71, %v1082, 0.0
  %1089 = vadd.xlane.f32.xlu0 %v1088
  %v1090 = vpop.xlane.xlu0 %1089
  %v1091 = vmul.f32 %v1087, %v78
  %v1092 = vmul.f32 %v1090, %v78
  %v1093 = vsub.f32 %v1081, %v1091
  %v1094 = vsub.f32 %v1082, %v1092
  %v1095 = vmul.f32 %v1093, %v1093
  %v1096 = vmul.f32 %v1094, %v1094
  %v1097 = vsel %vm71, %v1095, 0.0
  %1098 = vadd.xlane.f32.xlu0 %v1097
  %v1099 = vpop.xlane.xlu0 %1098
  %v1100 = vsel %vm71, %v1096, 0.0
  %1101 = vadd.xlane.f32.xlu0 %v1100
  %v1102 = vpop.xlane.xlu0 %1101
  %v1103 = vmul.f32 %v1099, %v78
  %v1104 = vmul.f32 %v1102, %v78
  %v1105 = vadd.f32 %v1103, 1e-12
  %v1106 = vadd.f32 %v1104, 1e-12
  %v1107 = vrsqrt.pop %v1105
  %v1108 = vrsqrt.pop %v1106
  %v1109 = vmul.f32 %v1093, %v1107
  %v1110 = vmul.f32 %v1094, %v1108
  %v1112 = vlaneseq
  %v1113 = vshrl.u32 %v1112, 7
  %v1114 = vsub.s32 0, %v1113
  %v1115 = vrot.slane %v1083, %v1114
  %v1117 = vmul.f32 %v1109, %v1115
  %v1118 = vmul.f32 %v1110, %v1115
  %v1120 = vlaneseq
  %v1121 = vshrl.u32 %v1120, 7
  %v1122 = vsub.s32 0, %v1121
  %v1123 = vrot.slane %v1084, %v1122
  %v1125 = vadd.f32 %v1117, %v1123
  %v1126 = vadd.f32 %v1118, %v1123
  %v1127 = vld [vmem:[%s10] sm:$0xff]
  %v1128 = vld [vmem:[%s10 + $0x8] sm:$0xff]
  %v1129 = vld [vmem:[%s10 + $0x10] sm:$0xff]
  %v1130 = vld [vmem:[%s10 + $0x18] sm:$0xff]
  %v1131 = vld [vmem:[%s10 + $0x20] sm:$0xff]
  %v1132 = vld [vmem:[%s10 + $0x28] sm:$0xff]
  %v1133 = vld [vmem:[%s10 + $0x30] sm:$0xff]
  %v1134 = vld [vmem:[%s10 + $0x38] sm:$0xff]
  %v1135 = vld [vmem:[%s11] sm:$0x1]
  %v1137 = vlaneseq
  %v1138 = vshrl.u32 %v1137, 7
  %v1139 = vsub.s32 0, %v1138
  %v1140 = vrot.slane %v1135, %v1139
  %v1143 = vsel %vm71, %v1125, 0
  %v1146 = vsel %vm71, %v1126, 0
  %1148 = vmatprep.subr.mxu0 0.0
  %1149 = vmatpush1.msra.mxu0 %v1127
  %1150 = vmatprep.subr.mxu0 0.0
  %1151 = vmatpush1.msra.mxu0 %v1128
  %1152 = vmatprep.subr.mxu0 0.0
  %1153 = vmatpush1.msra.mxu0 %v1129
  %1154 = vmatprep.subr.mxu0 0.0
  %1155 = vmatpush1.msra.mxu0 %v1130
  %1156 = vmatprep.subr.mxu0 0.0
  %1157 = vmatpush1.msra.mxu0 %v1131
  %1158 = vmatprep.subr.mxu0 0.0
  %1159 = vmatpush1.msra.mxu0 %v1132
  %1160 = vmatprep.subr.mxu0 0.0
  %1161 = vmatpush1.msra.mxu0 %v1133
  %1162 = vmatprep.subr.mxu0 0.0
  %1163 = vmatpush1.msra.mxu0 %v1134
  %1164 = vmatprep.subr.mxu0 0.0
  %1165 = vmatpush1.msra.mxu0 0.0
  %1166 = vmatprep.subr.mxu0 0.0
  %1167 = vmatpush1.msra.mxu0 0.0
  %1168 = vmatprep.subr.mxu0 0.0
  %1169 = vmatpush1.msra.mxu0 0.0
  %1170 = vmatprep.subr.mxu0 0.0
  %1171 = vmatpush1.msra.mxu0 0.0
  %1172 = vmatprep.subr.mxu0 0.0
  %1173 = vmatpush1.msra.mxu0 0.0
  %1174 = vmatprep.subr.mxu0 0.0
  %1175 = vmatpush1.msra.mxu0 0.0
  %1176 = vmatprep.subr.mxu0 0.0
  %1177 = vmatpush1.msra.mxu0 0.0
  %1178 = vmatprep.subr.mxu0 0.0
  %1179 = vmatpush1.msra.mxu0 0.0
  %1180 = vmatprep.subr.mxu0 0.0
  %1181 = vmatpush1.msra.mxu0 0.0
  %1182 = vmatprep.subr.mxu0 0.0
  %1183 = vmatpush1.msra.mxu0 0.0
  %1184 = vmatprep.subr.mxu0 0.0
  %1185 = vmatpush1.msra.mxu0 0.0
  %1186 = vmatprep.subr.mxu0 0.0
  %1187 = vmatpush1.msra.mxu0 0.0
  %1188 = vmatprep.subr.mxu0 0.0
  %1189 = vmatpush1.msra.mxu0 0.0
  %1190 = vmatprep.subr.mxu0 0.0
  %1191 = vmatpush1.msra.mxu0 0.0
  %1192 = vmatprep.subr.mxu0 0.0
  %1193 = vmatpush1.msra.mxu0 0.0
  %1194 = vmatprep.subr.mxu0 0.0
  %1195 = vmatpush1.msra.mxu0 0.0
  %1196 = vmatprep.subr.mxu0 0.0
  %1197 = vmatpush1.msra.mxu0 0.0
  %1198 = vmatprep.subr.mxu0 0.0
  %1199 = vmatpush1.msra.mxu0 0.0
  %1200 = vmatprep.subr.mxu0 0.0
  %1201 = vmatpush1.msra.mxu0 0.0
  %1202 = vmatprep.subr.mxu0 0.0
  %1203 = vmatpush1.msra.mxu0 0.0
  %1204 = vmatprep.subr.mxu0 0.0
  %1205 = vmatpush1.msra.mxu0 0.0
  %1206 = vmatprep.subr.mxu0 0.0
  %1207 = vmatpush1.msra.mxu0 0.0
  %1208 = vmatprep.subr.mxu0 0.0
  %1209 = vmatpush1.msra.mxu0 0.0
  %1210 = vmatprep.subr.mxu0 0.0
  %1211 = vmatpush1.msra.mxu0 0.0
  %1212 = vmatprep.mubr.f32.mxu0 0.0
  %1213 = vmatmul.mubr.f32.gmra.mrb[0].mxu0 %v1143
  %v1214 = vpop.f32.mrb[0].mxu0
  %v1215 = vadd.f32 %v1140, %v1214
  %v1216 = vpop.f32.mrb[0].mxu0
  %1217 = vmatprep.mubr.f32.mxu0 0.0
  %1218 = vmatmul.mubr.f32.gmra.mrb[0].mxu0 %v1146
  %v1219 = vpop.f32.mrb[0].mxu0
  %v1220 = vadd.f32 %v1140, %v1219
  %v1221 = vpop.f32.mrb[0].mxu0
  %1222 = vdwg.mxu0
  %v1223 = vmul.f32 %v1215, 0.5
  %v1224 = vmul.f32 %v1220, 0.5
  %v1225 = vmul.f32 %v1215, 0.044715
  %v1226 = vmul.f32 %v1220, 0.044715
  %v1227 = vmul.f32 %v1225, %v1215
  %v1228 = vmul.f32 %v1226, %v1220
  %v1229 = vmul.f32 %v1227, %v1215
  %v1230 = vmul.f32 %v1228, %v1220
  %v1231 = vadd.f32 %v1215, %v1229
  %v1232 = vadd.f32 %v1220, %v1230
  %v1233 = vmul.f32 %v1231, 0.7978846
  %v1234 = vmul.f32 %v1232, 0.7978846
  %v1235 = vtanh.pop %v1233
  %v1236 = vtanh.pop %v1234
  %v1237 = vadd.f32 %v1235, 1.0
  %v1238 = vadd.f32 %v1236, 1.0
  %v1239 = vmul.f32 %v1223, %v1237
  %v1240 = vmul.f32 %v1224, %v1238
  %v1241 = vld [vmem:[%s12] sm:$0xff]
  %v1242 = vld [vmem:[%s12 + $0x8] sm:$0xff]
  %v1243 = vld [vmem:[%s12 + $0x10] sm:$0xff]
  %v1244 = vld [vmem:[%s12 + $0x18] sm:$0xff]
  %v1245 = vld [vmem:[%s12 + $0x20] sm:$0xff]
  %v1246 = vld [vmem:[%s12 + $0x28] sm:$0xff]
  %v1247 = vld [vmem:[%s12 + $0x30] sm:$0xff]
  %v1248 = vld [vmem:[%s12 + $0x38] sm:$0xff]
  %v1249 = vld [vmem:[%s12 + $0x40] sm:$0xff]
  %v1250 = vld [vmem:[%s12 + $0x48] sm:$0xff]
  %v1251 = vld [vmem:[%s12 + $0x50] sm:$0xff]
  %v1252 = vld [vmem:[%s12 + $0x58] sm:$0xff]
  %v1253 = vld [vmem:[%s12 + $0x60] sm:$0xff]
  %v1254 = vld [vmem:[%s12 + $0x68] sm:$0xff]
  %v1255 = vld [vmem:[%s12 + $0x70] sm:$0xff]
  %v1256 = vld [vmem:[%s12 + $0x78] sm:$0xff]
  %v1257 = vld [vmem:[%s13] sm:$0x1]
  %v1259 = vlaneseq
  %v1260 = vshrl.u32 %v1259, 7
  %v1261 = vsub.s32 0, %v1260
  %v1262 = vrot.slane %v1257, %v1261
  %1264 = vmatprep.subr.mxu0 0.0
  %1265 = vmatpush1.msra.mxu0 %v1241
  %1266 = vmatprep.subr.mxu0 0.0
  %1267 = vmatpush1.msra.mxu0 %v1242
  %1268 = vmatprep.subr.mxu0 0.0
  %1269 = vmatpush1.msra.mxu0 %v1243
  %1270 = vmatprep.subr.mxu0 0.0
  %1271 = vmatpush1.msra.mxu0 %v1244
  %1272 = vmatprep.subr.mxu0 0.0
  %1273 = vmatpush1.msra.mxu0 %v1245
  %1274 = vmatprep.subr.mxu0 0.0
  %1275 = vmatpush1.msra.mxu0 %v1246
  %1276 = vmatprep.subr.mxu0 0.0
  %1277 = vmatpush1.msra.mxu0 %v1247
  %1278 = vmatprep.subr.mxu0 0.0
  %1279 = vmatpush1.msra.mxu0 %v1248
  %1280 = vmatprep.subr.mxu0 0.0
  %1281 = vmatpush1.msra.mxu0 %v1249
  %1282 = vmatprep.subr.mxu0 0.0
  %1283 = vmatpush1.msra.mxu0 %v1250
  %1284 = vmatprep.subr.mxu0 0.0
  %1285 = vmatpush1.msra.mxu0 %v1251
  %1286 = vmatprep.subr.mxu0 0.0
  %1287 = vmatpush1.msra.mxu0 %v1252
  %1288 = vmatprep.subr.mxu0 0.0
  %1289 = vmatpush1.msra.mxu0 %v1253
  %1290 = vmatprep.subr.mxu0 0.0
  %1291 = vmatpush1.msra.mxu0 %v1254
  %1292 = vmatprep.subr.mxu0 0.0
  %1293 = vmatpush1.msra.mxu0 %v1255
  %1294 = vmatprep.subr.mxu0 0.0
  %1295 = vmatpush1.msra.mxu0 %v1256
  %1296 = vmatprep.subr.mxu0 0.0
  %1297 = vmatpush1.msra.mxu0 0.0
  %1298 = vmatprep.subr.mxu0 0.0
  %1299 = vmatpush1.msra.mxu0 0.0
  %1300 = vmatprep.subr.mxu0 0.0
  %1301 = vmatpush1.msra.mxu0 0.0
  %1302 = vmatprep.subr.mxu0 0.0
  %1303 = vmatpush1.msra.mxu0 0.0
  %1304 = vmatprep.subr.mxu0 0.0
  %1305 = vmatpush1.msra.mxu0 0.0
  %1306 = vmatprep.subr.mxu0 0.0
  %1307 = vmatpush1.msra.mxu0 0.0
  %1308 = vmatprep.subr.mxu0 0.0
  %1309 = vmatpush1.msra.mxu0 0.0
  %1310 = vmatprep.subr.mxu0 0.0
  %1311 = vmatpush1.msra.mxu0 0.0
  %1312 = vmatprep.subr.mxu0 0.0
  %1313 = vmatpush1.msra.mxu0 0.0
  %1314 = vmatprep.subr.mxu0 0.0
  %1315 = vmatpush1.msra.mxu0 0.0
  %1316 = vmatprep.subr.mxu0 0.0
  %1317 = vmatpush1.msra.mxu0 0.0
  %1318 = vmatprep.subr.mxu0 0.0
  %1319 = vmatpush1.msra.mxu0 0.0
  %1320 = vmatprep.subr.mxu0 0.0
  %1321 = vmatpush1.msra.mxu0 0.0
  %1322 = vmatprep.subr.mxu0 0.0
  %1323 = vmatpush1.msra.mxu0 0.0
  %1324 = vmatprep.subr.mxu0 0.0
  %1325 = vmatpush1.msra.mxu0 0.0
  %1326 = vmatprep.subr.mxu0 0.0
  %1327 = vmatpush1.msra.mxu0 0.0
  %1328 = vmatprep.mubr.f32.mxu0 0.0
  %1329 = vmatmul.mubr.f32.gmra.mrb[0].mxu0 %v1239
  %v1330 = vpop.f32.mrb[0].mxu0
  %v1331 = vadd.f32 %v1262, %v1330
  %v1332 = vpop.f32.mrb[0].mxu0
  %1333 = vmatprep.mubr.f32.mxu0 0.0
  %1334 = vmatmul.mubr.f32.gmra.mrb[0].mxu0 %v1240
  %v1335 = vpop.f32.mrb[0].mxu0
  %v1336 = vadd.f32 %v1262, %v1335
  %v1337 = vpop.f32.mrb[0].mxu0
  %1338 = vdwg.mxu0
  %v1339 = vadd.f32 %v1331, %v1125
  %v1340 = vadd.f32 %v1336, %v1126
  %v1341 = vld [vmem:[%s14] sm:$0x1]
  %v1342 = vld [vmem:[%s15] sm:$0x1]
  %v1343 = vsel %vm71, %v1339, 0.0
  %1344 = vadd.xlane.f32.xlu0 %v1343
  %v1345 = vpop.xlane.xlu0 %1344
  %v1346 = vsel %vm71, %v1340, 0.0
  %1347 = vadd.xlane.f32.xlu0 %v1346
  %v1348 = vpop.xlane.xlu0 %1347
  %v1349 = vmul.f32 %v1345, %v78
  %v1350 = vmul.f32 %v1348, %v78
  %v1351 = vsub.f32 %v1339, %v1349
  %v1352 = vsub.f32 %v1340, %v1350
  %v1353 = vmul.f32 %v1351, %v1351
  %v1354 = vmul.f32 %v1352, %v1352
  %v1355 = vsel %vm71, %v1353, 0.0
  %1356 = vadd.xlane.f32.xlu0 %v1355
  %v1357 = vpop.xlane.xlu0 %1356
  %v1358 = vsel %vm71, %v1354, 0.0
  %1359 = vadd.xlane.f32.xlu0 %v1358
  %v1360 = vpop.xlane.xlu0 %1359
  %v1361 = vmul.f32 %v1357, %v78
  %v1362 = vmul.f32 %v1360, %v78
  %v1363 = vadd.f32 %v1361, 1e-12
  %v1364 = vadd.f32 %v1362, 1e-12
  %v1365 = vrsqrt.pop %v1363
  %v1366 = vrsqrt.pop %v1364
  %v1367 = vmul.f32 %v1351, %v1365
  %v1368 = vmul.f32 %v1352, %v1366
  %v1370 = vlaneseq
  %v1371 = vshrl.u32 %v1370, 7
  %v1372 = vsub.s32 0, %v1371
  %v1373 = vrot.slane %v1341, %v1372
  %v1375 = vmul.f32 %v1367, %v1373
  %v1376 = vmul.f32 %v1368, %v1373
  %v1378 = vlaneseq
  %v1379 = vshrl.u32 %v1378, 7
  %v1380 = vsub.s32 0, %v1379
  %v1381 = vrot.slane %v1342, %v1380
  %v1383 = vadd.f32 %v1375, %v1381
  %v1384 = vadd.f32 %v1376, %v1381
  %s1385 = scalar_lea.vmem %s4, 128
  %v1386 = vld [vmem:[%s1385] sm:$0xff]
  %v1387 = vld [vmem:[%s1385 + $0x8] sm:$0xff]
  %v1388 = vld [vmem:[%s1385 + $0x10] sm:$0xff]
  %v1389 = vld [vmem:[%s1385 + $0x18] sm:$0xff]
  %v1390 = vld [vmem:[%s1385 + $0x20] sm:$0xff]
  %v1391 = vld [vmem:[%s1385 + $0x28] sm:$0xff]
  %v1392 = vld [vmem:[%s1385 + $0x30] sm:$0xff]
  %v1393 = vld [vmem:[%s1385 + $0x38] sm:$0xff]
  %v1394 = vld [vmem:[%s1385 + $0x40] sm:$0xff]
  %v1395 = vld [vmem:[%s1385 + $0x48] sm:$0xff]
  %v1396 = vld [vmem:[%s1385 + $0x50] sm:$0xff]
  %v1397 = vld [vmem:[%s1385 + $0x58] sm:$0xff]
  %v1398 = vld [vmem:[%s1385 + $0x60] sm:$0xff]
  %v1399 = vld [vmem:[%s1385 + $0x68] sm:$0xff]
  %v1400 = vld [vmem:[%s1385 + $0x70] sm:$0xff]
  %v1401 = vld [vmem:[%s1385 + $0x78] sm:$0xff]
  %s1402 = scalar_lea.vmem %s5, 2
  %v1403 = vld [vmem:[%s1402] sm:$0x3]
  %v1405 = vlaneseq
  %v1406 = vshrl.u32 %v1405, 7
  %v1407 = vsub.s32 0, %v1406
  %v1408 = vrot.slane %v1403, %v1407
  %v1409 = vlaneseq
  %v1410 = vshrl.u32 %v1409, 7
  %v1411 = vsub.s32 1, %v1410
  %v1412 = vrot.slane %v1403, %v1411
  %v1416 = vsel %vm71, %v1383, 0
  %v1419 = vsel %vm71, %v1384, 0
  %1421 = vmatprep.subr.mxu0 %v1387
  %1422 = vmatpush1.msra.mxu0 %v1386
  %1423 = vmatprep.subr.mxu0 %v1389
  %1424 = vmatpush1.msra.mxu0 %v1388
  %1425 = vmatprep.subr.mxu0 %v1391
  %1426 = vmatpush1.msra.mxu0 %v1390
  %1427 = vmatprep.subr.mxu0 %v1393
  %1428 = vmatpush1.msra.mxu0 %v1392
  %1429 = vmatprep.subr.mxu0 %v1395
  %1430 = vmatpush1.msra.mxu0 %v1394
  %1431 = vmatprep.subr.mxu0 %v1397
  %1432 = vmatpush1.msra.mxu0 %v1396
  %1433 = vmatprep.subr.mxu0 %v1399
  %1434 = vmatpush1.msra.mxu0 %v1398
  %1435 = vmatprep.subr.mxu0 %v1401
  %1436 = vmatpush1.msra.mxu0 %v1400
  %1437 = vmatprep.subr.mxu0 0.0
  %1438 = vmatpush1.msra.mxu0 0.0
  %1439 = vmatprep.subr.mxu0 0.0
  %1440 = vmatpush1.msra.mxu0 0.0
  %1441 = vmatprep.subr.mxu0 0.0
  %1442 = vmatpush1.msra.mxu0 0.0
  %1443 = vmatprep.subr.mxu0 0.0
  %1444 = vmatpush1.msra.mxu0 0.0
  %1445 = vmatprep.subr.mxu0 0.0
  %1446 = vmatpush1.msra.mxu0 0.0
  %1447 = vmatprep.subr.mxu0 0.0
  %1448 = vmatpush1.msra.mxu0 0.0
  %1449 = vmatprep.subr.mxu0 0.0
  %1450 = vmatpush1.msra.mxu0 0.0
  %1451 = vmatprep.subr.mxu0 0.0
  %1452 = vmatpush1.msra.mxu0 0.0
  %1453 = vmatprep.subr.mxu0 0.0
  %1454 = vmatpush1.msra.mxu0 0.0
  %1455 = vmatprep.subr.mxu0 0.0
  %1456 = vmatpush1.msra.mxu0 0.0
  %1457 = vmatprep.subr.mxu0 0.0
  %1458 = vmatpush1.msra.mxu0 0.0
  %1459 = vmatprep.subr.mxu0 0.0
  %1460 = vmatpush1.msra.mxu0 0.0
  %1461 = vmatprep.subr.mxu0 0.0
  %1462 = vmatpush1.msra.mxu0 0.0
  %1463 = vmatprep.subr.mxu0 0.0
  %1464 = vmatpush1.msra.mxu0 0.0
  %1465 = vmatprep.subr.mxu0 0.0
  %1466 = vmatpush1.msra.mxu0 0.0
  %1467 = vmatprep.subr.mxu0 0.0
  %1468 = vmatpush1.msra.mxu0 0.0
  %1469 = vmatprep.subr.mxu0 0.0
  %1470 = vmatpush1.msra.mxu0 0.0
  %1471 = vmatprep.subr.mxu0 0.0
  %1472 = vmatpush1.msra.mxu0 0.0
  %1473 = vmatprep.subr.mxu0 0.0
  %1474 = vmatpush1.msra.mxu0 0.0
  %1475 = vmatprep.subr.mxu0 0.0
  %1476 = vmatpush1.msra.mxu0 0.0
  %1477 = vmatprep.subr.mxu0 0.0
  %1478 = vmatpush1.msra.mxu0 0.0
  %1479 = vmatprep.subr.mxu0 0.0
  %1480 = vmatpush1.msra.mxu0 0.0
  %1481 = vmatprep.subr.mxu0 0.0
  %1482 = vmatpush1.msra.mxu0 0.0
  %1483 = vmatprep.subr.mxu0 0.0
  %1484 = vmatpush1.msra.mxu0 0.0
  %1485 = vmatprep.mubr.f32.mxu0 0.0
  %1486 = vmatmul.mubr.f32.gmra.mrb[0].mxu0 %v1416
  %v1487 = vpop.f32.mrb[0].mxu0
  %v1488 = vadd.f32 %v1408, %v1487
  %v1489 = vpop.f32.mrb[0].mxu0
  %v1490 = vadd.f32 %v1412, %v1489
  %1491 = vmatprep.mubr.f32.mxu0 0.0
  %1492 = vmatmul.mubr.f32.gmra.mrb[0].mxu0 %v1419
  %v1493 = vpop.f32.mrb[0].mxu0
  %v1494 = vadd.f32 %v1408, %v1493
  %v1495 = vpop.f32.mrb[0].mxu0
  %v1496 = vadd.f32 %v1412, %v1495
  %1497 = vdwg.mxu0
  %s1498 = scalar_lea.vmem %s7, 1
  %v1499 = vld [vmem:[%s1498] sm:$0x1]
  %v1501 = vlaneseq
  %v1502 = vshrl.u32 %v1501, 7
  %v1503 = vsub.s32 0, %v1502
  %v1504 = vrot.slane %v1499, %v1503
  %1507 = vrot.lane.b32.xlu0 %v1488, 64
  %v1508 = vpop.permute.xlu0 %1507
  %v1509 = vsel %vm254, %v1488, 0
  %v1511 = vsel %vm254, %v1508, 0
  %1513 = vmatprep.subr.mxu0 0.0
  %1514 = vmatpush1.xpose.msra.mxu0 %v1511
  %1515 = vmatprep.subr.mxu0 0.0
  %1516 = vmatpush1.xpose.msra.mxu0 0.0
  %1517 = vmatprep.subr.mxu0 0.0
  %1518 = vmatpush1.xpose.msra.mxu0 0.0
  %1519 = vmatprep.subr.mxu0 0.0
  %1520 = vmatpush1.xpose.msra.mxu0 0.0
  %1521 = vmatprep.subr.mxu0 0.0
  %1522 = vmatpush1.xpose.msra.mxu0 0.0
  %1523 = vmatprep.subr.mxu0 0.0
  %1524 = vmatpush1.xpose.msra.mxu0 0.0
  %1525 = vmatprep.subr.mxu0 0.0
  %1526 = vmatpush1.xpose.msra.mxu0 0.0
  %1527 = vmatprep.subr.mxu0 0.0
  %1528 = vmatpush1.xpose.msra.mxu0 0.0
  %1529 = vmatprep.subr.mxu0 0.0
  %1530 = vmatpush1.xpose.msra.mxu0 0.0
  %1531 = vmatprep.subr.mxu0 0.0
  %1532 = vmatpush1.xpose.msra.mxu0 0.0
  %1533 = vmatprep.subr.mxu0 0.0
  %1534 = vmatpush1.xpose.msra.mxu0 0.0
  %1535 = vmatprep.subr.mxu0 0.0
  %1536 = vmatpush1.xpose.msra.mxu0 0.0
  %1537 = vmatprep.subr.mxu0 0.0
  %1538 = vmatpush1.xpose.msra.mxu0 0.0
  %1539 = vmatprep.subr.mxu0 0.0
  %1540 = vmatpush1.xpose.msra.mxu0 0.0
  %1541 = vmatprep.subr.mxu0 0.0
  %1542 = vmatpush1.xpose.msra.mxu0 0.0
  %1543 = vmatprep.subr.mxu0 0.0
  %1544 = vmatpush1.xpose.msra.mxu0 0.0
  %1545 = vmatprep.subr.mxu0 0.0
  %1546 = vmatpush1.xpose.msra.mxu0 0.0
  %1547 = vmatprep.subr.mxu0 0.0
  %1548 = vmatpush1.xpose.msra.mxu0 0.0
  %1549 = vmatprep.subr.mxu0 0.0
  %1550 = vmatpush1.xpose.msra.mxu0 0.0
  %1551 = vmatprep.subr.mxu0 0.0
  %1552 = vmatpush1.xpose.msra.mxu0 0.0
  %1553 = vmatprep.subr.mxu0 0.0
  %1554 = vmatpush1.xpose.msra.mxu0 0.0
  %1555 = vmatprep.subr.mxu0 0.0
  %1556 = vmatpush1.xpose.msra.mxu0 0.0
  %1557 = vmatprep.subr.mxu0 0.0
  %1558 = vmatpush1.xpose.msra.mxu0 0.0
  %1559 = vmatprep.subr.mxu0 0.0
  %1560 = vmatpush1.xpose.msra.mxu0 0.0
  %1561 = vmatprep.subr.mxu0 0.0
  %1562 = vmatpush1.xpose.msra.mxu0 0.0
  %1563 = vmatprep.subr.mxu0 0.0
  %1564 = vmatpush1.xpose.msra.mxu0 0.0
  %1565 = vmatprep.subr.mxu0 0.0
  %1566 = vmatpush1.xpose.msra.mxu0 0.0
  %1567 = vmatprep.subr.mxu0 0.0
  %1568 = vmatpush1.xpose.msra.mxu0 0.0
  %1569 = vmatprep.subr.mxu0 0.0
  %1570 = vmatpush1.xpose.msra.mxu0 0.0
  %1571 = vmatprep.subr.mxu0 0.0
  %1572 = vmatpush1.xpose.msra.mxu0 0.0
  %1573 = vmatprep.subr.mxu0 0.0
  %1574 = vmatpush1.xpose.msra.mxu0 0.0
  %1575 = vmatprep.subr.mxu0 0.0
  %1576 = vmatpush1.xpose.msra.mxu0 0.0
  %1577 = vmatprep.mubr.f32.mxu0 0.0
  %1578 = vmatmul.mubr.f32.gmra.mrb[0].mxu0 %v1509
  %v1579 = vpop.f32.mrb[0].mxu0
  %v1580 = vadd.f32 %v244, %v1579
  %v1581 = vpop.f32.mrb[0].mxu0
  %1582 = vdwg.mxu0
  %1584 = vrot.lane.b32.xlu0 %v1494, 64
  %v1585 = vpop.permute.xlu0 %1584
  %v1586 = vsel %vm254, %v1494, 0
  %v1588 = vsel %vm254, %v1585, 0
  %1590 = vmatprep.subr.mxu0 0.0
  %1591 = vmatpush1.xpose.msra.mxu0 %v1588
  %1592 = vmatprep.subr.mxu0 0.0
  %1593 = vmatpush1.xpose.msra.mxu0 0.0
  %1594 = vmatprep.subr.mxu0 0.0
  %1595 = vmatpush1.xpose.msra.mxu0 0.0
  %1596 = vmatprep.subr.mxu0 0.0
  %1597 = vmatpush1.xpose.msra.mxu0 0.0
  %1598 = vmatprep.subr.mxu0 0.0
  %1599 = vmatpush1.xpose.msra.mxu0 0.0
  %1600 = vmatprep.subr.mxu0 0.0
  %1601 = vmatpush1.xpose.msra.mxu0 0.0
  %1602 = vmatprep.subr.mxu0 0.0
  %1603 = vmatpush1.xpose.msra.mxu0 0.0
  %1604 = vmatprep.subr.mxu0 0.0
  %1605 = vmatpush1.xpose.msra.mxu0 0.0
  %1606 = vmatprep.subr.mxu0 0.0
  %1607 = vmatpush1.xpose.msra.mxu0 0.0
  %1608 = vmatprep.subr.mxu0 0.0
  %1609 = vmatpush1.xpose.msra.mxu0 0.0
  %1610 = vmatprep.subr.mxu0 0.0
  %1611 = vmatpush1.xpose.msra.mxu0 0.0
  %1612 = vmatprep.subr.mxu0 0.0
  %1613 = vmatpush1.xpose.msra.mxu0 0.0
  %1614 = vmatprep.subr.mxu0 0.0
  %1615 = vmatpush1.xpose.msra.mxu0 0.0
  %1616 = vmatprep.subr.mxu0 0.0
  %1617 = vmatpush1.xpose.msra.mxu0 0.0
  %1618 = vmatprep.subr.mxu0 0.0
  %1619 = vmatpush1.xpose.msra.mxu0 0.0
  %1620 = vmatprep.subr.mxu0 0.0
  %1621 = vmatpush1.xpose.msra.mxu0 0.0
  %1622 = vmatprep.subr.mxu0 0.0
  %1623 = vmatpush1.xpose.msra.mxu0 0.0
  %1624 = vmatprep.subr.mxu0 0.0
  %1625 = vmatpush1.xpose.msra.mxu0 0.0
  %1626 = vmatprep.subr.mxu0 0.0
  %1627 = vmatpush1.xpose.msra.mxu0 0.0
  %1628 = vmatprep.subr.mxu0 0.0
  %1629 = vmatpush1.xpose.msra.mxu0 0.0
  %1630 = vmatprep.subr.mxu0 0.0
  %1631 = vmatpush1.xpose.msra.mxu0 0.0
  %1632 = vmatprep.subr.mxu0 0.0
  %1633 = vmatpush1.xpose.msra.mxu0 0.0
  %1634 = vmatprep.subr.mxu0 0.0
  %1635 = vmatpush1.xpose.msra.mxu0 0.0
  %1636 = vmatprep.subr.mxu0 0.0
  %1637 = vmatpush1.xpose.msra.mxu0 0.0
  %1638 = vmatprep.subr.mxu0 0.0
  %1639 = vmatpush1.xpose.msra.mxu0 0.0
  %1640 = vmatprep.subr.mxu0 0.0
  %1641 = vmatpush1.xpose.msra.mxu0 0.0
  %1642 = vmatprep.subr.mxu0 0.0
  %1643 = vmatpush1.xpose.msra.mxu0 0.0
  %1644 = vmatprep.subr.mxu0 0.0
  %1645 = vmatpush1.xpose.msra.mxu0 0.0
  %1646 = vmatprep.subr.mxu0 0.0
  %1647 = vmatpush1.xpose.msra.mxu0 0.0
  %1648 = vmatprep.subr.mxu0 0.0
  %1649 = vmatpush1.xpose.msra.mxu0 0.0
  %1650 = vmatprep.subr.mxu0 0.0
  %1651 = vmatpush1.xpose.msra.mxu0 0.0
  %1652 = vmatprep.subr.mxu0 0.0
  %1653 = vmatpush1.xpose.msra.mxu0 0.0
  %1654 = vmatprep.mubr.f32.mxu0 0.0
  %1655 = vmatmul.mubr.f32.gmra.mrb[0].mxu0 %v1586
  %v1656 = vpop.f32.mrb[0].mxu0
  %v1657 = vadd.f32 %v248, %v1656
  %v1658 = vpop.f32.mrb[0].mxu0
  %1659 = vdwg.mxu0
  %v1660 = vsel %vm406, %v1580, -inf
  %1661 = vmax.xlane.f32.xlu0 %v1660
  %v1662 = vpop.xlane.xlu0 %1661
  %v1663 = vsel %vm406, %v1657, -inf
  %1664 = vmax.xlane.f32.xlu0 %v1663
  %v1665 = vpop.xlane.xlu0 %1664
  %v1666 = vsub.f32 %v1580, %v1662
  %v1667 = vsub.f32 %v1657, %v1665
  %v1668 = vmul.f32 %v1666, 1.442695
  %v1669 = vpow.pop %v1668
  %v1670 = vmul.f32 %v1667, 1.442695
  %v1671 = vpow.pop %v1670
  %v1672 = vsel %vm406, %v1669, 0.0
  %1673 = vadd.xlane.f32.xlu0 %v1672
  %v1674 = vpop.xlane.xlu0 %1673
  %v1675 = vsel %vm406, %v1671, 0.0
  %1676 = vadd.xlane.f32.xlu0 %v1675
  %v1677 = vpop.xlane.xlu0 %1676
  %v1678 = vrcp.pop %v1674
  %v1679 = vrcp.pop %v1677
  %v1680 = vmul.f32 %v1669, %v1678
  %v1681 = vmul.f32 %v1671, %v1679
  %v1683 = vsel %vm406, %v1680, 0
  %1685 = vmatprep.subr.mxu0 0.0
  %1686 = vmatpush1.msra.mxu0 %v1490
  %1687 = vmatprep.subr.mxu0 0.0
  %1688 = vmatpush1.msra.mxu0 0.0
  %1689 = vmatprep.subr.mxu0 0.0
  %1690 = vmatpush1.msra.mxu0 0.0
  %1691 = vmatprep.subr.mxu0 0.0
  %1692 = vmatpush1.msra.mxu0 0.0
  %1693 = vmatprep.subr.mxu0 0.0
  %1694 = vmatpush1.msra.mxu0 0.0
  %1695 = vmatprep.subr.mxu0 0.0
  %1696 = vmatpush1.msra.mxu0 0.0
  %1697 = vmatprep.subr.mxu0 0.0
  %1698 = vmatpush1.msra.mxu0 0.0
  %1699 = vmatprep.subr.mxu0 0.0
  %1700 = vmatpush1.msra.mxu0 0.0
  %1701 = vmatprep.subr.mxu0 0.0
  %1702 = vmatpush1.msra.mxu0 0.0
  %1703 = vmatprep.subr.mxu0 0.0
  %1704 = vmatpush1.msra.mxu0 0.0
  %1705 = vmatprep.subr.mxu0 0.0
  %1706 = vmatpush1.msra.mxu0 0.0
  %1707 = vmatprep.subr.mxu0 0.0
  %1708 = vmatpush1.msra.mxu0 0.0
  %1709 = vmatprep.subr.mxu0 0.0
  %1710 = vmatpush1.msra.mxu0 0.0
  %1711 = vmatprep.subr.mxu0 0.0
  %1712 = vmatpush1.msra.mxu0 0.0
  %1713 = vmatprep.subr.mxu0 0.0
  %1714 = vmatpush1.msra.mxu0 0.0
  %1715 = vmatprep.subr.mxu0 0.0
  %1716 = vmatpush1.msra.mxu0 0.0
  %1717 = vmatprep.subr.mxu0 0.0
  %1718 = vmatpush1.msra.mxu0 0.0
  %1719 = vmatprep.subr.mxu0 0.0
  %1720 = vmatpush1.msra.mxu0 0.0
  %1721 = vmatprep.subr.mxu0 0.0
  %1722 = vmatpush1.msra.mxu0 0.0
  %1723 = vmatprep.subr.mxu0 0.0
  %1724 = vmatpush1.msra.mxu0 0.0
  %1725 = vmatprep.subr.mxu0 0.0
  %1726 = vmatpush1.msra.mxu0 0.0
  %1727 = vmatprep.subr.mxu0 0.0
  %1728 = vmatpush1.msra.mxu0 0.0
  %1729 = vmatprep.subr.mxu0 0.0
  %1730 = vmatpush1.msra.mxu0 0.0
  %1731 = vmatprep.subr.mxu0 0.0
  %1732 = vmatpush1.msra.mxu0 0.0
  %1733 = vmatprep.subr.mxu0 0.0
  %1734 = vmatpush1.msra.mxu0 0.0
  %1735 = vmatprep.subr.mxu0 0.0
  %1736 = vmatpush1.msra.mxu0 0.0
  %1737 = vmatprep.subr.mxu0 0.0
  %1738 = vmatpush1.msra.mxu0 0.0
  %1739 = vmatprep.subr.mxu0 0.0
  %1740 = vmatpush1.msra.mxu0 0.0
  %1741 = vmatprep.subr.mxu0 0.0
  %1742 = vmatpush1.msra.mxu0 0.0
  %1743 = vmatprep.subr.mxu0 0.0
  %1744 = vmatpush1.msra.mxu0 0.0
  %1745 = vmatprep.subr.mxu0 0.0
  %1746 = vmatpush1.msra.mxu0 0.0
  %1747 = vmatprep.subr.mxu0 0.0
  %1748 = vmatpush1.msra.mxu0 0.0
  %1749 = vmatprep.mubr.f32.mxu0 0.0
  %1750 = vmatmul.mubr.f32.gmra.mrb[0].mxu0 %v1683
  %v1751 = vpop.f32.mrb[0].mxu0
  %v1752 = vadd.f32 0.0, %v1751
  %v1753 = vpop.f32.mrb[0].mxu0
  %1754 = vdwg.mxu0
  %v1756 = vsel %vm406, %v1681, 0
  %1758 = vmatprep.subr.mxu0 0.0
  %1759 = vmatpush1.msra.mxu0 %v1496
  %1760 = vmatprep.subr.mxu0 0.0
  %1761 = vmatpush1.msra.mxu0 0.0
  %1762 = vmatprep.subr.mxu0 0.0
  %1763 = vmatpush1.msra.mxu0 0.0
  %1764 = vmatprep.subr.mxu0 0.0
  %1765 = vmatpush1.msra.mxu0 0.0
  %1766 = vmatprep.subr.mxu0 0.0
  %1767 = vmatpush1.msra.mxu0 0.0
  %1768 = vmatprep.subr.mxu0 0.0
  %1769 = vmatpush1.msra.mxu0 0.0
  %1770 = vmatprep.subr.mxu0 0.0
  %1771 = vmatpush1.msra.mxu0 0.0
  %1772 = vmatprep.subr.mxu0 0.0
  %1773 = vmatpush1.msra.mxu0 0.0
  %1774 = vmatprep.subr.mxu0 0.0
  %1775 = vmatpush1.msra.mxu0 0.0
  %1776 = vmatprep.subr.mxu0 0.0
  %1777 = vmatpush1.msra.mxu0 0.0
  %1778 = vmatprep.subr.mxu0 0.0
  %1779 = vmatpush1.msra.mxu0 0.0
  %1780 = vmatprep.subr.mxu0 0.0
  %1781 = vmatpush1.msra.mxu0 0.0
  %1782 = vmatprep.subr.mxu0 0.0
  %1783 = vmatpush1.msra.mxu0 0.0
  %1784 = vmatprep.subr.mxu0 0.0
  %1785 = vmatpush1.msra.mxu0 0.0
  %1786 = vmatprep.subr.mxu0 0.0
  %1787 = vmatpush1.msra.mxu0 0.0
  %1788 = vmatprep.subr.mxu0 0.0
  %1789 = vmatpush1.msra.mxu0 0.0
  %1790 = vmatprep.subr.mxu0 0.0
  %1791 = vmatpush1.msra.mxu0 0.0
  %1792 = vmatprep.subr.mxu0 0.0
  %1793 = vmatpush1.msra.mxu0 0.0
  %1794 = vmatprep.subr.mxu0 0.0
  %1795 = vmatpush1.msra.mxu0 0.0
  %1796 = vmatprep.subr.mxu0 0.0
  %1797 = vmatpush1.msra.mxu0 0.0
  %1798 = vmatprep.subr.mxu0 0.0
  %1799 = vmatpush1.msra.mxu0 0.0
  %1800 = vmatprep.subr.mxu0 0.0
  %1801 = vmatpush1.msra.mxu0 0.0
  %1802 = vmatprep.subr.mxu0 0.0
  %1803 = vmatpush1.msra.mxu0 0.0
  %1804 = vmatprep.subr.mxu0 0.0
  %1805 = vmatpush1.msra.mxu0 0.0
  %1806 = vmatprep.subr.mxu0 0.0
  %1807 = vmatpush1.msra.mxu0 0.0
  %1808 = vmatprep.subr.mxu0 0.0
  %1809 = vmatpush1.msra.mxu0 0.0
  %1810 = vmatprep.subr.mxu0 0.0
  %1811 = vmatpush1.msra.mxu0 0.0
  %1812 = vmatprep.subr.mxu0 0.0
  %1813 = vmatpush1.msra.mxu0 0.0
  %1814 = vmatprep.subr.mxu0 0.0
  %1815 = vmatpush1.msra.mxu0 0.0
  %1816 = vmatprep.subr.mxu0 0.0
  %1817 = vmatpush1.msra.mxu0 0.0
  %1818 = vmatprep.subr.mxu0 0.0
  %1819 = vmatpush1.msra.mxu0 0.0
  %1820 = vmatprep.subr.mxu0 0.0
  %1821 = vmatpush1.msra.mxu0 0.0
  %1822 = vmatprep.mubr.f32.mxu0 0.0
  %1823 = vmatmul.mubr.f32.gmra.mrb[0].mxu0 %v1756
  %v1824 = vpop.f32.mrb[0].mxu0
  %v1825 = vadd.f32 0.0, %v1824
  %v1826 = vpop.f32.mrb[0].mxu0
  %1827 = vdwg.mxu0
  %s1828 = scalar_lea.vmem %s6, 64
  %v1829 = vld [vmem:[%s1828] sm:$0xff]
  %v1830 = vld [vmem:[%s1828 + $0x8] sm:$0xff]
  %v1831 = vld [vmem:[%s1828 + $0x10] sm:$0xff]
  %v1832 = vld [vmem:[%s1828 + $0x18] sm:$0xff]
  %v1834 = vsel %vm254, %v1752, 0
  %v1837 = vsel %vm254, %v1825, 0
  %1839 = vmatprep.subr.mxu0 0.0
  %1840 = vmatpush1.msra.mxu0 %v1829
  %1841 = vmatprep.subr.mxu0 0.0
  %1842 = vmatpush1.msra.mxu0 %v1830
  %1843 = vmatprep.subr.mxu0 0.0
  %1844 = vmatpush1.msra.mxu0 %v1831
  %1845 = vmatprep.subr.mxu0 0.0
  %1846 = vmatpush1.msra.mxu0 %v1832
  %1847 = vmatprep.subr.mxu0 0.0
  %1848 = vmatpush1.msra.mxu0 0.0
  %1849 = vmatprep.subr.mxu0 0.0
  %1850 = vmatpush1.msra.mxu0 0.0
  %1851 = vmatprep.subr.mxu0 0.0
  %1852 = vmatpush1.msra.mxu0 0.0
  %1853 = vmatprep.subr.mxu0 0.0
  %1854 = vmatpush1.msra.mxu0 0.0
  %1855 = vmatprep.subr.mxu0 0.0
  %1856 = vmatpush1.msra.mxu0 0.0
  %1857 = vmatprep.subr.mxu0 0.0
  %1858 = vmatpush1.msra.mxu0 0.0
  %1859 = vmatprep.subr.mxu0 0.0
  %1860 = vmatpush1.msra.mxu0 0.0
  %1861 = vmatprep.subr.mxu0 0.0
  %1862 = vmatpush1.msra.mxu0 0.0
  %1863 = vmatprep.subr.mxu0 0.0
  %1864 = vmatpush1.msra.mxu0 0.0
  %1865 = vmatprep.subr.mxu0 0.0
  %1866 = vmatpush1.msra.mxu0 0.0
  %1867 = vmatprep.subr.mxu0 0.0
  %1868 = vmatpush1.msra.mxu0 0.0
  %1869 = vmatprep.subr.mxu0 0.0
  %1870 = vmatpush1.msra.mxu0 0.0
  %1871 = vmatprep.subr.mxu0 0.0
  %1872 = vmatpush1.msra.mxu0 0.0
  %1873 = vmatprep.subr.mxu0 0.0
  %1874 = vmatpush1.msra.mxu0 0.0
  %1875 = vmatprep.subr.mxu0 0.0
  %1876 = vmatpush1.msra.mxu0 0.0
  %1877 = vmatprep.subr.mxu0 0.0
  %1878 = vmatpush1.msra.mxu0 0.0
  %1879 = vmatprep.subr.mxu0 0.0
  %1880 = vmatpush1.msra.mxu0 0.0
  %1881 = vmatprep.subr.mxu0 0.0
  %1882 = vmatpush1.msra.mxu0 0.0
  %1883 = vmatprep.subr.mxu0 0.0
  %1884 = vmatpush1.msra.mxu0 0.0
  %1885 = vmatprep.subr.mxu0 0.0
  %1886 = vmatpush1.msra.mxu0 0.0
  %1887 = vmatprep.subr.mxu0 0.0
  %1888 = vmatpush1.msra.mxu0 0.0
  %1889 = vmatprep.subr.mxu0 0.0
  %1890 = vmatpush1.msra.mxu0 0.0
  %1891 = vmatprep.subr.mxu0 0.0
  %1892 = vmatpush1.msra.mxu0 0.0
  %1893 = vmatprep.subr.mxu0 0.0
  %1894 = vmatpush1.msra.mxu0 0.0
  %1895 = vmatprep.subr.mxu0 0.0
  %1896 = vmatpush1.msra.mxu0 0.0
  %1897 = vmatprep.subr.mxu0 0.0
  %1898 = vmatpush1.msra.mxu0 0.0
  %1899 = vmatprep.subr.mxu0 0.0
  %1900 = vmatpush1.msra.mxu0 0.0
  %1901 = vmatprep.subr.mxu0 0.0
  %1902 = vmatpush1.msra.mxu0 0.0
  %1903 = vmatprep.mubr.f32.mxu0 0.0
  %1904 = vmatmul.mubr.f32.gmra.mrb[0].mxu0 %v1834
  %v1905 = vpop.f32.mrb[0].mxu0
  %v1906 = vadd.f32 0.0, %v1905
  %v1907 = vpop.f32.mrb[0].mxu0
  %1908 = vmatprep.mubr.f32.mxu0 0.0
  %1909 = vmatmul.mubr.f32.gmra.mrb[0].mxu0 %v1837
  %v1910 = vpop.f32.mrb[0].mxu0
  %v1911 = vadd.f32 0.0, %v1910
  %v1912 = vpop.f32.mrb[0].mxu0
  %1913 = vdwg.mxu0
  %v1914 = vadd.f32 %v1504, %v1906
  %v1915 = vadd.f32 %v1504, %v1911
  %1916 = vrot.lane.b32.xlu0 %v1488, 96
  %v1917 = vpop.permute.xlu0 %1916
  %1918 = vrot.lane.b32.xlu0 %v1488, 32
  %v1919 = vpop.permute.xlu0 %1918
  %v1920 = vsel %vm254, %v1917, 0
  %v1922 = vsel %vm254, %v1919, 0
  %1924 = vmatprep.subr.mxu0 0.0
  %1925 = vmatpush1.xpose.msra.mxu0 %v1922
  %1926 = vmatprep.subr.mxu0 0.0
  %1927 = vmatpush1.xpose.msra.mxu0 0.0
  %1928 = vmatprep.subr.mxu0 0.0
  %1929 = vmatpush1.xpose.msra.mxu0 0.0
  %1930 = vmatprep.subr.mxu0 0.0
  %1931 = vmatpush1.xpose.msra.mxu0 0.0
  %1932 = vmatprep.subr.mxu0 0.0
  %1933 = vmatpush1.xpose.msra.mxu0 0.0
  %1934 = vmatprep.subr.mxu0 0.0
  %1935 = vmatpush1.xpose.msra.mxu0 0.0
  %1936 = vmatprep.subr.mxu0 0.0
  %1937 = vmatpush1.xpose.msra.mxu0 0.0
  %1938 = vmatprep.subr.mxu0 0.0
  %1939 = vmatpush1.xpose.msra.mxu0 0.0
  %1940 = vmatprep.subr.mxu0 0.0
  %1941 = vmatpush1.xpose.msra.mxu0 0.0
  %1942 = vmatprep.subr.mxu0 0.0
  %1943 = vmatpush1.xpose.msra.mxu0 0.0
  %1944 = vmatprep.subr.mxu0 0.0
  %1945 = vmatpush1.xpose.msra.mxu0 0.0
  %1946 = vmatprep.subr.mxu0 0.0
  %1947 = vmatpush1.xpose.msra.mxu0 0.0
  %1948 = vmatprep.subr.mxu0 0.0
  %1949 = vmatpush1.xpose.msra.mxu0 0.0
  %1950 = vmatprep.subr.mxu0 0.0
  %1951 = vmatpush1.xpose.msra.mxu0 0.0
  %1952 = vmatprep.subr.mxu0 0.0
  %1953 = vmatpush1.xpose.msra.mxu0 0.0
  %1954 = vmatprep.subr.mxu0 0.0
  %1955 = vmatpush1.xpose.msra.mxu0 0.0
  %1956 = vmatprep.subr.mxu0 0.0
  %1957 = vmatpush1.xpose.msra.mxu0 0.0
  %1958 = vmatprep.subr.mxu0 0.0
  %1959 = vmatpush1.xpose.msra.mxu0 0.0
  %1960 = vmatprep.subr.mxu0 0.0
  %1961 = vmatpush1.xpose.msra.mxu0 0.0
  %1962 = vmatprep.subr.mxu0 0.0
  %1963 = vmatpush1.xpose.msra.mxu0 0.0
  %1964 = vmatprep.subr.mxu0 0.0
  %1965 = vmatpush1.xpose.msra.mxu0 0.0
  %1966 = vmatprep.subr.mxu0 0.0
  %1967 = vmatpush1.xpose.msra.mxu0 0.0
  %1968 = vmatprep.subr.mxu0 0.0
  %1969 = vmatpush1.xpose.msra.mxu0 0.0
  %1970 = vmatprep.subr.mxu0 0.0
  %1971 = vmatpush1.xpose.msra.mxu0 0.0
  %1972 = vmatprep.subr.mxu0 0.0
  %1973 = vmatpush1.xpose.msra.mxu0 0.0
  %1974 = vmatprep.subr.mxu0 0.0
  %1975 = vmatpush1.xpose.msra.mxu0 0.0
  %1976 = vmatprep.subr.mxu0 0.0
  %1977 = vmatpush1.xpose.msra.mxu0 0.0
  %1978 = vmatprep.subr.mxu0 0.0
  %1979 = vmatpush1.xpose.msra.mxu0 0.0
  %1980 = vmatprep.subr.mxu0 0.0
  %1981 = vmatpush1.xpose.msra.mxu0 0.0
  %1982 = vmatprep.subr.mxu0 0.0
  %1983 = vmatpush1.xpose.msra.mxu0 0.0
  %1984 = vmatprep.subr.mxu0 0.0
  %1985 = vmatpush1.xpose.msra.mxu0 0.0
  %1986 = vmatprep.subr.mxu0 0.0
  %1987 = vmatpush1.xpose.msra.mxu0 0.0
  %1988 = vmatprep.mubr.f32.mxu0 0.0
  %1989 = vmatmul.mubr.f32.gmra.mrb[0].mxu0 %v1920
  %v1990 = vpop.f32.mrb[0].mxu0
  %v1991 = vadd.f32 %v244, %v1990
  %v1992 = vpop.f32.mrb[0].mxu0
  %1993 = vdwg.mxu0
  %1994 = vrot.lane.b32.xlu0 %v1494, 96
  %v1995 = vpop.permute.xlu0 %1994
  %1996 = vrot.lane.b32.xlu0 %v1494, 32
  %v1997 = vpop.permute.xlu0 %1996
  %v1998 = vsel %vm254, %v1995, 0
  %v2000 = vsel %vm254, %v1997, 0
  %2002 = vmatprep.subr.mxu0 0.0
  %2003 = vmatpush1.xpose.msra.mxu0 %v2000
  %2004 = vmatprep.subr.mxu0 0.0
  %2005 = vmatpush1.xpose.msra.mxu0 0.0
  %2006 = vmatprep.subr.mxu0 0.0
  %2007 = vmatpush1.xpose.msra.mxu0 0.0
  %2008 = vmatprep.subr.mxu0 0.0
  %2009 = vmatpush1.xpose.msra.mxu0 0.0
  %2010 = vmatprep.subr.mxu0 0.0
  %2011 = vmatpush1.xpose.msra.mxu0 0.0
  %2012 = vmatprep.subr.mxu0 0.0
  %2013 = vmatpush1.xpose.msra.mxu0 0.0
  %2014 = vmatprep.subr.mxu0 0.0
  %2015 = vmatpush1.xpose.msra.mxu0 0.0
  %2016 = vmatprep.subr.mxu0 0.0
  %2017 = vmatpush1.xpose.msra.mxu0 0.0
  %2018 = vmatprep.subr.mxu0 0.0
  %2019 = vmatpush1.xpose.msra.mxu0 0.0
  %2020 = vmatprep.subr.mxu0 0.0
  %2021 = vmatpush1.xpose.msra.mxu0 0.0
  %2022 = vmatprep.subr.mxu0 0.0
  %2023 = vmatpush1.xpose.msra.mxu0 0.0
  %2024 = vmatprep.subr.mxu0 0.0
  %2025 = vmatpush1.xpose.msra.mxu0 0.0
  %2026 = vmatprep.subr.mxu0 0.0
  %2027 = vmatpush1.xpose.msra.mxu0 0.0
  %2028 = vmatprep.subr.mxu0 0.0
  %2029 = vmatpush1.xpose.msra.mxu0 0.0
  %2030 = vmatprep.subr.mxu0 0.0
  %2031 = vmatpush1.xpose.msra.mxu0 0.0
  %2032 = vmatprep.subr.mxu0 0.0
  %2033 = vmatpush1.xpose.msra.mxu0 0.0
  %2034 = vmatprep.subr.mxu0 0.0
  %2035 = vmatpush1.xpose.msra.mxu0 0.0
  %2036 = vmatprep.subr.mxu0 0.0
  %2037 = vmatpush1.xpose.msra.mxu0 0.0
  %2038 = vmatprep.subr.mxu0 0.0
  %2039 = vmatpush1.xpose.msra.mxu0 0.0
  %2040 = vmatprep.subr.mxu0 0.0
  %2041 = vmatpush1.xpose.msra.mxu0 0.0
  %2042 = vmatprep.subr.mxu0 0.0
  %2043 = vmatpush1.xpose.msra.mxu0 0.0
  %2044 = vmatprep.subr.mxu0 0.0
  %2045 = vmatpush1.xpose.msra.mxu0 0.0
  %2046 = vmatprep.subr.mxu0 0.0
  %2047 = vmatpush1.xpose.msra.mxu0 0.0
  %2048 = vmatprep.subr.mxu0 0.0
  %2049 = vmatpush1.xpose.msra.mxu0 0.0
  %2050 = vmatprep.subr.mxu0 0.0
  %2051 = vmatpush1.xpose.msra.mxu0 0.0
  %2052 = vmatprep.subr.mxu0 0.0
  %2053 = vmatpush1.xpose.msra.mxu0 0.0
  %2054 = vmatprep.subr.mxu0 0.0
  %2055 = vmatpush1.xpose.msra.mxu0 0.0
  %2056 = vmatprep.subr.mxu0 0.0
  %2057 = vmatpush1.xpose.msra.mxu0 0.0
  %2058 = vmatprep.subr.mxu0 0.0
  %2059 = vmatpush1.xpose.msra.mxu0 0.0
  %2060 = vmatprep.subr.mxu0 0.0
  %2061 = vmatpush1.xpose.msra.mxu0 0.0
  %2062 = vmatprep.subr.mxu0 0.0
  %2063 = vmatpush1.xpose.msra.mxu0 0.0
  %2064 = vmatprep.subr.mxu0 0.0
  %2065 = vmatpush1.xpose.msra.mxu0 0.0
  %2066 = vmatprep.mubr.f32.mxu0 0.0
  %2067 = vmatmul.mubr.f32.gmra.mrb[0].mxu0 %v1998
  %v2068 = vpop.f32.mrb[0].mxu0
  %v2069 = vadd.f32 %v248, %v2068
  %v2070 = vpop.f32.mrb[0].mxu0
  %2071 = vdwg.mxu0
  %v2072 = vsel %vm406, %v1991, -inf
  %2073 = vmax.xlane.f32.xlu0 %v2072
  %v2074 = vpop.xlane.xlu0 %2073
  %v2075 = vsel %vm406, %v2069, -inf
  %2076 = vmax.xlane.f32.xlu0 %v2075
  %v2077 = vpop.xlane.xlu0 %2076
  %v2078 = vsub.f32 %v1991, %v2074
  %v2079 = vsub.f32 %v2069, %v2077
  %v2080 = vmul.f32 %v2078, 1.442695
  %v2081 = vpow.pop %v2080
  %v2082 = vmul.f32 %v2079, 1.442695
  %v2083 = vpow.pop %v2082
  %v2084 = vsel %vm406, %v2081, 0.0
  %2085 = vadd.xlane.f32.xlu0 %v2084
  %v2086 = vpop.xlane.xlu0 %2085
  %v2087 = vsel %vm406, %v2083, 0.0
  %2088 = vadd.xlane.f32.xlu0 %v2087
  %v2089 = vpop.xlane.xlu0 %2088
  %v2090 = vrcp.pop %v2086
  %v2091 = vrcp.pop %v2089
  %v2092 = vmul.f32 %v2081, %v2090
  %v2093 = vmul.f32 %v2083, %v2091
  %2095 = vrot.lane.b32.xlu0 %v1490, 96
  %v2096 = vpop.permute.xlu0 %2095
  %v2099 = vsel %vm406, %v2092, 0
  %2101 = vmatprep.subr.mxu0 0.0
  %2102 = vmatpush1.msra.mxu0 %v2096
  %2103 = vmatprep.subr.mxu0 0.0
  %2104 = vmatpush1.msra.mxu0 0.0
  %2105 = vmatprep.subr.mxu0 0.0
  %2106 = vmatpush1.msra.mxu0 0.0
  %2107 = vmatprep.subr.mxu0 0.0
  %2108 = vmatpush1.msra.mxu0 0.0
  %2109 = vmatprep.subr.mxu0 0.0
  %2110 = vmatpush1.msra.mxu0 0.0
  %2111 = vmatprep.subr.mxu0 0.0
  %2112 = vmatpush1.msra.mxu0 0.0
  %2113 = vmatprep.subr.mxu0 0.0
  %2114 = vmatpush1.msra.mxu0 0.0
  %2115 = vmatprep.subr.mxu0 0.0
  %2116 = vmatpush1.msra.mxu0 0.0
  %2117 = vmatprep.subr.mxu0 0.0
  %2118 = vmatpush1.msra.mxu0 0.0
  %2119 = vmatprep.subr.mxu0 0.0
  %2120 = vmatpush1.msra.mxu0 0.0
  %2121 = vmatprep.subr.mxu0 0.0
  %2122 = vmatpush1.msra.mxu0 0.0
  %2123 = vmatprep.subr.mxu0 0.0
  %2124 = vmatpush1.msra.mxu0 0.0
  %2125 = vmatprep.subr.mxu0 0.0
  %2126 = vmatpush1.msra.mxu0 0.0
  %2127 = vmatprep.subr.mxu0 0.0
  %2128 = vmatpush1.msra.mxu0 0.0
  %2129 = vmatprep.subr.mxu0 0.0
  %2130 = vmatpush1.msra.mxu0 0.0
  %2131 = vmatprep.subr.mxu0 0.0
  %2132 = vmatpush1.msra.mxu0 0.0
  %2133 = vmatprep.subr.mxu0 0.0
  %2134 = vmatpush1.msra.mxu0 0.0
  %2135 = vmatprep.subr.mxu0 0.0
  %2136 = vmatpush1.msra.mxu0 0.0
  %2137 = vmatprep.subr.mxu0 0.0
  %2138 = vmatpush1.msra.mxu0 0.0
  %2139 = vmatprep.subr.mxu0 0.0
  %2140 = vmatpush1.msra.mxu0 0.0
  %2141 = vmatprep.subr.mxu0 0.0
  %2142 = vmatpush1.msra.mxu0 0.0
  %2143 = vmatprep.subr.mxu0 0.0
  %2144 = vmatpush1.msra.mxu0 0.0
  %2145 = vmatprep.subr.mxu0 0.0
  %2146 = vmatpush1.msra.mxu0 0.0
  %2147 = vmatprep.subr.mxu0 0.0
  %2148 = vmatpush1.msra.mxu0 0.0
  %2149 = vmatprep.subr.mxu0 0.0
  %2150 = vmatpush1.msra.mxu0 0.0
  %2151 = vmatprep.subr.mxu0 0.0
  %2152 = vmatpush1.msra.mxu0 0.0
  %2153 = vmatprep.subr.mxu0 0.0
  %2154 = vmatpush1.msra.mxu0 0.0
  %2155 = vmatprep.subr.mxu0 0.0
  %2156 = vmatpush1.msra.mxu0 0.0
  %2157 = vmatprep.subr.mxu0 0.0
  %2158 = vmatpush1.msra.mxu0 0.0
  %2159 = vmatprep.subr.mxu0 0.0
  %2160 = vmatpush1.msra.mxu0 0.0
  %2161 = vmatprep.subr.mxu0 0.0
  %2162 = vmatpush1.msra.mxu0 0.0
  %2163 = vmatprep.subr.mxu0 0.0
  %2164 = vmatpush1.msra.mxu0 0.0
  %2165 = vmatprep.mubr.f32.mxu0 0.0
  %2166 = vmatmul.mubr.f32.gmra.mrb[0].mxu0 %v2099
  %v2167 = vpop.f32.mrb[0].mxu0
  %v2168 = vadd.f32 0.0, %v2167
  %v2169 = vpop.f32.mrb[0].mxu0
  %2170 = vdwg.mxu0
  %2172 = vrot.lane.b32.xlu0 %v1496, 96
  %v2173 = vpop.permute.xlu0 %2172
  %v2176 = vsel %vm406, %v2093, 0
  %2178 = vmatprep.subr.mxu0 0.0
  %2179 = vmatpush1.msra.mxu0 %v2173
  %2180 = vmatprep.subr.mxu0 0.0
  %2181 = vmatpush1.msra.mxu0 0.0
  %2182 = vmatprep.subr.mxu0 0.0
  %2183 = vmatpush1.msra.mxu0 0.0
  %2184 = vmatprep.subr.mxu0 0.0
  %2185 = vmatpush1.msra.mxu0 0.0
  %2186 = vmatprep.subr.mxu0 0.0
  %2187 = vmatpush1.msra.mxu0 0.0
  %2188 = vmatprep.subr.mxu0 0.0
  %2189 = vmatpush1.msra.mxu0 0.0
  %2190 = vmatprep.subr.mxu0 0.0
  %2191 = vmatpush1.msra.mxu0 0.0
  %2192 = vmatprep.subr.mxu0 0.0
  %2193 = vmatpush1.msra.mxu0 0.0
  %2194 = vmatprep.subr.mxu0 0.0
  %2195 = vmatpush1.msra.mxu0 0.0
  %2196 = vmatprep.subr.mxu0 0.0
  %2197 = vmatpush1.msra.mxu0 0.0
  %2198 = vmatprep.subr.mxu0 0.0
  %2199 = vmatpush1.msra.mxu0 0.0
  %2200 = vmatprep.subr.mxu0 0.0
  %2201 = vmatpush1.msra.mxu0 0.0
  %2202 = vmatprep.subr.mxu0 0.0
  %2203 = vmatpush1.msra.mxu0 0.0
  %2204 = vmatprep.subr.mxu0 0.0
  %2205 = vmatpush1.msra.mxu0 0.0
  %2206 = vmatprep.subr.mxu0 0.0
  %2207 = vmatpush1.msra.mxu0 0.0
  %2208 = vmatprep.subr.mxu0 0.0
  %2209 = vmatpush1.msra.mxu0 0.0
  %2210 = vmatprep.subr.mxu0 0.0
  %2211 = vmatpush1.msra.mxu0 0.0
  %2212 = vmatprep.subr.mxu0 0.0
  %2213 = vmatpush1.msra.mxu0 0.0
  %2214 = vmatprep.subr.mxu0 0.0
  %2215 = vmatpush1.msra.mxu0 0.0
  %2216 = vmatprep.subr.mxu0 0.0
  %2217 = vmatpush1.msra.mxu0 0.0
  %2218 = vmatprep.subr.mxu0 0.0
  %2219 = vmatpush1.msra.mxu0 0.0
  %2220 = vmatprep.subr.mxu0 0.0
  %2221 = vmatpush1.msra.mxu0 0.0
  %2222 = vmatprep.subr.mxu0 0.0
  %2223 = vmatpush1.msra.mxu0 0.0
  %2224 = vmatprep.subr.mxu0 0.0
  %2225 = vmatpush1.msra.mxu0 0.0
  %2226 = vmatprep.subr.mxu0 0.0
  %2227 = vmatpush1.msra.mxu0 0.0
  %2228 = vmatprep.subr.mxu0 0.0
  %2229 = vmatpush1.msra.mxu0 0.0
  %2230 = vmatprep.subr.mxu0 0.0
  %2231 = vmatpush1.msra.mxu0 0.0
  %2232 = vmatprep.subr.mxu0 0.0
  %2233 = vmatpush1.msra.mxu0 0.0
  %2234 = vmatprep.subr.mxu0 0.0
  %2235 = vmatpush1.msra.mxu0 0.0
  %2236 = vmatprep.subr.mxu0 0.0
  %2237 = vmatpush1.msra.mxu0 0.0
  %2238 = vmatprep.subr.mxu0 0.0
  %2239 = vmatpush1.msra.mxu0 0.0
  %2240 = vmatprep.subr.mxu0 0.0
  %2241 = vmatpush1.msra.mxu0 0.0
  %2242 = vmatprep.mubr.f32.mxu0 0.0
  %2243 = vmatmul.mubr.f32.gmra.mrb[0].mxu0 %v2176
  %v2244 = vpop.f32.mrb[0].mxu0
  %v2245 = vadd.f32 0.0, %v2244
  %v2246 = vpop.f32.mrb[0].mxu0
  %2247 = vdwg.mxu0
  %v2248 = vld [vmem:[%s1828 + $0x20] sm:$0xff]
  %v2249 = vld [vmem:[%s1828 + $0x28] sm:$0xff]
  %v2250 = vld [vmem:[%s1828 + $0x30] sm:$0xff]
  %v2251 = vld [vmem:[%s1828 + $0x38] sm:$0xff]
  %v2253 = vsel %vm254, %v2168, 0
  %v2256 = vsel %vm254, %v2245, 0
  %2258 = vmatprep.subr.mxu0 0.0
  %2259 = vmatpush1.msra.mxu0 %v2248
  %2260 = vmatprep.subr.mxu0 0.0
  %2261 = vmatpush1.msra.mxu0 %v2249
  %2262 = vmatprep.subr.mxu0 0.0
  %2263 = vmatpush1.msra.mxu0 %v2250
  %2264 = vmatprep.subr.mxu0 0.0
  %2265 = vmatpush1.msra.mxu0 %v2251
  %2266 = vmatprep.subr.mxu0 0.0
  %2267 = vmatpush1.msra.mxu0 0.0
  %2268 = vmatprep.subr.mxu0 0.0
  %2269 = vmatpush1.msra.mxu0 0.0
  %2270 = vmatprep.subr.mxu0 0.0
  %2271 = vmatpush1.msra.mxu0 0.0
  %2272 = vmatprep.subr.mxu0 0.0
  %2273 = vmatpush1.msra.mxu0 0.0
  %2274 = vmatprep.subr.mxu0 0.0
  %2275 = vmatpush1.msra.mxu0 0.0
  %2276 = vmatprep.subr.mxu0 0.0
  %2277 = vmatpush1.msra.mxu0 0.0
  %2278 = vmatprep.subr.mxu0 0.0
  %2279 = vmatpush1.msra.mxu0 0.0
  %2280 = vmatprep.subr.mxu0 0.0
  %2281 = vmatpush1.msra.mxu0 0.0
  %2282 = vmatprep.subr.mxu0 0.0
  %2283 = vmatpush1.msra.mxu0 0.0
  %2284 = vmatprep.subr.mxu0 0.0
  %2285 = vmatpush1.msra.mxu0 0.0
  %2286 = vmatprep.subr.mxu0 0.0
  %2287 = vmatpush1.msra.mxu0 0.0
  %2288 = vmatprep.subr.mxu0 0.0
  %2289 = vmatpush1.msra.mxu0 0.0
  %2290 = vmatprep.subr.mxu0 0.0
  %2291 = vmatpush1.msra.mxu0 0.0
  %2292 = vmatprep.subr.mxu0 0.0
  %2293 = vmatpush1.msra.mxu0 0.0
  %2294 = vmatprep.subr.mxu0 0.0
  %2295 = vmatpush1.msra.mxu0 0.0
  %2296 = vmatprep.subr.mxu0 0.0
  %2297 = vmatpush1.msra.mxu0 0.0
  %2298 = vmatprep.subr.mxu0 0.0
  %2299 = vmatpush1.msra.mxu0 0.0
  %2300 = vmatprep.subr.mxu0 0.0
  %2301 = vmatpush1.msra.mxu0 0.0
  %2302 = vmatprep.subr.mxu0 0.0
  %2303 = vmatpush1.msra.mxu0 0.0
  %2304 = vmatprep.subr.mxu0 0.0
  %2305 = vmatpush1.msra.mxu0 0.0
  %2306 = vmatprep.subr.mxu0 0.0
  %2307 = vmatpush1.msra.mxu0 0.0
  %2308 = vmatprep.subr.mxu0 0.0
  %2309 = vmatpush1.msra.mxu0 0.0
  %2310 = vmatprep.subr.mxu0 0.0
  %2311 = vmatpush1.msra.mxu0 0.0
  %2312 = vmatprep.subr.mxu0 0.0
  %2313 = vmatpush1.msra.mxu0 0.0
  %2314 = vmatprep.subr.mxu0 0.0
  %2315 = vmatpush1.msra.mxu0 0.0
  %2316 = vmatprep.subr.mxu0 0.0
  %2317 = vmatpush1.msra.mxu0 0.0
  %2318 = vmatprep.subr.mxu0 0.0
  %2319 = vmatpush1.msra.mxu0 0.0
  %2320 = vmatprep.subr.mxu0 0.0
  %2321 = vmatpush1.msra.mxu0 0.0
  %2322 = vmatprep.mubr.f32.mxu0 0.0
  %2323 = vmatmul.mubr.f32.gmra.mrb[0].mxu0 %v2253
  %v2324 = vpop.f32.mrb[0].mxu0
  %v2325 = vadd.f32 0.0, %v2324
  %v2326 = vpop.f32.mrb[0].mxu0
  %2327 = vmatprep.mubr.f32.mxu0 0.0
  %2328 = vmatmul.mubr.f32.gmra.mrb[0].mxu0 %v2256
  %v2329 = vpop.f32.mrb[0].mxu0
  %v2330 = vadd.f32 0.0, %v2329
  %v2331 = vpop.f32.mrb[0].mxu0
  %2332 = vdwg.mxu0
  %v2333 = vadd.f32 %v1914, %v2325
  %v2334 = vadd.f32 %v1915, %v2330
  %v2335 = vadd.f32 %v2333, %v1383
  %v2336 = vadd.f32 %v2334, %v1384
  %s2337 = scalar_lea.vmem %s8, 1
  %v2338 = vld [vmem:[%s2337] sm:$0x1]
  %s2339 = scalar_lea.vmem %s9, 1
  %v2340 = vld [vmem:[%s2339] sm:$0x1]
  %v2341 = vsel %vm71, %v2335, 0.0
  %2342 = vadd.xlane.f32.xlu0 %v2341
  %v2343 = vpop.xlane.xlu0 %2342
  %v2344 = vsel %vm71, %v2336, 0.0
  %2345 = vadd.xlane.f32.xlu0 %v2344
  %v2346 = vpop.xlane.xlu0 %2345
  %v2347 = vmul.f32 %v2343, %v78
  %v2348 = vmul.f32 %v2346, %v78
  %v2349 = vsub.f32 %v2335, %v2347
  %v2350 = vsub.f32 %v2336, %v2348
  %v2351 = vmul.f32 %v2349, %v2349
  %v2352 = vmul.f32 %v2350, %v2350
  %v2353 = vsel %vm71, %v2351, 0.0
  %2354 = vadd.xlane.f32.xlu0 %v2353
  %v2355 = vpop.xlane.xlu0 %2354
  %v2356 = vsel %vm71, %v2352, 0.0
  %2357 = vadd.xlane.f32.xlu0 %v2356
  %v2358 = vpop.xlane.xlu0 %2357
  %v2359 = vmul.f32 %v2355, %v78
  %v2360 = vmul.f32 %v2358, %v78
  %v2361 = vadd.f32 %v2359, 1e-12
  %v2362 = vadd.f32 %v2360, 1e-12
  %v2363 = vrsqrt.pop %v2361
  %v2364 = vrsqrt.pop %v2362
  %v2365 = vmul.f32 %v2349, %v2363
  %v2366 = vmul.f32 %v2350, %v2364
  %v2368 = vlaneseq
  %v2369 = vshrl.u32 %v2368, 7
  %v2370 = vsub.s32 0, %v2369
  %v2371 = vrot.slane %v2338, %v2370
  %v2373 = vmul.f32 %v2365, %v2371
  %v2374 = vmul.f32 %v2366, %v2371
  %v2376 = vlaneseq
  %v2377 = vshrl.u32 %v2376, 7
  %v2378 = vsub.s32 0, %v2377
  %v2379 = vrot.slane %v2340, %v2378
  %v2381 = vadd.f32 %v2373, %v2379
  %v2382 = vadd.f32 %v2374, %v2379
  %s2383 = scalar_lea.vmem %s10, 64
  %v2384 = vld [vmem:[%s2383] sm:$0xff]
  %v2385 = vld [vmem:[%s2383 + $0x8] sm:$0xff]
  %v2386 = vld [vmem:[%s2383 + $0x10] sm:$0xff]
  %v2387 = vld [vmem:[%s2383 + $0x18] sm:$0xff]
  %v2388 = vld [vmem:[%s2383 + $0x20] sm:$0xff]
  %v2389 = vld [vmem:[%s2383 + $0x28] sm:$0xff]
  %v2390 = vld [vmem:[%s2383 + $0x30] sm:$0xff]
  %v2391 = vld [vmem:[%s2383 + $0x38] sm:$0xff]
  %s2392 = scalar_lea.vmem %s11, 1
  %v2393 = vld [vmem:[%s2392] sm:$0x1]
  %v2395 = vlaneseq
  %v2396 = vshrl.u32 %v2395, 7
  %v2397 = vsub.s32 0, %v2396
  %v2398 = vrot.slane %v2393, %v2397
  %v2401 = vsel %vm71, %v2381, 0
  %v2404 = vsel %vm71, %v2382, 0
  %2406 = vmatprep.subr.mxu0 0.0
  %2407 = vmatpush1.msra.mxu0 %v2384
  %2408 = vmatprep.subr.mxu0 0.0
  %2409 = vmatpush1.msra.mxu0 %v2385
  %2410 = vmatprep.subr.mxu0 0.0
  %2411 = vmatpush1.msra.mxu0 %v2386
  %2412 = vmatprep.subr.mxu0 0.0
  %2413 = vmatpush1.msra.mxu0 %v2387
  %2414 = vmatprep.subr.mxu0 0.0
  %2415 = vmatpush1.msra.mxu0 %v2388
  %2416 = vmatprep.subr.mxu0 0.0
  %2417 = vmatpush1.msra.mxu0 %v2389
  %2418 = vmatprep.subr.mxu0 0.0
  %2419 = vmatpush1.msra.mxu0 %v2390
  %2420 = vmatprep.subr.mxu0 0.0
  %2421 = vmatpush1.msra.mxu0 %v2391
  %2422 = vmatprep.subr.mxu0 0.0
  %2423 = vmatpush1.msra.mxu0 0.0
  %2424 = vmatprep.subr.mxu0 0.0
  %2425 = vmatpush1.msra.mxu0 0.0
  %2426 = vmatprep.subr.mxu0 0.0
  %2427 = vmatpush1.msra.mxu0 0.0
  %2428 = vmatprep.subr.mxu0 0.0
  %2429 = vmatpush1.msra.mxu0 0.0
  %2430 = vmatprep.subr.mxu0 0.0
  %2431 = vmatpush1.msra.mxu0 0.0
  %2432 = vmatprep.subr.mxu0 0.0
  %2433 = vmatpush1.msra.mxu0 0.0
  %2434 = vmatprep.subr.mxu0 0.0
  %2435 = vmatpush1.msra.mxu0 0.0
  %2436 = vmatprep.subr.mxu0 0.0
  %2437 = vmatpush1.msra.mxu0 0.0
  %2438 = vmatprep.subr.mxu0 0.0
  %2439 = vmatpush1.msra.mxu0 0.0
  %2440 = vmatprep.subr.mxu0 0.0
  %2441 = vmatpush1.msra.mxu0 0.0
  %2442 = vmatprep.subr.mxu0 0.0
  %2443 = vmatpush1.msra.mxu0 0.0
  %2444 = vmatprep.subr.mxu0 0.0
  %2445 = vmatpush1.msra.mxu0 0.0
  %2446 = vmatprep.subr.mxu0 0.0
  %2447 = vmatpush1.msra.mxu0 0.0
  %2448 = vmatprep.subr.mxu0 0.0
  %2449 = vmatpush1.msra.mxu0 0.0
  %2450 = vmatprep.subr.mxu0 0.0
  %2451 = vmatpush1.msra.mxu0 0.0
  %2452 = vmatprep.subr.mxu0 0.0
  %2453 = vmatpush1.msra.mxu0 0.0
  %2454 = vmatprep.subr.mxu0 0.0
  %2455 = vmatpush1.msra.mxu0 0.0
  %2456 = vmatprep.subr.mxu0 0.0
  %2457 = vmatpush1.msra.mxu0 0.0
  %2458 = vmatprep.subr.mxu0 0.0
  %2459 = vmatpush1.msra.mxu0 0.0
  %2460 = vmatprep.subr.mxu0 0.0
  %2461 = vmatpush1.msra.mxu0 0.0
  %2462 = vmatprep.subr.mxu0 0.0
  %2463 = vmatpush1.msra.mxu0 0.0
  %2464 = vmatprep.subr.mxu0 0.0
  %2465 = vmatpush1.msra.mxu0 0.0
  %2466 = vmatprep.subr.mxu0 0.0
  %2467 = vmatpush1.msra.mxu0 0.0
  %2468 = vmatprep.subr.mxu0 0.0
  %2469 = vmatpush1.msra.mxu0 0.0
  %2470 = vmatprep.mubr.f32.mxu0 0.0
  %2471 = vmatmul.mubr.f32.gmra.mrb[0].mxu0 %v2401
  %v2472 = vpop.f32.mrb[0].mxu0
  %v2473 = vadd.f32 %v2398, %v2472
  %v2474 = vpop.f32.mrb[0].mxu0
  %2475 = vmatprep.mubr.f32.mxu0 0.0
  %2476 = vmatmul.mubr.f32.gmra.mrb[0].mxu0 %v2404
  %v2477 = vpop.f32.mrb[0].mxu0
  %v2478 = vadd.f32 %v2398, %v2477
  %v2479 = vpop.f32.mrb[0].mxu0
  %2480 = vdwg.mxu0
  %v2481 = vmul.f32 %v2473, 0.5
  %v2482 = vmul.f32 %v2478, 0.5
  %v2483 = vmul.f32 %v2473, 0.044715
  %v2484 = vmul.f32 %v2478, 0.044715
  %v2485 = vmul.f32 %v2483, %v2473
  %v2486 = vmul.f32 %v2484, %v2478
  %v2487 = vmul.f32 %v2485, %v2473
  %v2488 = vmul.f32 %v2486, %v2478
  %v2489 = vadd.f32 %v2473, %v2487
  %v2490 = vadd.f32 %v2478, %v2488
  %v2491 = vmul.f32 %v2489, 0.7978846
  %v2492 = vmul.f32 %v2490, 0.7978846
  %v2493 = vtanh.pop %v2491
  %v2494 = vtanh.pop %v2492
  %v2495 = vadd.f32 %v2493, 1.0
  %v2496 = vadd.f32 %v2494, 1.0
  %v2497 = vmul.f32 %v2481, %v2495
  %v2498 = vmul.f32 %v2482, %v2496
  %s2499 = scalar_lea.vmem %s12, 128
  %v2500 = vld [vmem:[%s2499] sm:$0xff]
  %v2501 = vld [vmem:[%s2499 + $0x8] sm:$0xff]
  %v2502 = vld [vmem:[%s2499 + $0x10] sm:$0xff]
  %v2503 = vld [vmem:[%s2499 + $0x18] sm:$0xff]
  %v2504 = vld [vmem:[%s2499 + $0x20] sm:$0xff]
  %v2505 = vld [vmem:[%s2499 + $0x28] sm:$0xff]
  %v2506 = vld [vmem:[%s2499 + $0x30] sm:$0xff]
  %v2507 = vld [vmem:[%s2499 + $0x38] sm:$0xff]
  %v2508 = vld [vmem:[%s2499 + $0x40] sm:$0xff]
  %v2509 = vld [vmem:[%s2499 + $0x48] sm:$0xff]
  %v2510 = vld [vmem:[%s2499 + $0x50] sm:$0xff]
  %v2511 = vld [vmem:[%s2499 + $0x58] sm:$0xff]
  %v2512 = vld [vmem:[%s2499 + $0x60] sm:$0xff]
  %v2513 = vld [vmem:[%s2499 + $0x68] sm:$0xff]
  %v2514 = vld [vmem:[%s2499 + $0x70] sm:$0xff]
  %v2515 = vld [vmem:[%s2499 + $0x78] sm:$0xff]
  %s2516 = scalar_lea.vmem %s13, 1
  %v2517 = vld [vmem:[%s2516] sm:$0x1]
  %v2519 = vlaneseq
  %v2520 = vshrl.u32 %v2519, 7
  %v2521 = vsub.s32 0, %v2520
  %v2522 = vrot.slane %v2517, %v2521
  %2524 = vmatprep.subr.mxu0 0.0
  %2525 = vmatpush1.msra.mxu0 %v2500
  %2526 = vmatprep.subr.mxu0 0.0
  %2527 = vmatpush1.msra.mxu0 %v2501
  %2528 = vmatprep.subr.mxu0 0.0
  %2529 = vmatpush1.msra.mxu0 %v2502
  %2530 = vmatprep.subr.mxu0 0.0
  %2531 = vmatpush1.msra.mxu0 %v2503
  %2532 = vmatprep.subr.mxu0 0.0
  %2533 = vmatpush1.msra.mxu0 %v2504
  %2534 = vmatprep.subr.mxu0 0.0
  %2535 = vmatpush1.msra.mxu0 %v2505
  %2536 = vmatprep.subr.mxu0 0.0
  %2537 = vmatpush1.msra.mxu0 %v2506
  %2538 = vmatprep.subr.mxu0 0.0
  %2539 = vmatpush1.msra.mxu0 %v2507
  %2540 = vmatprep.subr.mxu0 0.0
  %2541 = vmatpush1.msra.mxu0 %v2508
  %2542 = vmatprep.subr.mxu0 0.0
  %2543 = vmatpush1.msra.mxu0 %v2509
  %2544 = vmatprep.subr.mxu0 0.0
  %2545 = vmatpush1.msra.mxu0 %v2510
  %2546 = vmatprep.subr.mxu0 0.0
  %2547 = vmatpush1.msra.mxu0 %v2511
  %2548 = vmatprep.subr.mxu0 0.0
  %2549 = vmatpush1.msra.mxu0 %v2512
  %2550 = vmatprep.subr.mxu0 0.0
  %2551 = vmatpush1.msra.mxu0 %v2513
  %2552 = vmatprep.subr.mxu0 0.0
  %2553 = vmatpush1.msra.mxu0 %v2514
  %2554 = vmatprep.subr.mxu0 0.0
  %2555 = vmatpush1.msra.mxu0 %v2515
  %2556 = vmatprep.subr.mxu0 0.0
  %2557 = vmatpush1.msra.mxu0 0.0
  %2558 = vmatprep.subr.mxu0 0.0
  %2559 = vmatpush1.msra.mxu0 0.0
  %2560 = vmatprep.subr.mxu0 0.0
  %2561 = vmatpush1.msra.mxu0 0.0
  %2562 = vmatprep.subr.mxu0 0.0
  %2563 = vmatpush1.msra.mxu0 0.0
  %2564 = vmatprep.subr.mxu0 0.0
  %2565 = vmatpush1.msra.mxu0 0.0
  %2566 = vmatprep.subr.mxu0 0.0
  %2567 = vmatpush1.msra.mxu0 0.0
  %2568 = vmatprep.subr.mxu0 0.0
  %2569 = vmatpush1.msra.mxu0 0.0
  %2570 = vmatprep.subr.mxu0 0.0
  %2571 = vmatpush1.msra.mxu0 0.0
  %2572 = vmatprep.subr.mxu0 0.0
  %2573 = vmatpush1.msra.mxu0 0.0
  %2574 = vmatprep.subr.mxu0 0.0
  %2575 = vmatpush1.msra.mxu0 0.0
  %2576 = vmatprep.subr.mxu0 0.0
  %2577 = vmatpush1.msra.mxu0 0.0
  %2578 = vmatprep.subr.mxu0 0.0
  %2579 = vmatpush1.msra.mxu0 0.0
  %2580 = vmatprep.subr.mxu0 0.0
  %2581 = vmatpush1.msra.mxu0 0.0
  %2582 = vmatprep.subr.mxu0 0.0
  %2583 = vmatpush1.msra.mxu0 0.0
  %2584 = vmatprep.subr.mxu0 0.0
  %2585 = vmatpush1.msra.mxu0 0.0
  %2586 = vmatprep.subr.mxu0 0.0
  %2587 = vmatpush1.msra.mxu0 0.0
  %2588 = vmatprep.mubr.f32.mxu0 0.0
  %2589 = vmatmul.mubr.f32.gmra.mrb[0].mxu0 %v2497
  %v2590 = vpop.f32.mrb[0].mxu0
  %v2591 = vadd.f32 %v2522, %v2590
  %v2592 = vpop.f32.mrb[0].mxu0
  %2593 = vmatprep.mubr.f32.mxu0 0.0
  %2594 = vmatmul.mubr.f32.gmra.mrb[0].mxu0 %v2498
  %v2595 = vpop.f32.mrb[0].mxu0
  %v2596 = vadd.f32 %v2522, %v2595
  %v2597 = vpop.f32.mrb[0].mxu0
  %2598 = vdwg.mxu0
  %v2599 = vadd.f32 %v2591, %v2381
  %v2600 = vadd.f32 %v2596, %v2382
  %s2601 = scalar_lea.vmem %s14, 1
  %v2602 = vld [vmem:[%s2601] sm:$0x1]
  %s2603 = scalar_lea.vmem %s15, 1
  %v2604 = vld [vmem:[%s2603] sm:$0x1]
  %v2605 = vsel %vm71, %v2599, 0.0
  %2606 = vadd.xlane.f32.xlu0 %v2605
  %v2607 = vpop.xlane.xlu0 %2606
  %v2608 = vsel %vm71, %v2600, 0.0
  %2609 = vadd.xlane.f32.xlu0 %v2608
  %v2610 = vpop.xlane.xlu0 %2609
  %v2611 = vmul.f32 %v2607, %v78
  %v2612 = vmul.f32 %v2610, %v78
  %v2613 = vsub.f32 %v2599, %v2611
  %v2614 = vsub.f32 %v2600, %v2612
  %v2615 = vmul.f32 %v2613, %v2613
  %v2616 = vmul.f32 %v2614, %v2614
  %v2617 = vsel %vm71, %v2615, 0.0
  %2618 = vadd.xlane.f32.xlu0 %v2617
  %v2619 = vpop.xlane.xlu0 %2618
  %v2620 = vsel %vm71, %v2616, 0.0
  %2621 = vadd.xlane.f32.xlu0 %v2620
  %v2622 = vpop.xlane.xlu0 %2621
  %v2623 = vmul.f32 %v2619, %v78
  %v2624 = vmul.f32 %v2622, %v78
  %v2625 = vadd.f32 %v2623, 1e-12
  %v2626 = vadd.f32 %v2624, 1e-12
  %v2627 = vrsqrt.pop %v2625
  %v2628 = vrsqrt.pop %v2626
  %v2629 = vmul.f32 %v2613, %v2627
  %v2630 = vmul.f32 %v2614, %v2628
  %v2632 = vlaneseq
  %v2633 = vshrl.u32 %v2632, 7
  %v2634 = vsub.s32 0, %v2633
  %v2635 = vrot.slane %v2602, %v2634
  %v2637 = vmul.f32 %v2629, %v2635
  %v2638 = vmul.f32 %v2630, %v2635
  %v2640 = vlaneseq
  %v2641 = vshrl.u32 %v2640, 7
  %v2642 = vsub.s32 0, %v2641
  %v2643 = vrot.slane %v2604, %v2642
  %v2645 = vadd.f32 %v2637, %v2643
  %v2646 = vadd.f32 %v2638, %v2643
  %v2647 = vld [vmem:[%s16] sm:$0xff]
  %v2648 = vld [vmem:[%s16 + $0x8] sm:$0xff]
  %v2649 = vld [vmem:[%s16 + $0x10] sm:$0xff]
  %v2650 = vld [vmem:[%s16 + $0x18] sm:$0xff]
  %v2651 = vld [vmem:[%s16 + $0x20] sm:$0xff]
  %v2652 = vld [vmem:[%s16 + $0x28] sm:$0xff]
  %v2653 = vld [vmem:[%s16 + $0x30] sm:$0xff]
  %v2654 = vld [vmem:[%s16 + $0x38] sm:$0xff]
  %v2655 = vld [vmem:[%s17] sm:$0x1]
  %v2657 = vlaneseq
  %v2658 = vshrl.u32 %v2657, 7
  %v2659 = vsub.s32 0, %v2658
  %v2660 = vrot.slane %v2655, %v2659
  %v2664 = vrot.slane %v2646, 7
  %vm2665 = vcmask 1041409
  %v2666 = vsel %vm2665, %v2664, %v2645
  %v2667 = vsel %vm71, %v2666, 0
  %2669 = vmatprep.subr.mxu0 0.0
  %2670 = vmatpush1.msra.mxu0 %v2647
  %2671 = vmatprep.subr.mxu0 0.0
  %2672 = vmatpush1.msra.mxu0 %v2648
  %2673 = vmatprep.subr.mxu0 0.0
  %2674 = vmatpush1.msra.mxu0 %v2649
  %2675 = vmatprep.subr.mxu0 0.0
  %2676 = vmatpush1.msra.mxu0 %v2650
  %2677 = vmatprep.subr.mxu0 0.0
  %2678 = vmatpush1.msra.mxu0 %v2651
  %2679 = vmatprep.subr.mxu0 0.0
  %2680 = vmatpush1.msra.mxu0 %v2652
  %2681 = vmatprep.subr.mxu0 0.0
  %2682 = vmatpush1.msra.mxu0 %v2653
  %2683 = vmatprep.subr.mxu0 0.0
  %2684 = vmatpush1.msra.mxu0 %v2654
  %2685 = vmatprep.subr.mxu0 0.0
  %2686 = vmatpush1.msra.mxu0 0.0
  %2687 = vmatprep.subr.mxu0 0.0
  %2688 = vmatpush1.msra.mxu0 0.0
  %2689 = vmatprep.subr.mxu0 0.0
  %2690 = vmatpush1.msra.mxu0 0.0
  %2691 = vmatprep.subr.mxu0 0.0
  %2692 = vmatpush1.msra.mxu0 0.0
  %2693 = vmatprep.subr.mxu0 0.0
  %2694 = vmatpush1.msra.mxu0 0.0
  %2695 = vmatprep.subr.mxu0 0.0
  %2696 = vmatpush1.msra.mxu0 0.0
  %2697 = vmatprep.subr.mxu0 0.0
  %2698 = vmatpush1.msra.mxu0 0.0
  %2699 = vmatprep.subr.mxu0 0.0
  %2700 = vmatpush1.msra.mxu0 0.0
  %2701 = vmatprep.subr.mxu0 0.0
  %2702 = vmatpush1.msra.mxu0 0.0
  %2703 = vmatprep.subr.mxu0 0.0
  %2704 = vmatpush1.msra.mxu0 0.0
  %2705 = vmatprep.subr.mxu0 0.0
  %2706 = vmatpush1.msra.mxu0 0.0
  %2707 = vmatprep.subr.mxu0 0.0
  %2708 = vmatpush1.msra.mxu0 0.0
  %2709 = vmatprep.subr.mxu0 0.0
  %2710 = vmatpush1.msra.mxu0 0.0
  %2711 = vmatprep.subr.mxu0 0.0
  %2712 = vmatpush1.msra.mxu0 0.0
  %2713 = vmatprep.subr.mxu0 0.0
  %2714 = vmatpush1.msra.mxu0 0.0
  %2715 = vmatprep.subr.mxu0 0.0
  %2716 = vmatpush1.msra.mxu0 0.0
  %2717 = vmatprep.subr.mxu0 0.0
  %2718 = vmatpush1.msra.mxu0 0.0
  %2719 = vmatprep.subr.mxu0 0.0
  %2720 = vmatpush1.msra.mxu0 0.0
  %2721 = vmatprep.subr.mxu0 0.0
  %2722 = vmatpush1.msra.mxu0 0.0
  %2723 = vmatprep.subr.mxu0 0.0
  %2724 = vmatpush1.msra.mxu0 0.0
  %2725 = vmatprep.subr.mxu0 0.0
  %2726 = vmatpush1.msra.mxu0 0.0
  %2727 = vmatprep.subr.mxu0 0.0
  %2728 = vmatpush1.msra.mxu0 0.0
  %2729 = vmatprep.subr.mxu0 0.0
  %2730 = vmatpush1.msra.mxu0 0.0
  %2731 = vmatprep.subr.mxu0 0.0
  %2732 = vmatpush1.msra.mxu0 0.0
  %2733 = vmatprep.mubr.f32.mxu0 0.0
  %2734 = vmatmul.mubr.f32.gmra.mrb[0].mxu0 %v2667
  %v2735 = vpop.f32.mrb[0].mxu0
  %v2736 = vadd.f32 %v2660, %v2735
  %v2737 = vpop.f32.mrb[0].mxu0
  %2738 = vdwg.mxu0
  %v2739 = vld [vmem:[%s18] sm:$0xff]
  %v2740 = vld [vmem:[%s18 + $0x8] sm:$0xff]
  %v2741 = vld [vmem:[%s18 + $0x10] sm:$0xff]
  %v2742 = vld [vmem:[%s18 + $0x18] sm:$0xff]
  %v2743 = vld [vmem:[#allocation2] sm:$0x1]
  %v2745 = vlaneseq
  %v2746 = vshrl.u32 %v2745, 7
  %v2747 = vsub.s32 0, %v2746
  %v2748 = vrot.slane %v2743, %v2747
  %v2751 = vsel %vm254, %v2736, 0
  %2753 = vmatprep.subr.mxu0 0.0
  %2754 = vmatpush1.msra.mxu0 %v2739
  %2755 = vmatprep.subr.mxu0 0.0
  %2756 = vmatpush1.msra.mxu0 %v2740
  %2757 = vmatprep.subr.mxu0 0.0
  %2758 = vmatpush1.msra.mxu0 %v2741
  %2759 = vmatprep.subr.mxu0 0.0
  %2760 = vmatpush1.msra.mxu0 %v2742
  %2761 = vmatprep.subr.mxu0 0.0
  %2762 = vmatpush1.msra.mxu0 0.0
  %2763 = vmatprep.subr.mxu0 0.0
  %2764 = vmatpush1.msra.mxu0 0.0
  %2765 = vmatprep.subr.mxu0 0.0
  %2766 = vmatpush1.msra.mxu0 0.0
  %2767 = vmatprep.subr.mxu0 0.0
  %2768 = vmatpush1.msra.mxu0 0.0
  %2769 = vmatprep.subr.mxu0 0.0
  %2770 = vmatpush1.msra.mxu0 0.0
  %2771 = vmatprep.subr.mxu0 0.0
  %2772 = vmatpush1.msra.mxu0 0.0
  %2773 = vmatprep.subr.mxu0 0.0
  %2774 = vmatpush1.msra.mxu0 0.0
  %2775 = vmatprep.subr.mxu0 0.0
  %2776 = vmatpush1.msra.mxu0 0.0
  %2777 = vmatprep.subr.mxu0 0.0
  %2778 = vmatpush1.msra.mxu0 0.0
  %2779 = vmatprep.subr.mxu0 0.0
  %2780 = vmatpush1.msra.mxu0 0.0
  %2781 = vmatprep.subr.mxu0 0.0
  %2782 = vmatpush1.msra.mxu0 0.0
  %2783 = vmatprep.subr.mxu0 0.0
  %2784 = vmatpush1.msra.mxu0 0.0
  %2785 = vmatprep.subr.mxu0 0.0
  %2786 = vmatpush1.msra.mxu0 0.0
  %2787 = vmatprep.subr.mxu0 0.0
  %2788 = vmatpush1.msra.mxu0 0.0
  %2789 = vmatprep.subr.mxu0 0.0
  %2790 = vmatpush1.msra.mxu0 0.0
  %2791 = vmatprep.subr.mxu0 0.0
  %2792 = vmatpush1.msra.mxu0 0.0
  %2793 = vmatprep.subr.mxu0 0.0
  %2794 = vmatpush1.msra.mxu0 0.0
  %2795 = vmatprep.subr.mxu0 0.0
  %2796 = vmatpush1.msra.mxu0 0.0
  %2797 = vmatprep.subr.mxu0 0.0
  %2798 = vmatpush1.msra.mxu0 0.0
  %2799 = vmatprep.subr.mxu0 0.0
  %2800 = vmatpush1.msra.mxu0 0.0
  %2801 = vmatprep.subr.mxu0 0.0
  %2802 = vmatpush1.msra.mxu0 0.0
  %2803 = vmatprep.subr.mxu0 0.0
  %2804 = vmatpush1.msra.mxu0 0.0
  %2805 = vmatprep.subr.mxu0 0.0
  %2806 = vmatpush1.msra.mxu0 0.0
  %2807 = vmatprep.subr.mxu0 0.0
  %2808 = vmatpush1.msra.mxu0 0.0
  %2809 = vmatprep.subr.mxu0 0.0
  %2810 = vmatpush1.msra.mxu0 0.0
  %2811 = vmatprep.subr.mxu0 0.0
  %2812 = vmatpush1.msra.mxu0 0.0
  %2813 = vmatprep.subr.mxu0 0.0
  %2814 = vmatpush1.msra.mxu0 0.0
  %2815 = vmatprep.subr.mxu0 0.0
  %2816 = vmatpush1.msra.mxu0 0.0
  %2817 = vmatprep.mubr.f32.mxu0 0.0
  %2818 = vmatmul.mubr.f32.gmra.mrb[0].mxu0 %v2751
  %v2819 = vpop.f32.mrb[0].mxu0
  %v2820 = vadd.f32 %v2748, %v2819
  %v2821 = vpop.f32.mrb[0].mxu0
  %2822 = vdwg.mxu0
  %v2823 = vsub.f32 0.0, %v2820
  %v2824 = vmul.f32 %v2823, 1.442695
  %v2825 = vpow.pop %v2824
  %v2826 = vadd.f32 %v2825, 1.0
  %v2827 = vrcp.pop %v2826
  %v2828 = vmul.f32 1.0, %v2827
  %vm2829 = vcmask 1024
  %2830 = vst.msk [vmem:[%s20] sm:$0x3] %vm2829, %v2828
  // Predicated region
  $region82: #{text_classifier_forward.1} parent=0 // pred_check
    _
  $region83: #{text_classifier_forward.1} parent=0 // pred_check_branch
    %2832 = sbr.rel (0) target = $region85
  $region84: #{text_classifier_forward.1} parent=0 // pred_region
    _
  $region85: #{text_classifier_forward.1} parent=0 // pred_fallthru
    _
  // Predicated region
  $region86: #{text_classifier_forward.1} parent=0 // pred_check
    _
  $region87: #{text_classifier_forward.1} parent=0 // pred_check_branch
    %2834 = sbr.rel (0) target = $region89
  $region88: #{text_classifier_forward.1} parent=0 // pred_region
    _
  $region89: #{text_classifier_forward.1} parent=0 // pred_fallthru
    _

</llo_original>
